<compile_context>
chip_gen: v7x
topology: tpu7x:2x2x1
jax: 0.10.0
libtpu: 0.0.40
codegen_flags: <defaults>
</compile_context>

<pallas_src>
import numpy as np
import jax
import jax.numpy as jnp
from jax import lax
from jax.experimental import pallas as pl
from jax.experimental.pallas import tpu as pltpu

EPS = 1e-5  # InstanceNorm2d default eps


# ---------------------------------------------------------------------------
# Static spatial gather structure (geometry only, built once in numpy)
# ---------------------------------------------------------------------------
def _build_conv_gather(H, W, KH, KW, stride, pad, OH, OW):
    """G[q, k, p] = 1 iff input pixel q=(h,w) is tap k=(kh,kw) of conv output p."""
    G = np.zeros((H * W, KH * KW, OH * OW), np.float32)
    for oh in range(OH):
        for ow in range(OW):
            p = oh * OW + ow
            for kh in range(KH):
                h = oh * stride - pad + kh
                if not (0 <= h < H):
                    continue
                for kw in range(KW):
                    w = ow * stride - pad + kw
                    if not (0 <= w < W):
                        continue
                    G[h * W + w, kh * KW + kw, p] = 1.0
    return G


def _build_deconv_gather(IH, IW, KH, KW, stride, pad, OH, OW):
    """ConvTranspose2d: G[q, k, p] = 1 iff output p receives input q via tap k."""
    G = np.zeros((IH * IW, KH * KW, OH * OW), np.float32)
    for ih in range(IH):
        for iw in range(IW):
            q = ih * IW + iw
            for kh in range(KH):
                oh = ih * stride - pad + kh
                if not (0 <= oh < OH):
                    continue
                for kw in range(KW):
                    ow = iw * stride - pad + kw
                    if not (0 <= ow < OW):
                        continue
                    G[q, kh * KW + kw, oh * OW + ow] = 1.0
    return G


def _fold_conv(w, G):
    """Conv2d weight (Cout, Cin, KH, KW) folded into gather -> (Cin*S_in, Cout*S_out)."""
    Cout, Cin, KH, KW = w.shape
    wk = w.reshape(Cout, Cin, KH * KW)
    T = jnp.einsum('ock,qkp->cqop', wk, jnp.asarray(G))
    return T.reshape(Cin * G.shape[0], Cout * G.shape[2])


def _fold_deconv(w, G):
    """ConvTranspose2d weight (Cin, Cout, KH, KW); gather already encodes the scatter."""
    Cin, Cout, KH, KW = w.shape
    wk = w.reshape(Cin, Cout, KH * KW)
    T = jnp.einsum('cok,qkp->cqop', wk, jnp.asarray(G))
    return T.reshape(Cin * G.shape[0], Cout * G.shape[2])


# ---------------------------------------------------------------------------
# Fused Pallas kernel: whole DownBlock for the whole batch in one grid step
# ---------------------------------------------------------------------------
def _mm(a, b):
    return jnp.dot(a, b, preferred_element_type=jnp.float32)


def _norm_prelu(y, r_ref, e_ref, alpha):
    """InstanceNorm2d (biased var, eps=1e-5) + PReLU on y of shape (N, C*S_out).

    r : (C*S_out, C) 0/1 channel reducer, e = r^T expander — per-(n,c) stats via
    tiny MXU matmuls, no in-kernel reshapes.
    """
    c = r_ref.shape[1]
    inv_s = 1.0 / (y.shape[1] // c)
    mean_b = _mm(_mm(y, r_ref[...]) * inv_s, e_ref[...])       # (N, C*S_out)
    cen = y - mean_b
    var = _mm(cen * cen, r_ref[...]) * inv_s                   # (N, C)
    inv_b = _mm(lax.rsqrt(var + EPS), e_ref[...])              # (N, C*S_out)
    yn = cen * inv_b
    return jnp.where(yn >= 0.0, yn, alpha * yn)


def _down_block_kernel(alpha_ref, x_ref, t1_ref, t2_ref, t3_ref,
                       r1_ref, e1_ref, r2_ref, e2_ref, out_ref):
    x = x_ref[...]                                                        # (N, C*S)
    l0 = _norm_prelu(_mm(x, t1_ref[...]), r1_ref, e1_ref, alpha_ref[0])   # (N, C*P)
    h0 = _norm_prelu(_mm(l0, t2_ref[...]), r2_ref, e2_ref, alpha_ref[1])  # (N, C*S)
    l1 = _norm_prelu(_mm(h0 - x, t3_ref[...]), r1_ref, e1_ref, alpha_ref[2])
    out_ref[...] = l1 + l0


def down_block(x, params, stride=4, padding=2):
    # Biases are accepted for API parity but are mathematically cancelled by the
    # InstanceNorm mean subtraction, so they never enter the kernel.
    (w1, _b1, a1), (w2, _b2, a2), (w3, _b3, a3) = params
    N, C, H, W = x.shape
    Cout, Cin, KH, KW = w1.shape
    assert (Cout, Cin) == (C, C) and w3.shape == w1.shape and w2.shape == (C, C, KH, KW)
    OH = (H + 2 * padding - KH) // stride + 1
    OW = (W + 2 * padding - KW) // stride + 1
    DH = (OH - 1) * stride - 2 * padding + KH
    DW = (OW - 1) * stride - 2 * padding + KW
    assert (DH, DW) == (H, W), "deconv must restore the input spatial size"

    S, P = H * W, OH * OW
    g1 = _build_conv_gather(H, W, KH, KW, stride, padding, OH, OW)     # (S, KK, P)
    g2 = _build_deconv_gather(OH, OW, KH, KW, stride, padding, H, W)   # (P, KK, S)

    # Folded-weight transforms (kept f32: folded weights are not bf16-exact).
    t1 = _fold_conv(w1.astype(jnp.float32), g1)                        # (C*S, C*P)
    t2 = _fold_deconv(w2.astype(jnp.float32), g2)                      # (C*P, C*S)
    t3 = _fold_conv(w3.astype(jnp.float32), g1)                        # (C*S, C*P)

    # Per-channel reduce / expand matrices for InstanceNorm.
    eye_c = np.eye(C, dtype=np.float32)
    r1 = jnp.asarray(np.kron(eye_c, np.ones((P, 1), np.float32)))      # (C*P, C)
    e1 = jnp.asarray(np.kron(eye_c, np.ones((1, P), np.float32)))      # (C, C*P)
    r2 = jnp.asarray(np.kron(eye_c, np.ones((S, 1), np.float32)))      # (C*S, C)
    e2 = jnp.asarray(np.kron(eye_c, np.ones((1, S), np.float32)))      # (C, C*S)

    alphas = jnp.concatenate([a1, a2, a3]).astype(jnp.float32)         # (3,)
    x_flat = x.reshape(N, C * S).astype(jnp.float32)

    def _const(shape):
        return pl.BlockSpec(shape, lambda i: (0, 0))

    out = pl.pallas_call(
        _down_block_kernel,
        out_shape=jax.ShapeDtypeStruct((N, C * P), jnp.float32),
        grid=(1,),                                    # whole batch, one step
        in_specs=[
            pl.BlockSpec(memory_space=pltpu.MemorySpace.SMEM),   # alphas (3,)
            _const((N, C * S)),                                  # x
            _const((C * S, C * P)),                              # T1
            _const((C * P, C * S)),                              # T2
            _const((C * S, C * P)),                              # T3
            _const((C * P, C)),                                  # R1
            _const((C, C * P)),                                  # E1
            _const((C * S, C)),                                  # R2
            _const((C, C * S)),                                  # E2
        ],
        out_specs=_const((N, C * P)),
        compiler_params=pltpu.CompilerParams(
            dimension_semantics=("arbitrary",)),
    )(alphas, x_flat, t1, t2, t3, r1, e1, r2, e2)
    return out.reshape(N, C, OH, OW)


# ---------------------------------------------------------------------------
# Pure-JAX reference (XLA convs) for correctness check
# ---------------------------------------------------------------------------
def _ref_norm_prelu(y, alpha):
    mean = y.mean(axis=(2, 3), keepdims=True)
    var = ((y - mean) ** 2).mean(axis=(2, 3), keepdims=True)
    yn = (y - mean) / jnp.sqrt(var + EPS)
    return jnp.where(yn >= 0, yn, alpha[0] * yn)


def _ref_conv_block(x, w, b, alpha, stride=4, padding=2):
    y = lax.conv_general_dilated(x, w, (stride, stride), [(padding, padding)] * 2,
                                 dimension_numbers=('NCHW', 'OIHW', 'NCHW'))
    return _ref_norm_prelu(y + b.reshape(1, -1, 1, 1), alpha)


def _ref_deconv_block(x, w, b, alpha, stride=4, padding=2):
    KH = w.shape[2]
    conv_w = jnp.flip(w, axis=(2, 3)).transpose(1, 0, 2, 3)
    pad = KH - 1 - padding
    y = lax.conv_general_dilated(x, conv_w, (1, 1), [(pad, pad)] * 2,
                                 lhs_dilation=(stride, stride),
                                 dimension_numbers=('NCHW', 'OIHW', 'NCHW'))
    return _ref_norm_prelu(y + b.reshape(1, -1, 1, 1), alpha)


def _ref_down_block(x, params):
    (w1, b1, a1), (w2, b2, a2), (w3, b3, a3) = params
    l0 = _ref_conv_block(x, w1, b1, a1)
    h0 = _ref_deconv_block(l0, w2, b2, a2)
    l1 = _ref_conv_block(h0 - x, w3, b3, a3)
    return l1 + l0


# ---------------------------------------------------------------------------
if __name__ == "__main__":
    key = jax.random.PRNGKey(0)
    nf = 4               # num_filter
    N, H, W = 2, 16, 16
    KH = KW = 8

    keys = jax.random.split(key, 7)
    x = jax.random.normal(keys[0], (N, nf, H, W), dtype=jnp.float32)

    # Deterministic synthetic parameters (shapes follow the module __init__)
    w1 = jax.random.normal(keys[1], (nf, nf, KH, KW), jnp.float32) * 0.05   # Conv2d
    b1 = jax.random.normal(keys[2], (nf,), jnp.float32) * 0.05
    w2 = jax.random.normal(keys[3], (nf, nf, KH, KW), jnp.float32) * 0.05   # ConvTranspose2d (Cin,Cout,KH,KW)
    b2 = jax.random.normal(keys[4], (nf,), jnp.float32) * 0.05
    w3 = jax.random.normal(keys[5], (nf, nf, KH, KW), jnp.float32) * 0.05   # Conv2d
    b3 = jax.random.normal(keys[6], (nf,), jnp.float32) * 0.05
    a1 = jnp.array([0.25], jnp.float32)   # PReLU default init
    a2 = jnp.array([0.25], jnp.float32)
    a3 = jnp.array([0.25], jnp.float32)

    params = ((w1, b1, a1), (w2, b2, a2), (w3, b3, a3))

    out = jax.block_until_ready(down_block(x, params))
    ref = jax.block_until_ready(_ref_down_block(x, params))

    assert out.shape == (N, nf, 4, 4), out.shape
    np.testing.assert_allclose(np.asarray(out), np.asarray(ref), rtol=2e-4, atol=2e-4)
    print("KERNEL_OK")
</pallas_src>

<mosaic_0001>
module attributes {stable_mosaic.version = 11 : i64} {
  func.func @_down_block_kernel(%arg0: i32, %arg1: memref<3xf32, #tpu.memory_space<smem>>, %arg2: memref<2x1024xf32, #tpu.memory_space<vmem>>, %arg3: memref<1024x64xf32, #tpu.memory_space<vmem>>, %arg4: memref<64x1024xf32, #tpu.memory_space<vmem>>, %arg5: memref<1024x64xf32, #tpu.memory_space<vmem>>, %arg6: memref<64x4xf32, #tpu.memory_space<vmem>>, %arg7: memref<4x64xf32, #tpu.memory_space<vmem>>, %arg8: memref<1024x4xf32, #tpu.memory_space<vmem>>, %arg9: memref<4x1024xf32, #tpu.memory_space<vmem>>, %arg10: memref<2x64xf32, #tpu.memory_space<vmem>>) attributes {dimension_semantics = [#tpu.dimension_semantics<arbitrary>], iteration_bounds = array<i64: 1>, scalar_prefetch = 0 : i64, scratch_operands = 0 : i64, tpu.core_type = #tpu.core_type<tc>, window_params = [{transform_indices = @transform_0, window_bounds = array<i64: 3>}, {pipeline_mode = #tpu.pipeline_mode<synchronous>, transform_indices = @transform_1, window_bounds = array<i64: 2, 1024>}, {pipeline_mode = #tpu.pipeline_mode<synchronous>, transform_indices = @transform_2, window_bounds = array<i64: 1024, 64>}, {pipeline_mode = #tpu.pipeline_mode<synchronous>, transform_indices = @transform_3, window_bounds = array<i64: 64, 1024>}, {pipeline_mode = #tpu.pipeline_mode<synchronous>, transform_indices = @transform_4, window_bounds = array<i64: 1024, 64>}, {pipeline_mode = #tpu.pipeline_mode<synchronous>, transform_indices = @transform_5, window_bounds = array<i64: 64, 4>}, {pipeline_mode = #tpu.pipeline_mode<synchronous>, transform_indices = @transform_6, window_bounds = array<i64: 4, 64>}, {pipeline_mode = #tpu.pipeline_mode<synchronous>, transform_indices = @transform_7, window_bounds = array<i64: 1024, 4>}, {pipeline_mode = #tpu.pipeline_mode<synchronous>, transform_indices = @transform_8, window_bounds = array<i64: 4, 1024>}, {pipeline_mode = #tpu.pipeline_mode<synchronous>, transform_indices = @transform_9, window_bounds = array<i64: 2, 64>}]} {
    %c0 = arith.constant 0 : index
    %c0_0 = arith.constant 0 : index
    %0 = vector.load %arg2[%c0, %c0_0] : memref<2x1024xf32, #tpu.memory_space<vmem>>, vector<2x1024xf32>
    %c0_1 = arith.constant 0 : index
    %c0_2 = arith.constant 0 : index
    %1 = vector.load %arg3[%c0_1, %c0_2] : memref<1024x64xf32, #tpu.memory_space<vmem>>, vector<1024x64xf32>
    %cst = arith.constant dense<0.000000e+00> : vector<2x64xf32>
    %2 = tpu.matmul %0, %1, %cst {dimension_numbers = #tpu.dot_dimension_numbers<[1], [0], [0], [1], [0, 0, 1, 1], [], []>} : vector<2x1024xf32>, vector<1024x64xf32>, vector<2x64xf32> -> vector<2x64xf32>
    %c0_3 = arith.constant 0 : index
    %3 = memref.load %arg1[%c0_3] : memref<3xf32, #tpu.memory_space<smem>>
    %c0_4 = arith.constant 0 : index
    %c0_5 = arith.constant 0 : index
    %4 = vector.load %arg6[%c0_4, %c0_5] : memref<64x4xf32, #tpu.memory_space<vmem>>, vector<64x4xf32>
    %cst_6 = arith.constant dense<0.000000e+00> : vector<2x4xf32>
    %5 = tpu.matmul %2, %4, %cst_6 {dimension_numbers = #tpu.dot_dimension_numbers<[1], [0], [0], [1], [0, 0, 1, 1], [], []>} : vector<2x64xf32>, vector<64x4xf32>, vector<2x4xf32> -> vector<2x4xf32>
    %cst_7 = arith.constant 6.250000e-02 : f32
    %6 = vector.broadcast %cst_7 : f32 to vector<2x4xf32>
    %7 = arith.mulf %5, %6 : vector<2x4xf32>
    %c0_8 = arith.constant 0 : index
    %c0_9 = arith.constant 0 : index
    %8 = vector.load %arg7[%c0_8, %c0_9] : memref<4x64xf32, #tpu.memory_space<vmem>>, vector<4x64xf32>
    %cst_10 = arith.constant dense<0.000000e+00> : vector<2x64xf32>
    %9 = tpu.matmul %7, %8, %cst_10 {dimension_numbers = #tpu.dot_dimension_numbers<[1], [0], [0], [1], [0, 0, 1, 1], [], []>} : vector<2x4xf32>, vector<4x64xf32>, vector<2x64xf32> -> vector<2x64xf32>
    %10 = arith.subf %2, %9 : vector<2x64xf32>
    %11 = arith.mulf %10, %10 : vector<2x64xf32>
    %c0_11 = arith.constant 0 : index
    %c0_12 = arith.constant 0 : index
    %12 = vector.load %arg6[%c0_11, %c0_12] : memref<64x4xf32, #tpu.memory_space<vmem>>, vector<64x4xf32>
    %cst_13 = arith.constant dense<0.000000e+00> : vector<2x4xf32>
    %13 = tpu.matmul %11, %12, %cst_13 {dimension_numbers = #tpu.dot_dimension_numbers<[1], [0], [0], [1], [0, 0, 1, 1], [], []>} : vector<2x64xf32>, vector<64x4xf32>, vector<2x4xf32> -> vector<2x4xf32>
    %cst_14 = arith.constant 6.250000e-02 : f32
    %14 = vector.broadcast %cst_14 : f32 to vector<2x4xf32>
    %15 = arith.mulf %13, %14 : vector<2x4xf32>
    %cst_15 = arith.constant 9.99999974E-6 : f32
    %16 = vector.broadcast %cst_15 : f32 to vector<2x4xf32>
    %17 = arith.addf %15, %16 : vector<2x4xf32>
    %18 = math.rsqrt %17 : vector<2x4xf32>
    %c0_16 = arith.constant 0 : index
    %c0_17 = arith.constant 0 : index
    %19 = vector.load %arg7[%c0_16, %c0_17] : memref<4x64xf32, #tpu.memory_space<vmem>>, vector<4x64xf32>
    %cst_18 = arith.constant dense<0.000000e+00> : vector<2x64xf32>
    %20 = tpu.matmul %18, %19, %cst_18 {dimension_numbers = #tpu.dot_dimension_numbers<[1], [0], [0], [1], [0, 0, 1, 1], [], []>} : vector<2x4xf32>, vector<4x64xf32>, vector<2x64xf32> -> vector<2x64xf32>
    %21 = arith.mulf %10, %20 : vector<2x64xf32>
    %cst_19 = arith.constant 0.000000e+00 : f32
    %22 = vector.broadcast %cst_19 : f32 to vector<2x64xf32>
    %23 = arith.cmpf oge, %21, %22 : vector<2x64xf32>
    %24 = vector.broadcast %3 : f32 to vector<2x64xf32>
    %25 = arith.mulf %24, %21 : vector<2x64xf32>
    %26 = arith.select %23, %21, %25 : vector<2x64xi1>, vector<2x64xf32>
    %c0_20 = arith.constant 0 : index
    %c0_21 = arith.constant 0 : index
    %27 = vector.load %arg4[%c0_20, %c0_21] : memref<64x1024xf32, #tpu.memory_space<vmem>>, vector<64x1024xf32>
    %cst_22 = arith.constant dense<0.000000e+00> : vector<2x1024xf32>
    %28 = tpu.matmul %26, %27, %cst_22 {dimension_numbers = #tpu.dot_dimension_numbers<[1], [0], [0], [1], [0, 0, 1, 1], [], []>} : vector<2x64xf32>, vector<64x1024xf32>, vector<2x1024xf32> -> vector<2x1024xf32>
    %c1 = arith.constant 1 : index
    %29 = memref.load %arg1[%c1] : memref<3xf32, #tpu.memory_space<smem>>
    %c0_23 = arith.constant 0 : index
    %c0_24 = arith.constant 0 : index
    %30 = vector.load %arg8[%c0_23, %c0_24] : memref<1024x4xf32, #tpu.memory_space<vmem>>, vector<1024x4xf32>
    %cst_25 = arith.constant dense<0.000000e+00> : vector<2x4xf32>
    %31 = tpu.matmul %28, %30, %cst_25 {dimension_numbers = #tpu.dot_dimension_numbers<[1], [0], [0], [1], [0, 0, 1, 1], [], []>} : vector<2x1024xf32>, vector<1024x4xf32>, vector<2x4xf32> -> vector<2x4xf32>
    %cst_26 = arith.constant 3.906250e-03 : f32
    %32 = vector.broadcast %cst_26 : f32 to vector<2x4xf32>
    %33 = arith.mulf %31, %32 : vector<2x4xf32>
    %c0_27 = arith.constant 0 : index
    %c0_28 = arith.constant 0 : index
    %34 = vector.load %arg9[%c0_27, %c0_28] : memref<4x1024xf32, #tpu.memory_space<vmem>>, vector<4x1024xf32>
    %cst_29 = arith.constant dense<0.000000e+00> : vector<2x1024xf32>
    %35 = tpu.matmul %33, %34, %cst_29 {dimension_numbers = #tpu.dot_dimension_numbers<[1], [0], [0], [1], [0, 0, 1, 1], [], []>} : vector<2x4xf32>, vector<4x1024xf32>, vector<2x1024xf32> -> vector<2x1024xf32>
    %36 = arith.subf %28, %35 : vector<2x1024xf32>
    %37 = arith.mulf %36, %36 : vector<2x1024xf32>
    %c0_30 = arith.constant 0 : index
    %c0_31 = arith.constant 0 : index
    %38 = vector.load %arg8[%c0_30, %c0_31] : memref<1024x4xf32, #tpu.memory_space<vmem>>, vector<1024x4xf32>
    %cst_32 = arith.constant dense<0.000000e+00> : vector<2x4xf32>
    %39 = tpu.matmul %37, %38, %cst_32 {dimension_numbers = #tpu.dot_dimension_numbers<[1], [0], [0], [1], [0, 0, 1, 1], [], []>} : vector<2x1024xf32>, vector<1024x4xf32>, vector<2x4xf32> -> vector<2x4xf32>
    %cst_33 = arith.constant 3.906250e-03 : f32
    %40 = vector.broadcast %cst_33 : f32 to vector<2x4xf32>
    %41 = arith.mulf %39, %40 : vector<2x4xf32>
    %cst_34 = arith.constant 9.99999974E-6 : f32
    %42 = vector.broadcast %cst_34 : f32 to vector<2x4xf32>
    %43 = arith.addf %41, %42 : vector<2x4xf32>
    %44 = math.rsqrt %43 : vector<2x4xf32>
    %c0_35 = arith.constant 0 : index
    %c0_36 = arith.constant 0 : index
    %45 = vector.load %arg9[%c0_35, %c0_36] : memref<4x1024xf32, #tpu.memory_space<vmem>>, vector<4x1024xf32>
    %cst_37 = arith.constant dense<0.000000e+00> : vector<2x1024xf32>
    %46 = tpu.matmul %44, %45, %cst_37 {dimension_numbers = #tpu.dot_dimension_numbers<[1], [0], [0], [1], [0, 0, 1, 1], [], []>} : vector<2x4xf32>, vector<4x1024xf32>, vector<2x1024xf32> -> vector<2x1024xf32>
    %47 = arith.mulf %36, %46 : vector<2x1024xf32>
    %cst_38 = arith.constant 0.000000e+00 : f32
    %48 = vector.broadcast %cst_38 : f32 to vector<2x1024xf32>
    %49 = arith.cmpf oge, %47, %48 : vector<2x1024xf32>
    %50 = vector.broadcast %29 : f32 to vector<2x1024xf32>
    %51 = arith.mulf %50, %47 : vector<2x1024xf32>
    %52 = arith.select %49, %47, %51 : vector<2x1024xi1>, vector<2x1024xf32>
    %53 = arith.subf %52, %0 : vector<2x1024xf32>
    %c0_39 = arith.constant 0 : index
    %c0_40 = arith.constant 0 : index
    %54 = vector.load %arg5[%c0_39, %c0_40] : memref<1024x64xf32, #tpu.memory_space<vmem>>, vector<1024x64xf32>
    %cst_41 = arith.constant dense<0.000000e+00> : vector<2x64xf32>
    %55 = tpu.matmul %53, %54, %cst_41 {dimension_numbers = #tpu.dot_dimension_numbers<[1], [0], [0], [1], [0, 0, 1, 1], [], []>} : vector<2x1024xf32>, vector<1024x64xf32>, vector<2x64xf32> -> vector<2x64xf32>
    %c2 = arith.constant 2 : index
    %56 = memref.load %arg1[%c2] : memref<3xf32, #tpu.memory_space<smem>>
    %c0_42 = arith.constant 0 : index
    %c0_43 = arith.constant 0 : index
    %57 = vector.load %arg6[%c0_42, %c0_43] : memref<64x4xf32, #tpu.memory_space<vmem>>, vector<64x4xf32>
    %cst_44 = arith.constant dense<0.000000e+00> : vector<2x4xf32>
    %58 = tpu.matmul %55, %57, %cst_44 {dimension_numbers = #tpu.dot_dimension_numbers<[1], [0], [0], [1], [0, 0, 1, 1], [], []>} : vector<2x64xf32>, vector<64x4xf32>, vector<2x4xf32> -> vector<2x4xf32>
    %cst_45 = arith.constant 6.250000e-02 : f32
    %59 = vector.broadcast %cst_45 : f32 to vector<2x4xf32>
    %60 = arith.mulf %58, %59 : vector<2x4xf32>
    %c0_46 = arith.constant 0 : index
    %c0_47 = arith.constant 0 : index
    %61 = vector.load %arg7[%c0_46, %c0_47] : memref<4x64xf32, #tpu.memory_space<vmem>>, vector<4x64xf32>
    %cst_48 = arith.constant dense<0.000000e+00> : vector<2x64xf32>
    %62 = tpu.matmul %60, %61, %cst_48 {dimension_numbers = #tpu.dot_dimension_numbers<[1], [0], [0], [1], [0, 0, 1, 1], [], []>} : vector<2x4xf32>, vector<4x64xf32>, vector<2x64xf32> -> vector<2x64xf32>
    %63 = arith.subf %55, %62 : vector<2x64xf32>
    %64 = arith.mulf %63, %63 : vector<2x64xf32>
    %c0_49 = arith.constant 0 : index
    %c0_50 = arith.constant 0 : index
    %65 = vector.load %arg6[%c0_49, %c0_50] : memref<64x4xf32, #tpu.memory_space<vmem>>, vector<64x4xf32>
    %cst_51 = arith.constant dense<0.000000e+00> : vector<2x4xf32>
    %66 = tpu.matmul %64, %65, %cst_51 {dimension_numbers = #tpu.dot_dimension_numbers<[1], [0], [0], [1], [0, 0, 1, 1], [], []>} : vector<2x64xf32>, vector<64x4xf32>, vector<2x4xf32> -> vector<2x4xf32>
    %cst_52 = arith.constant 6.250000e-02 : f32
    %67 = vector.broadcast %cst_52 : f32 to vector<2x4xf32>
    %68 = arith.mulf %66, %67 : vector<2x4xf32>
    %cst_53 = arith.constant 9.99999974E-6 : f32
    %69 = vector.broadcast %cst_53 : f32 to vector<2x4xf32>
    %70 = arith.addf %68, %69 : vector<2x4xf32>
    %71 = math.rsqrt %70 : vector<2x4xf32>
    %c0_54 = arith.constant 0 : index
    %c0_55 = arith.constant 0 : index
    %72 = vector.load %arg7[%c0_54, %c0_55] : memref<4x64xf32, #tpu.memory_space<vmem>>, vector<4x64xf32>
    %cst_56 = arith.constant dense<0.000000e+00> : vector<2x64xf32>
    %73 = tpu.matmul %71, %72, %cst_56 {dimension_numbers = #tpu.dot_dimension_numbers<[1], [0], [0], [1], [0, 0, 1, 1], [], []>} : vector<2x4xf32>, vector<4x64xf32>, vector<2x64xf32> -> vector<2x64xf32>
    %74 = arith.mulf %63, %73 : vector<2x64xf32>
    %cst_57 = arith.constant 0.000000e+00 : f32
    %75 = vector.broadcast %cst_57 : f32 to vector<2x64xf32>
    %76 = arith.cmpf oge, %74, %75 : vector<2x64xf32>
    %77 = vector.broadcast %56 : f32 to vector<2x64xf32>
    %78 = arith.mulf %77, %74 : vector<2x64xf32>
    %79 = arith.select %76, %74, %78 : vector<2x64xi1>, vector<2x64xf32>
    %80 = arith.addf %79, %26 : vector<2x64xf32>
    %c0_58 = arith.constant 0 : index
    %c0_59 = arith.constant 0 : index
    %81 = vector.load %arg10[%c0_58, %c0_59] : memref<2x64xf32, #tpu.memory_space<vmem>>, vector<2x64xf32>
    tpu.vector_store %arg10[%c0_58, %c0_59], %80 {strides = array<i32>} : memref<2x64xf32, #tpu.memory_space<vmem>>, vector<2x64xf32>,
    return
  }
  func.func @transform_0(%arg0: i32) -> i32 {
    %c0_i32 = arith.constant 0 : i32
    %c0_i32_0 = arith.constant 0 : i32
    return %c0_i32 : i32
  }
  func.func @transform_1(%arg0: i32) -> (i32, i32) {
    %c0_i32 = arith.constant 0 : i32
    %c0_i32_0 = arith.constant 0 : i32
    %c0_i32_1 = arith.constant 0 : i32
    return %c0_i32, %c0_i32_0 : i32, i32
  }
  func.func @transform_2(%arg0: i32) -> (i32, i32) {
    %c0_i32 = arith.constant 0 : i32
    %c0_i32_0 = arith.constant 0 : i32
    %c0_i32_1 = arith.constant 0 : i32
    return %c0_i32, %c0_i32_0 : i32, i32
  }
  func.func @transform_3(%arg0: i32) -> (i32, i32) {
    %c0_i32 = arith.constant 0 : i32
    %c0_i32_0 = arith.constant 0 : i32
    %c0_i32_1 = arith.constant 0 : i32
    return %c0_i32, %c0_i32_0 : i32, i32
  }
  func.func @transform_4(%arg0: i32) -> (i32, i32) {
    %c0_i32 = arith.constant 0 : i32
    %c0_i32_0 = arith.constant 0 : i32
    %c0_i32_1 = arith.constant 0 : i32
    return %c0_i32, %c0_i32_0 : i32, i32
  }
  func.func @transform_5(%arg0: i32) -> (i32, i32) {
    %c0_i32 = arith.constant 0 : i32
    %c0_i32_0 = arith.constant 0 : i32
    %c0_i32_1 = arith.constant 0 : i32
    return %c0_i32, %c0_i32_0 : i32, i32
  }
  func.func @transform_6(%arg0: i32) -> (i32, i32) {
    %c0_i32 = arith.constant 0 : i32
    %c0_i32_0 = arith.constant 0 : i32
    %c0_i32_1 = arith.constant 0 : i32
    return %c0_i32, %c0_i32_0 : i32, i32
  }
  func.func @transform_7(%arg0: i32) -> (i32, i32) {
    %c0_i32 = arith.constant 0 : i32
    %c0_i32_0 = arith.constant 0 : i32
    %c0_i32_1 = arith.constant 0 : i32
    return %c0_i32, %c0_i32_0 : i32, i32
  }
  func.func @transform_8(%arg0: i32) -> (i32, i32) {
    %c0_i32 = arith.constant 0 : i32
    %c0_i32_0 = arith.constant 0 : i32
    %c0_i32_1 = arith.constant 0 : i32
    return %c0_i32, %c0_i32_0 : i32, i32
  }
  func.func @transform_9(%arg0: i32) -> (i32, i32) {
    %c0_i32 = arith.constant 0 : i32
    %c0_i32_0 = arith.constant 0 : i32
    %c0_i32_1 = arith.constant 0 : i32
    return %c0_i32, %c0_i32_0 : i32, i32
  }
}

</mosaic_0001>

<llo_original>
// kernel: tpu_custom_call.1
$region0: #{tpu_custom_call.1}
  #allocation0 [shape = 'u32[]', space=smem, size = 0x4, offset = 0x4, fixed_abs, tag = 'smem constant byte address 0x4 - core index']
  #allocation1 [shape = 'u32[144,128]{1,0:T(1,128)}', space=vmem, size = 0x12000, scoped, tag = 'internal scratch']
  %s0 = inlined_call_operand.vmem [shape: f32[3], index: 0, kind: input, shape index: {}]
  %s1 = inlined_call_operand.vmem [shape: f32[2,1024], index: 1, kind: input, shape index: {}]
  %s2 = inlined_call_operand.vmem [shape: f32[1024,64], index: 2, kind: input, shape index: {}]
  %s3 = inlined_call_operand.vmem [shape: f32[64,1024], index: 3, kind: input, shape index: {}]
  %s4 = inlined_call_operand.vmem [shape: f32[1024,64], index: 4, kind: input, shape index: {}]
  %s5 = inlined_call_operand.vmem [shape: f32[64,4], index: 5, kind: input, shape index: {}]
  %s6 = inlined_call_operand.vmem [shape: f32[4,64], index: 6, kind: input, shape index: {}]
  %s7 = inlined_call_operand.vmem [shape: f32[1024,4], index: 7, kind: input, shape index: {}]
  %s8 = inlined_call_operand.vmem [shape: f32[4,1024], index: 8, kind: input, shape index: {}]
  %s9 = inlined_call_operand.hbm [shape: f32[2,64], index: 9, kind: output, shape index: {}]
  %s10 = sld [smem:[#allocation0]]
  $region50: #{tpu_custom_call.1} parent=0
    _
  %s12 = ssub.s32 1, %s10
  %s13 = scalar_select 0, %s12, %s10
  $region1: #{tpu_custom_call.1} parent=0
    #allocation2 [shape = 'u8[512]{0}', space=smem, size = 0x200, scoped, tag = 'input window, operand 0, single buffered']
    #allocation3 [shape = 's32[1]{0}', space=sflag, size = 0x4, scoped, tag = 'scoped memory for tpu_custom_call.1']
    #allocation4 [shape = 's32[1]{0}', space=sflag, size = 0x4, scoped, tag = 'scoped memory for tpu_custom_call.1']
    #allocation5 [shape = 'u8[1024]{0}', space=vmem, size = 0x400, scoped, tag = 'output window, operand 0, single buffered']
    %14 = vsyncpa [#allocation4], 0
    %15 = vsyncpa [#allocation3], 0
    // Predicated region
    $region2: #{tpu_custom_call.1} parent=1 // pred_check
      _
    $region3: #{tpu_custom_call.1} parent=1 // pred_check_branch
      %17 = sbr.rel (0) target = $region5
    $region4: #{tpu_custom_call.1} parent=1 // pred_region
      %s19 = ssub.s32 16, 16
      %20 = vsyncadd [#allocation4], %s19
      %s22 = sshll.u32 %s0, 4
      %s23 = int_to_ptr.vmem [resolvable:$true] %s22
      %25 = dma.vmem_to_smem %s23, 16, [#allocation2], [#allocation4]
    $region5: #{tpu_custom_call.1} parent=1 // pred_fallthru
      _
    // Predicated region
    $region6: #{tpu_custom_call.1} parent=1 // pred_check
      _
    $region7: #{tpu_custom_call.1} parent=1 // pred_check_branch
      %27 = sbr.rel (0) target = $region9
    $region8: #{tpu_custom_call.1} parent=1 // pred_region
      _
    $region9: #{tpu_custom_call.1} parent=1 // pred_fallthru
      _
    // Predicated region
    $region10: #{tpu_custom_call.1} parent=1 // pred_check
      _
    $region11: #{tpu_custom_call.1} parent=1 // pred_check_branch
      %29 = sbr.rel (0) target = $region13
    $region12: #{tpu_custom_call.1} parent=1 // pred_region
      _
    $region13: #{tpu_custom_call.1} parent=1 // pred_fallthru
      _
    // Predicated region
    $region14: #{tpu_custom_call.1} parent=1 // pred_check
      _
    $region15: #{tpu_custom_call.1} parent=1 // pred_check_branch
      %31 = sbr.rel (0) target = $region17
    $region16: #{tpu_custom_call.1} parent=1 // pred_region
      _
    $region17: #{tpu_custom_call.1} parent=1 // pred_fallthru
      _
    // Predicated region
    $region18: #{tpu_custom_call.1} parent=1 // pred_check
      _
    $region19: #{tpu_custom_call.1} parent=1 // pred_check_branch
      %33 = sbr.rel (0) target = $region21
    $region20: #{tpu_custom_call.1} parent=1 // pred_region
      _
    $region21: #{tpu_custom_call.1} parent=1 // pred_fallthru
      _
    // Predicated region
    $region22: #{tpu_custom_call.1} parent=1 // pred_check
      _
    $region23: #{tpu_custom_call.1} parent=1 // pred_check_branch
      %35 = sbr.rel (0) target = $region25
    $region24: #{tpu_custom_call.1} parent=1 // pred_region
      _
    $region25: #{tpu_custom_call.1} parent=1 // pred_fallthru
      _
    // Predicated region
    $region26: #{tpu_custom_call.1} parent=1 // pred_check
      _
    $region27: #{tpu_custom_call.1} parent=1 // pred_check_branch
      %37 = sbr.rel (0) target = $region29
    $region28: #{tpu_custom_call.1} parent=1 // pred_region
      _
    $region29: #{tpu_custom_call.1} parent=1 // pred_fallthru
      _
    // Predicated region
    $region30: #{tpu_custom_call.1} parent=1 // pred_check
      _
    $region31: #{tpu_custom_call.1} parent=1 // pred_check_branch
      %39 = sbr.rel (0) target = $region33
    $region32: #{tpu_custom_call.1} parent=1 // pred_region
      _
    $region33: #{tpu_custom_call.1} parent=1 // pred_fallthru
      _
    // Predicated region
    $region34: #{tpu_custom_call.1} parent=1 // pred_check
      _
    $region35: #{tpu_custom_call.1} parent=1 // pred_check_branch
      %41 = sbr.rel (0) target = $region37
    $region36: #{tpu_custom_call.1} parent=1 // pred_region
      _
    $region37: #{tpu_custom_call.1} parent=1 // pred_fallthru
      _
    // Predicated region
    $region38: #{tpu_custom_call.1} parent=1 // pred_check
      _
    $region39: #{tpu_custom_call.1} parent=1 // pred_check_branch
      %43 = sbr.rel (0) target = $region41
    $region40: #{tpu_custom_call.1} parent=1 // pred_region
      %44 = dma.done [#allocation4], 16
    $region41: #{tpu_custom_call.1} parent=1 // pred_fallthru
      _
    %45 = sfence
    %v46 = vld [vmem:[%s1] sm:$0xff]
    %v47 = vld [vmem:[%s1 + $0x8] sm:$0xff]
    %v48 = vld [vmem:[%s2] sm:$0xff]
    %v49 = vld [vmem:[%s2 + $0x8] sm:$0xff]
    %v50 = vld [vmem:[%s2 + $0x10] sm:$0xff]
    %v51 = vld [vmem:[%s2 + $0x18] sm:$0xff]
    %v52 = vld [vmem:[%s2 + $0x20] sm:$0xff]
    %v53 = vld [vmem:[%s2 + $0x28] sm:$0xff]
    %v54 = vld [vmem:[%s2 + $0x30] sm:$0xff]
    %v55 = vld [vmem:[%s2 + $0x38] sm:$0xff]
    %v56 = vld [vmem:[%s2 + $0x40] sm:$0xff]
    %v57 = vld [vmem:[%s2 + $0x48] sm:$0xff]
    %v58 = vld [vmem:[%s2 + $0x50] sm:$0xff]
    %v59 = vld [vmem:[%s2 + $0x58] sm:$0xff]
    %v60 = vld [vmem:[%s2 + $0x60] sm:$0xff]
    %v61 = vld [vmem:[%s2 + $0x68] sm:$0xff]
    %v62 = vld [vmem:[%s2 + $0x70] sm:$0xff]
    %v63 = vld [vmem:[%s2 + $0x78] sm:$0xff]
    %v64 = vld [vmem:[%s2 + $0x80] sm:$0xff]
    %v65 = vld [vmem:[%s2 + $0x88] sm:$0xff]
    %v66 = vld [vmem:[%s2 + $0x90] sm:$0xff]
    %v67 = vld [vmem:[%s2 + $0x98] sm:$0xff]
    %v68 = vld [vmem:[%s2 + $0xa0] sm:$0xff]
    %v69 = vld [vmem:[%s2 + $0xa8] sm:$0xff]
    %v70 = vld [vmem:[%s2 + $0xb0] sm:$0xff]
    %v71 = vld [vmem:[%s2 + $0xb8] sm:$0xff]
    %v72 = vld [vmem:[%s2 + $0xc0] sm:$0xff]
    %v73 = vld [vmem:[%s2 + $0xc8] sm:$0xff]
    %v74 = vld [vmem:[%s2 + $0xd0] sm:$0xff]
    %v75 = vld [vmem:[%s2 + $0xd8] sm:$0xff]
    %v76 = vld [vmem:[%s2 + $0xe0] sm:$0xff]
    %v77 = vld [vmem:[%s2 + $0xe8] sm:$0xff]
    %v78 = vld [vmem:[%s2 + $0xf0] sm:$0xff]
    %v79 = vld [vmem:[%s2 + $0xf8] sm:$0xff]
    %v80 = vld [vmem:[%s2 + $0x100] sm:$0xff]
    %v81 = vld [vmem:[%s2 + $0x108] sm:$0xff]
    %v82 = vld [vmem:[%s2 + $0x110] sm:$0xff]
    %v83 = vld [vmem:[%s2 + $0x118] sm:$0xff]
    %v84 = vld [vmem:[%s2 + $0x120] sm:$0xff]
    %v85 = vld [vmem:[%s2 + $0x128] sm:$0xff]
    %v86 = vld [vmem:[%s2 + $0x130] sm:$0xff]
    %v87 = vld [vmem:[%s2 + $0x138] sm:$0xff]
    %v88 = vld [vmem:[%s2 + $0x140] sm:$0xff]
    %v89 = vld [vmem:[%s2 + $0x148] sm:$0xff]
    %v90 = vld [vmem:[%s2 + $0x150] sm:$0xff]
    %v91 = vld [vmem:[%s2 + $0x158] sm:$0xff]
    %v92 = vld [vmem:[%s2 + $0x160] sm:$0xff]
    %v93 = vld [vmem:[%s2 + $0x168] sm:$0xff]
    %v94 = vld [vmem:[%s2 + $0x170] sm:$0xff]
    %v95 = vld [vmem:[%s2 + $0x178] sm:$0xff]
    %v96 = vld [vmem:[%s2 + $0x180] sm:$0xff]
    %v97 = vld [vmem:[%s2 + $0x188] sm:$0xff]
    %v98 = vld [vmem:[%s2 + $0x190] sm:$0xff]
    %v99 = vld [vmem:[%s2 + $0x198] sm:$0xff]
    %v100 = vld [vmem:[%s2 + $0x1a0] sm:$0xff]
    %v101 = vld [vmem:[%s2 + $0x1a8] sm:$0xff]
    %v102 = vld [vmem:[%s2 + $0x1b0] sm:$0xff]
    %v103 = vld [vmem:[%s2 + $0x1b8] sm:$0xff]
    %v104 = vld [vmem:[%s2 + $0x1c0] sm:$0xff]
    %v105 = vld [vmem:[%s2 + $0x1c8] sm:$0xff]
    %v106 = vld [vmem:[%s2 + $0x1d0] sm:$0xff]
    %v107 = vld [vmem:[%s2 + $0x1d8] sm:$0xff]
    %v108 = vld [vmem:[%s2 + $0x1e0] sm:$0xff]
    %v109 = vld [vmem:[%s2 + $0x1e8] sm:$0xff]
    %v110 = vld [vmem:[%s2 + $0x1f0] sm:$0xff]
    %v111 = vld [vmem:[%s2 + $0x1f8] sm:$0xff]
    %v112 = vld [vmem:[%s2 + $0x200] sm:$0xff]
    %v113 = vld [vmem:[%s2 + $0x208] sm:$0xff]
    %v114 = vld [vmem:[%s2 + $0x210] sm:$0xff]
    %v115 = vld [vmem:[%s2 + $0x218] sm:$0xff]
    %v116 = vld [vmem:[%s2 + $0x220] sm:$0xff]
    %v117 = vld [vmem:[%s2 + $0x228] sm:$0xff]
    %v118 = vld [vmem:[%s2 + $0x230] sm:$0xff]
    %v119 = vld [vmem:[%s2 + $0x238] sm:$0xff]
    %v120 = vld [vmem:[%s2 + $0x240] sm:$0xff]
    %v121 = vld [vmem:[%s2 + $0x248] sm:$0xff]
    %v122 = vld [vmem:[%s2 + $0x250] sm:$0xff]
    %v123 = vld [vmem:[%s2 + $0x258] sm:$0xff]
    %v124 = vld [vmem:[%s2 + $0x260] sm:$0xff]
    %v125 = vld [vmem:[%s2 + $0x268] sm:$0xff]
    %v126 = vld [vmem:[%s2 + $0x270] sm:$0xff]
    %v127 = vld [vmem:[%s2 + $0x278] sm:$0xff]
    %v128 = vld [vmem:[%s2 + $0x280] sm:$0xff]
    %v129 = vld [vmem:[%s2 + $0x288] sm:$0xff]
    %v130 = vld [vmem:[%s2 + $0x290] sm:$0xff]
    %v131 = vld [vmem:[%s2 + $0x298] sm:$0xff]
    %v132 = vld [vmem:[%s2 + $0x2a0] sm:$0xff]
    %v133 = vld [vmem:[%s2 + $0x2a8] sm:$0xff]
    %v134 = vld [vmem:[%s2 + $0x2b0] sm:$0xff]
    %v135 = vld [vmem:[%s2 + $0x2b8] sm:$0xff]
    %v136 = vld [vmem:[%s2 + $0x2c0] sm:$0xff]
    %v137 = vld [vmem:[%s2 + $0x2c8] sm:$0xff]
    %v138 = vld [vmem:[%s2 + $0x2d0] sm:$0xff]
    %v139 = vld [vmem:[%s2 + $0x2d8] sm:$0xff]
    %v140 = vld [vmem:[%s2 + $0x2e0] sm:$0xff]
    %v141 = vld [vmem:[%s2 + $0x2e8] sm:$0xff]
    %v142 = vld [vmem:[%s2 + $0x2f0] sm:$0xff]
    %v143 = vld [vmem:[%s2 + $0x2f8] sm:$0xff]
    %v144 = vld [vmem:[%s2 + $0x300] sm:$0xff]
    %v145 = vld [vmem:[%s2 + $0x308] sm:$0xff]
    %v146 = vld [vmem:[%s2 + $0x310] sm:$0xff]
    %v147 = vld [vmem:[%s2 + $0x318] sm:$0xff]
    %v148 = vld [vmem:[%s2 + $0x320] sm:$0xff]
    %v149 = vld [vmem:[%s2 + $0x328] sm:$0xff]
    %v150 = vld [vmem:[%s2 + $0x330] sm:$0xff]
    %v151 = vld [vmem:[%s2 + $0x338] sm:$0xff]
    %v152 = vld [vmem:[%s2 + $0x340] sm:$0xff]
    %v153 = vld [vmem:[%s2 + $0x348] sm:$0xff]
    %v154 = vld [vmem:[%s2 + $0x350] sm:$0xff]
    %v155 = vld [vmem:[%s2 + $0x358] sm:$0xff]
    %v156 = vld [vmem:[%s2 + $0x360] sm:$0xff]
    %v157 = vld [vmem:[%s2 + $0x368] sm:$0xff]
    %v158 = vld [vmem:[%s2 + $0x370] sm:$0xff]
    %v159 = vld [vmem:[%s2 + $0x378] sm:$0xff]
    %v160 = vld [vmem:[%s2 + $0x380] sm:$0xff]
    %v161 = vld [vmem:[%s2 + $0x388] sm:$0xff]
    %v162 = vld [vmem:[%s2 + $0x390] sm:$0xff]
    %v163 = vld [vmem:[%s2 + $0x398] sm:$0xff]
    %v164 = vld [vmem:[%s2 + $0x3a0] sm:$0xff]
    %v165 = vld [vmem:[%s2 + $0x3a8] sm:$0xff]
    %v166 = vld [vmem:[%s2 + $0x3b0] sm:$0xff]
    %v167 = vld [vmem:[%s2 + $0x3b8] sm:$0xff]
    %v168 = vld [vmem:[%s2 + $0x3c0] sm:$0xff]
    %v169 = vld [vmem:[%s2 + $0x3c8] sm:$0xff]
    %v170 = vld [vmem:[%s2 + $0x3d0] sm:$0xff]
    %v171 = vld [vmem:[%s2 + $0x3d8] sm:$0xff]
    %v172 = vld [vmem:[%s2 + $0x3e0] sm:$0xff]
    %v173 = vld [vmem:[%s2 + $0x3e8] sm:$0xff]
    %v174 = vld [vmem:[%s2 + $0x3f0] sm:$0xff]
    %v175 = vld [vmem:[%s2 + $0x3f8] sm:$0xff]
    %v178 = vcombine.high %v46, %v46
    %v180 = vunpack.c.l.s4 1983009808
    %v181 = vunpack.c.0.s8 %v180
    %v182 = vlaneseq
    %v183 = vshrl.u32 %v182, 7
    %v184 = vsub.s32 %v181, %v183
    %v185 = vrot.slane %v46, %v184
    %v187 = vunpack.c.l.s4 1983009808
    %v188 = vunpack.c.0.s8 %v187
    %v189 = vlaneseq
    %v190 = vshrl.u32 %v189, 7
    %v191 = vsub.s32 %v188, %v190
    %v192 = vrot.slane %v178, %v191
    %v193 = vcombine.high %v185, %v185
    %v194 = vcombine.high %v192, %v192
    %v195 = vcombine.high %v47, %v47
    %v197 = vunpack.c.l.s4 1983009808
    %v198 = vunpack.c.0.s8 %v197
    %v199 = vlaneseq
    %v200 = vshrl.u32 %v199, 7
    %v201 = vsub.s32 %v198, %v200
    %v202 = vrot.slane %v47, %v201
    %v204 = vunpack.c.l.s4 1983009808
    %v205 = vunpack.c.0.s8 %v204
    %v206 = vlaneseq
    %v207 = vshrl.u32 %v206, 7
    %v208 = vsub.s32 %v205, %v207
    %v209 = vrot.slane %v195, %v208
    %v210 = vcombine.high %v202, %v202
    %v211 = vcombine.high %v209, %v209
    %220 = vmatprep.subr.mxu0 0.0
    %221 = vmatpush1.msra.mxu0 %v48
    %222 = vmatprep.subr.mxu0 0.0
    %223 = vmatpush1.msra.mxu0 %v49
    %224 = vmatprep.subr.mxu0 0.0
    %225 = vmatpush1.msra.mxu0 %v50
    %226 = vmatprep.subr.mxu0 0.0
    %227 = vmatpush1.msra.mxu0 %v51
    %228 = vmatprep.subr.mxu0 0.0
    %229 = vmatpush1.msra.mxu0 %v52
    %230 = vmatprep.subr.mxu0 0.0
    %231 = vmatpush1.msra.mxu0 %v53
    %232 = vmatprep.subr.mxu0 0.0
    %233 = vmatpush1.msra.mxu0 %v54
    %234 = vmatprep.subr.mxu0 0.0
    %235 = vmatpush1.msra.mxu0 %v55
    %236 = vmatprep.subr.mxu0 0.0
    %237 = vmatpush1.msra.mxu0 %v56
    %238 = vmatprep.subr.mxu0 0.0
    %239 = vmatpush1.msra.mxu0 %v57
    %240 = vmatprep.subr.mxu0 0.0
    %241 = vmatpush1.msra.mxu0 %v58
    %242 = vmatprep.subr.mxu0 0.0
    %243 = vmatpush1.msra.mxu0 %v59
    %244 = vmatprep.subr.mxu0 0.0
    %245 = vmatpush1.msra.mxu0 %v60
    %246 = vmatprep.subr.mxu0 0.0
    %247 = vmatpush1.msra.mxu0 %v61
    %248 = vmatprep.subr.mxu0 0.0
    %249 = vmatpush1.msra.mxu0 %v62
    %250 = vmatprep.subr.mxu0 0.0
    %251 = vmatpush1.msra.mxu0 %v63
    %252 = vmatprep.subr.mxu0 0.0
    %253 = vmatpush1.msra.mxu0 %v64
    %254 = vmatprep.subr.mxu0 0.0
    %255 = vmatpush1.msra.mxu0 %v65
    %256 = vmatprep.subr.mxu0 0.0
    %257 = vmatpush1.msra.mxu0 %v66
    %258 = vmatprep.subr.mxu0 0.0
    %259 = vmatpush1.msra.mxu0 %v67
    %260 = vmatprep.subr.mxu0 0.0
    %261 = vmatpush1.msra.mxu0 %v68
    %262 = vmatprep.subr.mxu0 0.0
    %263 = vmatpush1.msra.mxu0 %v69
    %264 = vmatprep.subr.mxu0 0.0
    %265 = vmatpush1.msra.mxu0 %v70
    %266 = vmatprep.subr.mxu0 0.0
    %267 = vmatpush1.msra.mxu0 %v71
    %268 = vmatprep.subr.mxu0 0.0
    %269 = vmatpush1.msra.mxu0 %v72
    %270 = vmatprep.subr.mxu0 0.0
    %271 = vmatpush1.msra.mxu0 %v73
    %272 = vmatprep.subr.mxu0 0.0
    %273 = vmatpush1.msra.mxu0 %v74
    %274 = vmatprep.subr.mxu0 0.0
    %275 = vmatpush1.msra.mxu0 %v75
    %276 = vmatprep.subr.mxu0 0.0
    %277 = vmatpush1.msra.mxu0 %v76
    %278 = vmatprep.subr.mxu0 0.0
    %279 = vmatpush1.msra.mxu0 %v77
    %280 = vmatprep.subr.mxu0 0.0
    %281 = vmatpush1.msra.mxu0 %v78
    %282 = vmatprep.subr.mxu0 0.0
    %283 = vmatpush1.msra.mxu0 %v79
    %284 = vmatprep.mubr.f32.mxu0 %v193
    %285 = vmatmul.mubr.f32.gmra.mrb[0].mxu0 %v185
    %v286 = vpop.f32.mrb[0].mxu0
    %v287 = vadd.f32 0.0, %v286
    %v288 = vpop.f32.mrb[0].mxu0
    %289 = vdwg.mxu0
    %290 = vmatprep.subr.mxu0 0.0
    %291 = vmatpush1.msra.mxu0 %v80
    %292 = vmatprep.subr.mxu0 0.0
    %293 = vmatpush1.msra.mxu0 %v81
    %294 = vmatprep.subr.mxu0 0.0
    %295 = vmatpush1.msra.mxu0 %v82
    %296 = vmatprep.subr.mxu0 0.0
    %297 = vmatpush1.msra.mxu0 %v83
    %298 = vmatprep.subr.mxu0 0.0
    %299 = vmatpush1.msra.mxu0 %v84
    %300 = vmatprep.subr.mxu0 0.0
    %301 = vmatpush1.msra.mxu0 %v85
    %302 = vmatprep.subr.mxu0 0.0
    %303 = vmatpush1.msra.mxu0 %v86
    %304 = vmatprep.subr.mxu0 0.0
    %305 = vmatpush1.msra.mxu0 %v87
    %306 = vmatprep.subr.mxu0 0.0
    %307 = vmatpush1.msra.mxu0 %v88
    %308 = vmatprep.subr.mxu0 0.0
    %309 = vmatpush1.msra.mxu0 %v89
    %310 = vmatprep.subr.mxu0 0.0
    %311 = vmatpush1.msra.mxu0 %v90
    %312 = vmatprep.subr.mxu0 0.0
    %313 = vmatpush1.msra.mxu0 %v91
    %314 = vmatprep.subr.mxu0 0.0
    %315 = vmatpush1.msra.mxu0 %v92
    %316 = vmatprep.subr.mxu0 0.0
    %317 = vmatpush1.msra.mxu0 %v93
    %318 = vmatprep.subr.mxu0 0.0
    %319 = vmatpush1.msra.mxu0 %v94
    %320 = vmatprep.subr.mxu0 0.0
    %321 = vmatpush1.msra.mxu0 %v95
    %322 = vmatprep.subr.mxu0 0.0
    %323 = vmatpush1.msra.mxu0 %v96
    %324 = vmatprep.subr.mxu0 0.0
    %325 = vmatpush1.msra.mxu0 %v97
    %326 = vmatprep.subr.mxu0 0.0
    %327 = vmatpush1.msra.mxu0 %v98
    %328 = vmatprep.subr.mxu0 0.0
    %329 = vmatpush1.msra.mxu0 %v99
    %330 = vmatprep.subr.mxu0 0.0
    %331 = vmatpush1.msra.mxu0 %v100
    %332 = vmatprep.subr.mxu0 0.0
    %333 = vmatpush1.msra.mxu0 %v101
    %334 = vmatprep.subr.mxu0 0.0
    %335 = vmatpush1.msra.mxu0 %v102
    %336 = vmatprep.subr.mxu0 0.0
    %337 = vmatpush1.msra.mxu0 %v103
    %338 = vmatprep.subr.mxu0 0.0
    %339 = vmatpush1.msra.mxu0 %v104
    %340 = vmatprep.subr.mxu0 0.0
    %341 = vmatpush1.msra.mxu0 %v105
    %342 = vmatprep.subr.mxu0 0.0
    %343 = vmatpush1.msra.mxu0 %v106
    %344 = vmatprep.subr.mxu0 0.0
    %345 = vmatpush1.msra.mxu0 %v107
    %346 = vmatprep.subr.mxu0 0.0
    %347 = vmatpush1.msra.mxu0 %v108
    %348 = vmatprep.subr.mxu0 0.0
    %349 = vmatpush1.msra.mxu0 %v109
    %350 = vmatprep.subr.mxu0 0.0
    %351 = vmatpush1.msra.mxu0 %v110
    %352 = vmatprep.subr.mxu0 0.0
    %353 = vmatpush1.msra.mxu0 %v111
    %354 = vmatprep.mubr.f32.mxu0 %v194
    %355 = vmatmul.mubr.f32.gmra.mrb[0].mxu0 %v192
    %v356 = vpop.f32.mrb[0].mxu0
    %v357 = vadd.f32 %v287, %v356
    %v358 = vpop.f32.mrb[0].mxu0
    %359 = vdwg.mxu0
    %360 = vmatprep.subr.mxu0 0.0
    %361 = vmatpush1.msra.mxu0 %v112
    %362 = vmatprep.subr.mxu0 0.0
    %363 = vmatpush1.msra.mxu0 %v113
    %364 = vmatprep.subr.mxu0 0.0
    %365 = vmatpush1.msra.mxu0 %v114
    %366 = vmatprep.subr.mxu0 0.0
    %367 = vmatpush1.msra.mxu0 %v115
    %368 = vmatprep.subr.mxu0 0.0
    %369 = vmatpush1.msra.mxu0 %v116
    %370 = vmatprep.subr.mxu0 0.0
    %371 = vmatpush1.msra.mxu0 %v117
    %372 = vmatprep.subr.mxu0 0.0
    %373 = vmatpush1.msra.mxu0 %v118
    %374 = vmatprep.subr.mxu0 0.0
    %375 = vmatpush1.msra.mxu0 %v119
    %376 = vmatprep.subr.mxu0 0.0
    %377 = vmatpush1.msra.mxu0 %v120
    %378 = vmatprep.subr.mxu0 0.0
    %379 = vmatpush1.msra.mxu0 %v121
    %380 = vmatprep.subr.mxu0 0.0
    %381 = vmatpush1.msra.mxu0 %v122
    %382 = vmatprep.subr.mxu0 0.0
    %383 = vmatpush1.msra.mxu0 %v123
    %384 = vmatprep.subr.mxu0 0.0
    %385 = vmatpush1.msra.mxu0 %v124
    %386 = vmatprep.subr.mxu0 0.0
    %387 = vmatpush1.msra.mxu0 %v125
    %388 = vmatprep.subr.mxu0 0.0
    %389 = vmatpush1.msra.mxu0 %v126
    %390 = vmatprep.subr.mxu0 0.0
    %391 = vmatpush1.msra.mxu0 %v127
    %392 = vmatprep.subr.mxu0 0.0
    %393 = vmatpush1.msra.mxu0 %v128
    %394 = vmatprep.subr.mxu0 0.0
    %395 = vmatpush1.msra.mxu0 %v129
    %396 = vmatprep.subr.mxu0 0.0
    %397 = vmatpush1.msra.mxu0 %v130
    %398 = vmatprep.subr.mxu0 0.0
    %399 = vmatpush1.msra.mxu0 %v131
    %400 = vmatprep.subr.mxu0 0.0
    %401 = vmatpush1.msra.mxu0 %v132
    %402 = vmatprep.subr.mxu0 0.0
    %403 = vmatpush1.msra.mxu0 %v133
    %404 = vmatprep.subr.mxu0 0.0
    %405 = vmatpush1.msra.mxu0 %v134
    %406 = vmatprep.subr.mxu0 0.0
    %407 = vmatpush1.msra.mxu0 %v135
    %408 = vmatprep.subr.mxu0 0.0
    %409 = vmatpush1.msra.mxu0 %v136
    %410 = vmatprep.subr.mxu0 0.0
    %411 = vmatpush1.msra.mxu0 %v137
    %412 = vmatprep.subr.mxu0 0.0
    %413 = vmatpush1.msra.mxu0 %v138
    %414 = vmatprep.subr.mxu0 0.0
    %415 = vmatpush1.msra.mxu0 %v139
    %416 = vmatprep.subr.mxu0 0.0
    %417 = vmatpush1.msra.mxu0 %v140
    %418 = vmatprep.subr.mxu0 0.0
    %419 = vmatpush1.msra.mxu0 %v141
    %420 = vmatprep.subr.mxu0 0.0
    %421 = vmatpush1.msra.mxu0 %v142
    %422 = vmatprep.subr.mxu0 0.0
    %423 = vmatpush1.msra.mxu0 %v143
    %424 = vmatprep.mubr.f32.mxu0 %v210
    %425 = vmatmul.mubr.f32.gmra.mrb[0].mxu0 %v202
    %v426 = vpop.f32.mrb[0].mxu0
    %v427 = vadd.f32 %v357, %v426
    %v428 = vpop.f32.mrb[0].mxu0
    %429 = vdwg.mxu0
    %430 = vmatprep.subr.mxu0 0.0
    %431 = vmatpush1.msra.mxu0 %v144
    %432 = vmatprep.subr.mxu0 0.0
    %433 = vmatpush1.msra.mxu0 %v145
    %434 = vmatprep.subr.mxu0 0.0
    %435 = vmatpush1.msra.mxu0 %v146
    %436 = vmatprep.subr.mxu0 0.0
    %437 = vmatpush1.msra.mxu0 %v147
    %438 = vmatprep.subr.mxu0 0.0
    %439 = vmatpush1.msra.mxu0 %v148
    %440 = vmatprep.subr.mxu0 0.0
    %441 = vmatpush1.msra.mxu0 %v149
    %442 = vmatprep.subr.mxu0 0.0
    %443 = vmatpush1.msra.mxu0 %v150
    %444 = vmatprep.subr.mxu0 0.0
    %445 = vmatpush1.msra.mxu0 %v151
    %446 = vmatprep.subr.mxu0 0.0
    %447 = vmatpush1.msra.mxu0 %v152
    %448 = vmatprep.subr.mxu0 0.0
    %449 = vmatpush1.msra.mxu0 %v153
    %450 = vmatprep.subr.mxu0 0.0
    %451 = vmatpush1.msra.mxu0 %v154
    %452 = vmatprep.subr.mxu0 0.0
    %453 = vmatpush1.msra.mxu0 %v155
    %454 = vmatprep.subr.mxu0 0.0
    %455 = vmatpush1.msra.mxu0 %v156
    %456 = vmatprep.subr.mxu0 0.0
    %457 = vmatpush1.msra.mxu0 %v157
    %458 = vmatprep.subr.mxu0 0.0
    %459 = vmatpush1.msra.mxu0 %v158
    %460 = vmatprep.subr.mxu0 0.0
    %461 = vmatpush1.msra.mxu0 %v159
    %462 = vmatprep.subr.mxu0 0.0
    %463 = vmatpush1.msra.mxu0 %v160
    %464 = vmatprep.subr.mxu0 0.0
    %465 = vmatpush1.msra.mxu0 %v161
    %466 = vmatprep.subr.mxu0 0.0
    %467 = vmatpush1.msra.mxu0 %v162
    %468 = vmatprep.subr.mxu0 0.0
    %469 = vmatpush1.msra.mxu0 %v163
    %470 = vmatprep.subr.mxu0 0.0
    %471 = vmatpush1.msra.mxu0 %v164
    %472 = vmatprep.subr.mxu0 0.0
    %473 = vmatpush1.msra.mxu0 %v165
    %474 = vmatprep.subr.mxu0 0.0
    %475 = vmatpush1.msra.mxu0 %v166
    %476 = vmatprep.subr.mxu0 0.0
    %477 = vmatpush1.msra.mxu0 %v167
    %478 = vmatprep.subr.mxu0 0.0
    %479 = vmatpush1.msra.mxu0 %v168
    %480 = vmatprep.subr.mxu0 0.0
    %481 = vmatpush1.msra.mxu0 %v169
    %482 = vmatprep.subr.mxu0 0.0
    %483 = vmatpush1.msra.mxu0 %v170
    %484 = vmatprep.subr.mxu0 0.0
    %485 = vmatpush1.msra.mxu0 %v171
    %486 = vmatprep.subr.mxu0 0.0
    %487 = vmatpush1.msra.mxu0 %v172
    %488 = vmatprep.subr.mxu0 0.0
    %489 = vmatpush1.msra.mxu0 %v173
    %490 = vmatprep.subr.mxu0 0.0
    %491 = vmatpush1.msra.mxu0 %v174
    %492 = vmatprep.subr.mxu0 0.0
    %493 = vmatpush1.msra.mxu0 %v175
    %494 = vmatprep.mubr.f32.mxu0 %v211
    %495 = vmatmul.mubr.f32.gmra.mrb[0].mxu0 %v209
    %v496 = vpop.f32.mrb[0].mxu0
    %v497 = vadd.f32 %v427, %v496
    %v498 = vpop.f32.mrb[0].mxu0
    %499 = vdwg.mxu0
    %s500 = sld [smem:[#allocation2]]
    %v501 = vld [vmem:[%s5] sm:$0xff]
    %v502 = vld [vmem:[%s5 + $0x8] sm:$0xff]
    %v503 = vld [vmem:[%s5 + $0x10] sm:$0xff]
    %v504 = vld [vmem:[%s5 + $0x18] sm:$0xff]
    %v505 = vld [vmem:[%s5 + $0x20] sm:$0xff]
    %v506 = vld [vmem:[%s5 + $0x28] sm:$0xff]
    %v507 = vld [vmem:[%s5 + $0x30] sm:$0xff]
    %v508 = vld [vmem:[%s5 + $0x38] sm:$0xff]
    %vm509 = vcmask 523264
    %v511 = vsel %vm509, %v497, 0
    %513 = vmatprep.subr.mxu0 0.0
    %514 = vmatpush1.msra.mxu0 %v501
    %515 = vmatprep.subr.mxu0 0.0
    %516 = vmatpush1.msra.mxu0 %v502
    %517 = vmatprep.subr.mxu0 0.0
    %518 = vmatpush1.msra.mxu0 %v503
    %519 = vmatprep.subr.mxu0 0.0
    %520 = vmatpush1.msra.mxu0 %v504
    %521 = vmatprep.subr.mxu0 0.0
    %522 = vmatpush1.msra.mxu0 %v505
    %523 = vmatprep.subr.mxu0 0.0
    %524 = vmatpush1.msra.mxu0 %v506
    %525 = vmatprep.subr.mxu0 0.0
    %526 = vmatpush1.msra.mxu0 %v507
    %527 = vmatprep.subr.mxu0 0.0
    %528 = vmatpush1.msra.mxu0 %v508
    %529 = vmatprep.subr.mxu0 0.0
    %530 = vmatpush1.msra.mxu0 0.0
    %531 = vmatprep.subr.mxu0 0.0
    %532 = vmatpush1.msra.mxu0 0.0
    %533 = vmatprep.subr.mxu0 0.0
    %534 = vmatpush1.msra.mxu0 0.0
    %535 = vmatprep.subr.mxu0 0.0
    %536 = vmatpush1.msra.mxu0 0.0
    %537 = vmatprep.subr.mxu0 0.0
    %538 = vmatpush1.msra.mxu0 0.0
    %539 = vmatprep.subr.mxu0 0.0
    %540 = vmatpush1.msra.mxu0 0.0
    %541 = vmatprep.subr.mxu0 0.0
    %542 = vmatpush1.msra.mxu0 0.0
    %543 = vmatprep.subr.mxu0 0.0
    %544 = vmatpush1.msra.mxu0 0.0
    %545 = vmatprep.subr.mxu0 0.0
    %546 = vmatpush1.msra.mxu0 0.0
    %547 = vmatprep.subr.mxu0 0.0
    %548 = vmatpush1.msra.mxu0 0.0
    %549 = vmatprep.subr.mxu0 0.0
    %550 = vmatpush1.msra.mxu0 0.0
    %551 = vmatprep.subr.mxu0 0.0
    %552 = vmatpush1.msra.mxu0 0.0
    %553 = vmatprep.subr.mxu0 0.0
    %554 = vmatpush1.msra.mxu0 0.0
    %555 = vmatprep.subr.mxu0 0.0
    %556 = vmatpush1.msra.mxu0 0.0
    %557 = vmatprep.subr.mxu0 0.0
    %558 = vmatpush1.msra.mxu0 0.0
    %559 = vmatprep.subr.mxu0 0.0
    %560 = vmatpush1.msra.mxu0 0.0
    %561 = vmatprep.subr.mxu0 0.0
    %562 = vmatpush1.msra.mxu0 0.0
    %563 = vmatprep.subr.mxu0 0.0
    %564 = vmatpush1.msra.mxu0 0.0
    %565 = vmatprep.subr.mxu0 0.0
    %566 = vmatpush1.msra.mxu0 0.0
    %567 = vmatprep.subr.mxu0 0.0
    %568 = vmatpush1.msra.mxu0 0.0
    %569 = vmatprep.subr.mxu0 0.0
    %570 = vmatpush1.msra.mxu0 0.0
    %571 = vmatprep.subr.mxu0 0.0
    %572 = vmatpush1.msra.mxu0 0.0
    %573 = vmatprep.subr.mxu0 0.0
    %574 = vmatpush1.msra.mxu0 0.0
    %575 = vmatprep.subr.mxu0 0.0
    %576 = vmatpush1.msra.mxu0 0.0
    %577 = vmatprep.mubr.f32.mxu0 0.0
    %578 = vmatmul.mubr.f32.gmra.mrb[0].mxu0 %v511
    %v579 = vpop.f32.mrb[0].mxu0
    %v580 = vadd.f32 0.0, %v579
    %v581 = vpop.f32.mrb[0].mxu0
    %582 = vdwg.mxu0
    %v583 = vmul.f32 %v580, 0.0625
    %v584 = vld [vmem:[%s6] sm:$0xf]
    %vm585 = vcmask 31744
    %v587 = vsel %vm585, %v583, 0
    %vm589 = vcmask 1043456
    %v591 = vsel %vm589, %v584, 0
    %593 = vmatprep.subr.mxu0 0.0
    %594 = vmatpush1.msra.mxu0 %v591
    %595 = vmatprep.subr.mxu0 0.0
    %596 = vmatpush1.msra.mxu0 0.0
    %597 = vmatprep.subr.mxu0 0.0
    %598 = vmatpush1.msra.mxu0 0.0
    %599 = vmatprep.subr.mxu0 0.0
    %600 = vmatpush1.msra.mxu0 0.0
    %601 = vmatprep.subr.mxu0 0.0
    %602 = vmatpush1.msra.mxu0 0.0
    %603 = vmatprep.subr.mxu0 0.0
    %604 = vmatpush1.msra.mxu0 0.0
    %605 = vmatprep.subr.mxu0 0.0
    %606 = vmatpush1.msra.mxu0 0.0
    %607 = vmatprep.subr.mxu0 0.0
    %608 = vmatpush1.msra.mxu0 0.0
    %609 = vmatprep.subr.mxu0 0.0
    %610 = vmatpush1.msra.mxu0 0.0
    %611 = vmatprep.subr.mxu0 0.0
    %612 = vmatpush1.msra.mxu0 0.0
    %613 = vmatprep.subr.mxu0 0.0
    %614 = vmatpush1.msra.mxu0 0.0
    %615 = vmatprep.subr.mxu0 0.0
    %616 = vmatpush1.msra.mxu0 0.0
    %617 = vmatprep.subr.mxu0 0.0
    %618 = vmatpush1.msra.mxu0 0.0
    %619 = vmatprep.subr.mxu0 0.0
    %620 = vmatpush1.msra.mxu0 0.0
    %621 = vmatprep.subr.mxu0 0.0
    %622 = vmatpush1.msra.mxu0 0.0
    %623 = vmatprep.subr.mxu0 0.0
    %624 = vmatpush1.msra.mxu0 0.0
    %625 = vmatprep.subr.mxu0 0.0
    %626 = vmatpush1.msra.mxu0 0.0
    %627 = vmatprep.subr.mxu0 0.0
    %628 = vmatpush1.msra.mxu0 0.0
    %629 = vmatprep.subr.mxu0 0.0
    %630 = vmatpush1.msra.mxu0 0.0
    %631 = vmatprep.subr.mxu0 0.0
    %632 = vmatpush1.msra.mxu0 0.0
    %633 = vmatprep.subr.mxu0 0.0
    %634 = vmatpush1.msra.mxu0 0.0
    %635 = vmatprep.subr.mxu0 0.0
    %636 = vmatpush1.msra.mxu0 0.0
    %637 = vmatprep.subr.mxu0 0.0
    %638 = vmatpush1.msra.mxu0 0.0
    %639 = vmatprep.subr.mxu0 0.0
    %640 = vmatpush1.msra.mxu0 0.0
    %641 = vmatprep.subr.mxu0 0.0
    %642 = vmatpush1.msra.mxu0 0.0
    %643 = vmatprep.subr.mxu0 0.0
    %644 = vmatpush1.msra.mxu0 0.0
    %645 = vmatprep.subr.mxu0 0.0
    %646 = vmatpush1.msra.mxu0 0.0
    %647 = vmatprep.subr.mxu0 0.0
    %648 = vmatpush1.msra.mxu0 0.0
    %649 = vmatprep.subr.mxu0 0.0
    %650 = vmatpush1.msra.mxu0 0.0
    %651 = vmatprep.subr.mxu0 0.0
    %652 = vmatpush1.msra.mxu0 0.0
    %653 = vmatprep.subr.mxu0 0.0
    %654 = vmatpush1.msra.mxu0 0.0
    %655 = vmatprep.subr.mxu0 0.0
    %656 = vmatpush1.msra.mxu0 0.0
    %657 = vmatprep.mubr.f32.mxu0 0.0
    %658 = vmatmul.mubr.f32.gmra.mrb[0].mxu0 %v587
    %v659 = vpop.f32.mrb[0].mxu0
    %v660 = vadd.f32 0.0, %v659
    %v661 = vpop.f32.mrb[0].mxu0
    %662 = vdwg.mxu0
    %v663 = vsub.f32 %v497, %v660
    %v664 = vmul.f32 %v663, %v663
    %v666 = vsel %vm509, %v664, 0
    %668 = vmatprep.subr.mxu0 0.0
    %669 = vmatpush1.msra.mxu0 %v501
    %670 = vmatprep.subr.mxu0 0.0
    %671 = vmatpush1.msra.mxu0 %v502
    %672 = vmatprep.subr.mxu0 0.0
    %673 = vmatpush1.msra.mxu0 %v503
    %674 = vmatprep.subr.mxu0 0.0
    %675 = vmatpush1.msra.mxu0 %v504
    %676 = vmatprep.subr.mxu0 0.0
    %677 = vmatpush1.msra.mxu0 %v505
    %678 = vmatprep.subr.mxu0 0.0
    %679 = vmatpush1.msra.mxu0 %v506
    %680 = vmatprep.subr.mxu0 0.0
    %681 = vmatpush1.msra.mxu0 %v507
    %682 = vmatprep.subr.mxu0 0.0
    %683 = vmatpush1.msra.mxu0 %v508
    %684 = vmatprep.subr.mxu0 0.0
    %685 = vmatpush1.msra.mxu0 0.0
    %686 = vmatprep.subr.mxu0 0.0
    %687 = vmatpush1.msra.mxu0 0.0
    %688 = vmatprep.subr.mxu0 0.0
    %689 = vmatpush1.msra.mxu0 0.0
    %690 = vmatprep.subr.mxu0 0.0
    %691 = vmatpush1.msra.mxu0 0.0
    %692 = vmatprep.subr.mxu0 0.0
    %693 = vmatpush1.msra.mxu0 0.0
    %694 = vmatprep.subr.mxu0 0.0
    %695 = vmatpush1.msra.mxu0 0.0
    %696 = vmatprep.subr.mxu0 0.0
    %697 = vmatpush1.msra.mxu0 0.0
    %698 = vmatprep.subr.mxu0 0.0
    %699 = vmatpush1.msra.mxu0 0.0
    %700 = vmatprep.subr.mxu0 0.0
    %701 = vmatpush1.msra.mxu0 0.0
    %702 = vmatprep.subr.mxu0 0.0
    %703 = vmatpush1.msra.mxu0 0.0
    %704 = vmatprep.subr.mxu0 0.0
    %705 = vmatpush1.msra.mxu0 0.0
    %706 = vmatprep.subr.mxu0 0.0
    %707 = vmatpush1.msra.mxu0 0.0
    %708 = vmatprep.subr.mxu0 0.0
    %709 = vmatpush1.msra.mxu0 0.0
    %710 = vmatprep.subr.mxu0 0.0
    %711 = vmatpush1.msra.mxu0 0.0
    %712 = vmatprep.subr.mxu0 0.0
    %713 = vmatpush1.msra.mxu0 0.0
    %714 = vmatprep.subr.mxu0 0.0
    %715 = vmatpush1.msra.mxu0 0.0
    %716 = vmatprep.subr.mxu0 0.0
    %717 = vmatpush1.msra.mxu0 0.0
    %718 = vmatprep.subr.mxu0 0.0
    %719 = vmatpush1.msra.mxu0 0.0
    %720 = vmatprep.subr.mxu0 0.0
    %721 = vmatpush1.msra.mxu0 0.0
    %722 = vmatprep.subr.mxu0 0.0
    %723 = vmatpush1.msra.mxu0 0.0
    %724 = vmatprep.subr.mxu0 0.0
    %725 = vmatpush1.msra.mxu0 0.0
    %726 = vmatprep.subr.mxu0 0.0
    %727 = vmatpush1.msra.mxu0 0.0
    %728 = vmatprep.subr.mxu0 0.0
    %729 = vmatpush1.msra.mxu0 0.0
    %730 = vmatprep.subr.mxu0 0.0
    %731 = vmatpush1.msra.mxu0 0.0
    %732 = vmatprep.mubr.f32.mxu0 0.0
    %733 = vmatmul.mubr.f32.gmra.mrb[0].mxu0 %v666
    %v734 = vpop.f32.mrb[0].mxu0
    %v735 = vadd.f32 0.0, %v734
    %v736 = vpop.f32.mrb[0].mxu0
    %737 = vdwg.mxu0
    %v738 = vmul.f32 %v735, 0.0625
    %v739 = vadd.f32 %v738, 1e-05
    %v740 = vrsqrt.pop %v739
    %v742 = vsel %vm585, %v740, 0
    %744 = vmatprep.subr.mxu0 0.0
    %745 = vmatpush1.msra.mxu0 %v591
    %746 = vmatprep.subr.mxu0 0.0
    %747 = vmatpush1.msra.mxu0 0.0
    %748 = vmatprep.subr.mxu0 0.0
    %749 = vmatpush1.msra.mxu0 0.0
    %750 = vmatprep.subr.mxu0 0.0
    %751 = vmatpush1.msra.mxu0 0.0
    %752 = vmatprep.subr.mxu0 0.0
    %753 = vmatpush1.msra.mxu0 0.0
    %754 = vmatprep.subr.mxu0 0.0
    %755 = vmatpush1.msra.mxu0 0.0
    %756 = vmatprep.subr.mxu0 0.0
    %757 = vmatpush1.msra.mxu0 0.0
    %758 = vmatprep.subr.mxu0 0.0
    %759 = vmatpush1.msra.mxu0 0.0
    %760 = vmatprep.subr.mxu0 0.0
    %761 = vmatpush1.msra.mxu0 0.0
    %762 = vmatprep.subr.mxu0 0.0
    %763 = vmatpush1.msra.mxu0 0.0
    %764 = vmatprep.subr.mxu0 0.0
    %765 = vmatpush1.msra.mxu0 0.0
    %766 = vmatprep.subr.mxu0 0.0
    %767 = vmatpush1.msra.mxu0 0.0
    %768 = vmatprep.subr.mxu0 0.0
    %769 = vmatpush1.msra.mxu0 0.0
    %770 = vmatprep.subr.mxu0 0.0
    %771 = vmatpush1.msra.mxu0 0.0
    %772 = vmatprep.subr.mxu0 0.0
    %773 = vmatpush1.msra.mxu0 0.0
    %774 = vmatprep.subr.mxu0 0.0
    %775 = vmatpush1.msra.mxu0 0.0
    %776 = vmatprep.subr.mxu0 0.0
    %777 = vmatpush1.msra.mxu0 0.0
    %778 = vmatprep.subr.mxu0 0.0
    %779 = vmatpush1.msra.mxu0 0.0
    %780 = vmatprep.subr.mxu0 0.0
    %781 = vmatpush1.msra.mxu0 0.0
    %782 = vmatprep.subr.mxu0 0.0
    %783 = vmatpush1.msra.mxu0 0.0
    %784 = vmatprep.subr.mxu0 0.0
    %785 = vmatpush1.msra.mxu0 0.0
    %786 = vmatprep.subr.mxu0 0.0
    %787 = vmatpush1.msra.mxu0 0.0
    %788 = vmatprep.subr.mxu0 0.0
    %789 = vmatpush1.msra.mxu0 0.0
    %790 = vmatprep.subr.mxu0 0.0
    %791 = vmatpush1.msra.mxu0 0.0
    %792 = vmatprep.subr.mxu0 0.0
    %793 = vmatpush1.msra.mxu0 0.0
    %794 = vmatprep.subr.mxu0 0.0
    %795 = vmatpush1.msra.mxu0 0.0
    %796 = vmatprep.subr.mxu0 0.0
    %797 = vmatpush1.msra.mxu0 0.0
    %798 = vmatprep.subr.mxu0 0.0
    %799 = vmatpush1.msra.mxu0 0.0
    %800 = vmatprep.subr.mxu0 0.0
    %801 = vmatpush1.msra.mxu0 0.0
    %802 = vmatprep.subr.mxu0 0.0
    %803 = vmatpush1.msra.mxu0 0.0
    %804 = vmatprep.subr.mxu0 0.0
    %805 = vmatpush1.msra.mxu0 0.0
    %806 = vmatprep.subr.mxu0 0.0
    %807 = vmatpush1.msra.mxu0 0.0
    %808 = vmatprep.mubr.f32.mxu0 0.0
    %809 = vmatmul.mubr.f32.gmra.mrb[0].mxu0 %v742
    %v810 = vpop.f32.mrb[0].mxu0
    %v811 = vadd.f32 0.0, %v810
    %v812 = vpop.f32.mrb[0].mxu0
    %813 = vdwg.mxu0
    %v814 = vmul.f32 %v663, %v811
    %vm815 = vcmp.ge.f32.partialorder %v814, 0.0
    %v816 = vstv %s500
    %v817 = vmul.f32 %v816, %v814
    %v818 = vsel %vm815, %v814, %v817
    %v819 = vld [vmem:[%s3] sm:$0xff]
    %v820 = vld [vmem:[%s3 + $0x8] sm:$0xff]
    %v821 = vld [vmem:[%s3 + $0x10] sm:$0xff]
    %v822 = vld [vmem:[%s3 + $0x18] sm:$0xff]
    %v823 = vld [vmem:[%s3 + $0x20] sm:$0xff]
    %v824 = vld [vmem:[%s3 + $0x28] sm:$0xff]
    %v825 = vld [vmem:[%s3 + $0x30] sm:$0xff]
    %v826 = vld [vmem:[%s3 + $0x38] sm:$0xff]
    %v827 = vld [vmem:[%s3 + $0x40] sm:$0xff]
    %v828 = vld [vmem:[%s3 + $0x48] sm:$0xff]
    %v829 = vld [vmem:[%s3 + $0x50] sm:$0xff]
    %v830 = vld [vmem:[%s3 + $0x58] sm:$0xff]
    %v831 = vld [vmem:[%s3 + $0x60] sm:$0xff]
    %v832 = vld [vmem:[%s3 + $0x68] sm:$0xff]
    %v833 = vld [vmem:[%s3 + $0x70] sm:$0xff]
    %v834 = vld [vmem:[%s3 + $0x78] sm:$0xff]
    %v835 = vld [vmem:[%s3 + $0x80] sm:$0xff]
    %v836 = vld [vmem:[%s3 + $0x88] sm:$0xff]
    %v837 = vld [vmem:[%s3 + $0x90] sm:$0xff]
    %v838 = vld [vmem:[%s3 + $0x98] sm:$0xff]
    %v839 = vld [vmem:[%s3 + $0xa0] sm:$0xff]
    %v840 = vld [vmem:[%s3 + $0xa8] sm:$0xff]
    %v841 = vld [vmem:[%s3 + $0xb0] sm:$0xff]
    %v842 = vld [vmem:[%s3 + $0xb8] sm:$0xff]
    %v843 = vld [vmem:[%s3 + $0xc0] sm:$0xff]
    %v844 = vld [vmem:[%s3 + $0xc8] sm:$0xff]
    %v845 = vld [vmem:[%s3 + $0xd0] sm:$0xff]
    %v846 = vld [vmem:[%s3 + $0xd8] sm:$0xff]
    %v847 = vld [vmem:[%s3 + $0xe0] sm:$0xff]
    %v848 = vld [vmem:[%s3 + $0xe8] sm:$0xff]
    %v849 = vld [vmem:[%s3 + $0xf0] sm:$0xff]
    %v850 = vld [vmem:[%s3 + $0xf8] sm:$0xff]
    %v851 = vld [vmem:[%s3 + $0x100] sm:$0xff]
    %v852 = vld [vmem:[%s3 + $0x108] sm:$0xff]
    %v853 = vld [vmem:[%s3 + $0x110] sm:$0xff]
    %v854 = vld [vmem:[%s3 + $0x118] sm:$0xff]
    %v855 = vld [vmem:[%s3 + $0x120] sm:$0xff]
    %v856 = vld [vmem:[%s3 + $0x128] sm:$0xff]
    %v857 = vld [vmem:[%s3 + $0x130] sm:$0xff]
    %v858 = vld [vmem:[%s3 + $0x138] sm:$0xff]
    %v859 = vld [vmem:[%s3 + $0x140] sm:$0xff]
    %v860 = vld [vmem:[%s3 + $0x148] sm:$0xff]
    %v861 = vld [vmem:[%s3 + $0x150] sm:$0xff]
    %v862 = vld [vmem:[%s3 + $0x158] sm:$0xff]
    %v863 = vld [vmem:[%s3 + $0x160] sm:$0xff]
    %v864 = vld [vmem:[%s3 + $0x168] sm:$0xff]
    %v865 = vld [vmem:[%s3 + $0x170] sm:$0xff]
    %v866 = vld [vmem:[%s3 + $0x178] sm:$0xff]
    %v867 = vld [vmem:[%s3 + $0x180] sm:$0xff]
    %v868 = vld [vmem:[%s3 + $0x188] sm:$0xff]
    %v869 = vld [vmem:[%s3 + $0x190] sm:$0xff]
    %v870 = vld [vmem:[%s3 + $0x198] sm:$0xff]
    %v871 = vld [vmem:[%s3 + $0x1a0] sm:$0xff]
    %v872 = vld [vmem:[%s3 + $0x1a8] sm:$0xff]
    %v873 = vld [vmem:[%s3 + $0x1b0] sm:$0xff]
    %v874 = vld [vmem:[%s3 + $0x1b8] sm:$0xff]
    %v875 = vld [vmem:[%s3 + $0x1c0] sm:$0xff]
    %v876 = vld [vmem:[%s3 + $0x1c8] sm:$0xff]
    %v877 = vld [vmem:[%s3 + $0x1d0] sm:$0xff]
    %v878 = vld [vmem:[%s3 + $0x1d8] sm:$0xff]
    %v879 = vld [vmem:[%s3 + $0x1e0] sm:$0xff]
    %v880 = vld [vmem:[%s3 + $0x1e8] sm:$0xff]
    %v881 = vld [vmem:[%s3 + $0x1f0] sm:$0xff]
    %v882 = vld [vmem:[%s3 + $0x1f8] sm:$0xff]
    %v884 = vsel %vm509, %v818, 0
    %886 = vmatprep.subr.mxu0 %v820
    %887 = vmatpush1.msra.mxu0 %v819
    %888 = vmatprep.subr.mxu0 %v828
    %889 = vmatpush1.msra.mxu0 %v827
    %890 = vmatprep.subr.mxu0 %v836
    %891 = vmatpush1.msra.mxu0 %v835
    %892 = vmatprep.subr.mxu0 %v844
    %893 = vmatpush1.msra.mxu0 %v843
    %894 = vmatprep.subr.mxu0 %v852
    %895 = vmatpush1.msra.mxu0 %v851
    %896 = vmatprep.subr.mxu0 %v860
    %897 = vmatpush1.msra.mxu0 %v859
    %898 = vmatprep.subr.mxu0 %v868
    %899 = vmatpush1.msra.mxu0 %v867
    %900 = vmatprep.subr.mxu0 %v876
    %901 = vmatpush1.msra.mxu0 %v875
    %902 = vmatprep.subr.mxu0 0.0
    %903 = vmatpush1.msra.mxu0 0.0
    %904 = vmatprep.subr.mxu0 0.0
    %905 = vmatpush1.msra.mxu0 0.0
    %906 = vmatprep.subr.mxu0 0.0
    %907 = vmatpush1.msra.mxu0 0.0
    %908 = vmatprep.subr.mxu0 0.0
    %909 = vmatpush1.msra.mxu0 0.0
    %910 = vmatprep.subr.mxu0 0.0
    %911 = vmatpush1.msra.mxu0 0.0
    %912 = vmatprep.subr.mxu0 0.0
    %913 = vmatpush1.msra.mxu0 0.0
    %914 = vmatprep.subr.mxu0 0.0
    %915 = vmatpush1.msra.mxu0 0.0
    %916 = vmatprep.subr.mxu0 0.0
    %917 = vmatpush1.msra.mxu0 0.0
    %918 = vmatprep.subr.mxu0 0.0
    %919 = vmatpush1.msra.mxu0 0.0
    %920 = vmatprep.subr.mxu0 0.0
    %921 = vmatpush1.msra.mxu0 0.0
    %922 = vmatprep.subr.mxu0 0.0
    %923 = vmatpush1.msra.mxu0 0.0
    %924 = vmatprep.subr.mxu0 0.0
    %925 = vmatpush1.msra.mxu0 0.0
    %926 = vmatprep.subr.mxu0 0.0
    %927 = vmatpush1.msra.mxu0 0.0
    %928 = vmatprep.subr.mxu0 0.0
    %929 = vmatpush1.msra.mxu0 0.0
    %930 = vmatprep.subr.mxu0 0.0
    %931 = vmatpush1.msra.mxu0 0.0
    %932 = vmatprep.subr.mxu0 0.0
    %933 = vmatpush1.msra.mxu0 0.0
    %934 = vmatprep.subr.mxu0 0.0
    %935 = vmatpush1.msra.mxu0 0.0
    %936 = vmatprep.subr.mxu0 0.0
    %937 = vmatpush1.msra.mxu0 0.0
    %938 = vmatprep.subr.mxu0 0.0
    %939 = vmatpush1.msra.mxu0 0.0
    %940 = vmatprep.subr.mxu0 0.0
    %941 = vmatpush1.msra.mxu0 0.0
    %942 = vmatprep.subr.mxu0 0.0
    %943 = vmatpush1.msra.mxu0 0.0
    %944 = vmatprep.subr.mxu0 0.0
    %945 = vmatpush1.msra.mxu0 0.0
    %946 = vmatprep.subr.mxu0 0.0
    %947 = vmatpush1.msra.mxu0 0.0
    %948 = vmatprep.subr.mxu0 0.0
    %949 = vmatpush1.msra.mxu0 0.0
    %950 = vmatprep.mubr.f32.mxu0 0.0
    %951 = vmatmul.mubr.f32.gmra.mrb[0].mxu0 %v884
    %v952 = vpop.f32.mrb[0].mxu0
    %v953 = vadd.f32 0.0, %v952
    %v954 = vpop.f32.mrb[0].mxu0
    %v955 = vadd.f32 0.0, %v954
    %956 = vdwg.mxu0
    %957 = vmatprep.subr.mxu0 %v822
    %958 = vmatpush1.msra.mxu0 %v821
    %959 = vmatprep.subr.mxu0 %v830
    %960 = vmatpush1.msra.mxu0 %v829
    %961 = vmatprep.subr.mxu0 %v838
    %962 = vmatpush1.msra.mxu0 %v837
    %963 = vmatprep.subr.mxu0 %v846
    %964 = vmatpush1.msra.mxu0 %v845
    %965 = vmatprep.subr.mxu0 %v854
    %966 = vmatpush1.msra.mxu0 %v853
    %967 = vmatprep.subr.mxu0 %v862
    %968 = vmatpush1.msra.mxu0 %v861
    %969 = vmatprep.subr.mxu0 %v870
    %970 = vmatpush1.msra.mxu0 %v869
    %971 = vmatprep.subr.mxu0 %v878
    %972 = vmatpush1.msra.mxu0 %v877
    %973 = vmatprep.subr.mxu0 0.0
    %974 = vmatpush1.msra.mxu0 0.0
    %975 = vmatprep.subr.mxu0 0.0
    %976 = vmatpush1.msra.mxu0 0.0
    %977 = vmatprep.subr.mxu0 0.0
    %978 = vmatpush1.msra.mxu0 0.0
    %979 = vmatprep.subr.mxu0 0.0
    %980 = vmatpush1.msra.mxu0 0.0
    %981 = vmatprep.subr.mxu0 0.0
    %982 = vmatpush1.msra.mxu0 0.0
    %983 = vmatprep.subr.mxu0 0.0
    %984 = vmatpush1.msra.mxu0 0.0
    %985 = vmatprep.subr.mxu0 0.0
    %986 = vmatpush1.msra.mxu0 0.0
    %987 = vmatprep.subr.mxu0 0.0
    %988 = vmatpush1.msra.mxu0 0.0
    %989 = vmatprep.subr.mxu0 0.0
    %990 = vmatpush1.msra.mxu0 0.0
    %991 = vmatprep.subr.mxu0 0.0
    %992 = vmatpush1.msra.mxu0 0.0
    %993 = vmatprep.subr.mxu0 0.0
    %994 = vmatpush1.msra.mxu0 0.0
    %995 = vmatprep.subr.mxu0 0.0
    %996 = vmatpush1.msra.mxu0 0.0
    %997 = vmatprep.subr.mxu0 0.0
    %998 = vmatpush1.msra.mxu0 0.0
    %999 = vmatprep.subr.mxu0 0.0
    %1000 = vmatpush1.msra.mxu0 0.0
    %1001 = vmatprep.subr.mxu0 0.0
    %1002 = vmatpush1.msra.mxu0 0.0
    %1003 = vmatprep.subr.mxu0 0.0
    %1004 = vmatpush1.msra.mxu0 0.0
    %1005 = vmatprep.subr.mxu0 0.0
    %1006 = vmatpush1.msra.mxu0 0.0
    %1007 = vmatprep.subr.mxu0 0.0
    %1008 = vmatpush1.msra.mxu0 0.0
    %1009 = vmatprep.subr.mxu0 0.0
    %1010 = vmatpush1.msra.mxu0 0.0
    %1011 = vmatprep.subr.mxu0 0.0
    %1012 = vmatpush1.msra.mxu0 0.0
    %1013 = vmatprep.subr.mxu0 0.0
    %1014 = vmatpush1.msra.mxu0 0.0
    %1015 = vmatprep.subr.mxu0 0.0
    %1016 = vmatpush1.msra.mxu0 0.0
    %1017 = vmatprep.subr.mxu0 0.0
    %1018 = vmatpush1.msra.mxu0 0.0
    %1019 = vmatprep.subr.mxu0 0.0
    %1020 = vmatpush1.msra.mxu0 0.0
    %1021 = vmatprep.mubr.f32.mxu0 0.0
    %1022 = vmatmul.mubr.f32.gmra.mrb[0].mxu0 %v884
    %v1023 = vpop.f32.mrb[0].mxu0
    %v1024 = vadd.f32 0.0, %v1023
    %v1025 = vpop.f32.mrb[0].mxu0
    %v1026 = vadd.f32 0.0, %v1025
    %1027 = vdwg.mxu0
    %1028 = vmatprep.subr.mxu0 %v824
    %1029 = vmatpush1.msra.mxu0 %v823
    %1030 = vmatprep.subr.mxu0 %v832
    %1031 = vmatpush1.msra.mxu0 %v831
    %1032 = vmatprep.subr.mxu0 %v840
    %1033 = vmatpush1.msra.mxu0 %v839
    %1034 = vmatprep.subr.mxu0 %v848
    %1035 = vmatpush1.msra.mxu0 %v847
    %1036 = vmatprep.subr.mxu0 %v856
    %1037 = vmatpush1.msra.mxu0 %v855
    %1038 = vmatprep.subr.mxu0 %v864
    %1039 = vmatpush1.msra.mxu0 %v863
    %1040 = vmatprep.subr.mxu0 %v872
    %1041 = vmatpush1.msra.mxu0 %v871
    %1042 = vmatprep.subr.mxu0 %v880
    %1043 = vmatpush1.msra.mxu0 %v879
    %1044 = vmatprep.subr.mxu0 0.0
    %1045 = vmatpush1.msra.mxu0 0.0
    %1046 = vmatprep.subr.mxu0 0.0
    %1047 = vmatpush1.msra.mxu0 0.0
    %1048 = vmatprep.subr.mxu0 0.0
    %1049 = vmatpush1.msra.mxu0 0.0
    %1050 = vmatprep.subr.mxu0 0.0
    %1051 = vmatpush1.msra.mxu0 0.0
    %1052 = vmatprep.subr.mxu0 0.0
    %1053 = vmatpush1.msra.mxu0 0.0
    %1054 = vmatprep.subr.mxu0 0.0
    %1055 = vmatpush1.msra.mxu0 0.0
    %1056 = vmatprep.subr.mxu0 0.0
    %1057 = vmatpush1.msra.mxu0 0.0
    %1058 = vmatprep.subr.mxu0 0.0
    %1059 = vmatpush1.msra.mxu0 0.0
    %1060 = vmatprep.subr.mxu0 0.0
    %1061 = vmatpush1.msra.mxu0 0.0
    %1062 = vmatprep.subr.mxu0 0.0
    %1063 = vmatpush1.msra.mxu0 0.0
    %1064 = vmatprep.subr.mxu0 0.0
    %1065 = vmatpush1.msra.mxu0 0.0
    %1066 = vmatprep.subr.mxu0 0.0
    %1067 = vmatpush1.msra.mxu0 0.0
    %1068 = vmatprep.subr.mxu0 0.0
    %1069 = vmatpush1.msra.mxu0 0.0
    %1070 = vmatprep.subr.mxu0 0.0
    %1071 = vmatpush1.msra.mxu0 0.0
    %1072 = vmatprep.subr.mxu0 0.0
    %1073 = vmatpush1.msra.mxu0 0.0
    %1074 = vmatprep.subr.mxu0 0.0
    %1075 = vmatpush1.msra.mxu0 0.0
    %1076 = vmatprep.subr.mxu0 0.0
    %1077 = vmatpush1.msra.mxu0 0.0
    %1078 = vmatprep.subr.mxu0 0.0
    %1079 = vmatpush1.msra.mxu0 0.0
    %1080 = vmatprep.subr.mxu0 0.0
    %1081 = vmatpush1.msra.mxu0 0.0
    %1082 = vmatprep.subr.mxu0 0.0
    %1083 = vmatpush1.msra.mxu0 0.0
    %1084 = vmatprep.subr.mxu0 0.0
    %1085 = vmatpush1.msra.mxu0 0.0
    %1086 = vmatprep.subr.mxu0 0.0
    %1087 = vmatpush1.msra.mxu0 0.0
    %1088 = vmatprep.subr.mxu0 0.0
    %1089 = vmatpush1.msra.mxu0 0.0
    %1090 = vmatprep.subr.mxu0 0.0
    %1091 = vmatpush1.msra.mxu0 0.0
    %1092 = vmatprep.mubr.f32.mxu0 0.0
    %1093 = vmatmul.mubr.f32.gmra.mrb[0].mxu0 %v884
    %v1094 = vpop.f32.mrb[0].mxu0
    %v1095 = vadd.f32 0.0, %v1094
    %v1096 = vpop.f32.mrb[0].mxu0
    %v1097 = vadd.f32 0.0, %v1096
    %1098 = vdwg.mxu0
    %1099 = vmatprep.subr.mxu0 %v826
    %1100 = vmatpush1.msra.mxu0 %v825
    %1101 = vmatprep.subr.mxu0 %v834
    %1102 = vmatpush1.msra.mxu0 %v833
    %1103 = vmatprep.subr.mxu0 %v842
    %1104 = vmatpush1.msra.mxu0 %v841
    %1105 = vmatprep.subr.mxu0 %v850
    %1106 = vmatpush1.msra.mxu0 %v849
    %1107 = vmatprep.subr.mxu0 %v858
    %1108 = vmatpush1.msra.mxu0 %v857
    %1109 = vmatprep.subr.mxu0 %v866
    %1110 = vmatpush1.msra.mxu0 %v865
    %1111 = vmatprep.subr.mxu0 %v874
    %1112 = vmatpush1.msra.mxu0 %v873
    %1113 = vmatprep.subr.mxu0 %v882
    %1114 = vmatpush1.msra.mxu0 %v881
    %1115 = vmatprep.subr.mxu0 0.0
    %1116 = vmatpush1.msra.mxu0 0.0
    %1117 = vmatprep.subr.mxu0 0.0
    %1118 = vmatpush1.msra.mxu0 0.0
    %1119 = vmatprep.subr.mxu0 0.0
    %1120 = vmatpush1.msra.mxu0 0.0
    %1121 = vmatprep.subr.mxu0 0.0
    %1122 = vmatpush1.msra.mxu0 0.0
    %1123 = vmatprep.subr.mxu0 0.0
    %1124 = vmatpush1.msra.mxu0 0.0
    %1125 = vmatprep.subr.mxu0 0.0
    %1126 = vmatpush1.msra.mxu0 0.0
    %1127 = vmatprep.subr.mxu0 0.0
    %1128 = vmatpush1.msra.mxu0 0.0
    %1129 = vmatprep.subr.mxu0 0.0
    %1130 = vmatpush1.msra.mxu0 0.0
    %1131 = vmatprep.subr.mxu0 0.0
    %1132 = vmatpush1.msra.mxu0 0.0
    %1133 = vmatprep.subr.mxu0 0.0
    %1134 = vmatpush1.msra.mxu0 0.0
    %1135 = vmatprep.subr.mxu0 0.0
    %1136 = vmatpush1.msra.mxu0 0.0
    %1137 = vmatprep.subr.mxu0 0.0
    %1138 = vmatpush1.msra.mxu0 0.0
    %1139 = vmatprep.subr.mxu0 0.0
    %1140 = vmatpush1.msra.mxu0 0.0
    %1141 = vmatprep.subr.mxu0 0.0
    %1142 = vmatpush1.msra.mxu0 0.0
    %1143 = vmatprep.subr.mxu0 0.0
    %1144 = vmatpush1.msra.mxu0 0.0
    %1145 = vmatprep.subr.mxu0 0.0
    %1146 = vmatpush1.msra.mxu0 0.0
    %1147 = vmatprep.subr.mxu0 0.0
    %1148 = vmatpush1.msra.mxu0 0.0
    %1149 = vmatprep.subr.mxu0 0.0
    %1150 = vmatpush1.msra.mxu0 0.0
    %1151 = vmatprep.subr.mxu0 0.0
    %1152 = vmatpush1.msra.mxu0 0.0
    %1153 = vmatprep.subr.mxu0 0.0
    %1154 = vmatpush1.msra.mxu0 0.0
    %1155 = vmatprep.subr.mxu0 0.0
    %1156 = vmatpush1.msra.mxu0 0.0
    %1157 = vmatprep.subr.mxu0 0.0
    %1158 = vmatpush1.msra.mxu0 0.0
    %1159 = vmatprep.subr.mxu0 0.0
    %1160 = vmatpush1.msra.mxu0 0.0
    %1161 = vmatprep.subr.mxu0 0.0
    %1162 = vmatpush1.msra.mxu0 0.0
    %1163 = vmatprep.mubr.f32.mxu0 0.0
    %1164 = vmatmul.mubr.f32.gmra.mrb[0].mxu0 %v884
    %v1165 = vpop.f32.mrb[0].mxu0
    %v1166 = vadd.f32 0.0, %v1165
    %v1167 = vpop.f32.mrb[0].mxu0
    %v1168 = vadd.f32 0.0, %v1167
    %1169 = vdwg.mxu0
    %s1170 = sld [smem:[#allocation2 + $0x1]]
    %v1171 = vld [vmem:[%s7] sm:$0xff]
    %v1172 = vld [vmem:[%s7 + $0x8] sm:$0xff]
    %v1173 = vld [vmem:[%s7 + $0x10] sm:$0xff]
    %v1174 = vld [vmem:[%s7 + $0x18] sm:$0xff]
    %v1175 = vld [vmem:[%s7 + $0x20] sm:$0xff]
    %v1176 = vld [vmem:[%s7 + $0x28] sm:$0xff]
    %v1177 = vld [vmem:[%s7 + $0x30] sm:$0xff]
    %v1178 = vld [vmem:[%s7 + $0x38] sm:$0xff]
    %v1179 = vld [vmem:[%s7 + $0x40] sm:$0xff]
    %v1180 = vld [vmem:[%s7 + $0x48] sm:$0xff]
    %v1181 = vld [vmem:[%s7 + $0x50] sm:$0xff]
    %v1182 = vld [vmem:[%s7 + $0x58] sm:$0xff]
    %v1183 = vld [vmem:[%s7 + $0x60] sm:$0xff]
    %v1184 = vld [vmem:[%s7 + $0x68] sm:$0xff]
    %v1185 = vld [vmem:[%s7 + $0x70] sm:$0xff]
    %v1186 = vld [vmem:[%s7 + $0x78] sm:$0xff]
    %v1187 = vld [vmem:[%s7 + $0x80] sm:$0xff]
    %v1188 = vld [vmem:[%s7 + $0x88] sm:$0xff]
    %v1189 = vld [vmem:[%s7 + $0x90] sm:$0xff]
    %v1190 = vld [vmem:[%s7 + $0x98] sm:$0xff]
    %v1191 = vld [vmem:[%s7 + $0xa0] sm:$0xff]
    %v1192 = vld [vmem:[%s7 + $0xa8] sm:$0xff]
    %v1193 = vld [vmem:[%s7 + $0xb0] sm:$0xff]
    %v1194 = vld [vmem:[%s7 + $0xb8] sm:$0xff]
    %v1195 = vld [vmem:[%s7 + $0xc0] sm:$0xff]
    %v1196 = vld [vmem:[%s7 + $0xc8] sm:$0xff]
    %v1197 = vld [vmem:[%s7 + $0xd0] sm:$0xff]
    %v1198 = vld [vmem:[%s7 + $0xd8] sm:$0xff]
    %v1199 = vld [vmem:[%s7 + $0xe0] sm:$0xff]
    %v1200 = vld [vmem:[%s7 + $0xe8] sm:$0xff]
    %v1201 = vld [vmem:[%s7 + $0xf0] sm:$0xff]
    %v1202 = vld [vmem:[%s7 + $0xf8] sm:$0xff]
    %v1203 = vld [vmem:[%s7 + $0x100] sm:$0xff]
    %v1204 = vld [vmem:[%s7 + $0x108] sm:$0xff]
    %v1205 = vld [vmem:[%s7 + $0x110] sm:$0xff]
    %v1206 = vld [vmem:[%s7 + $0x118] sm:$0xff]
    %v1207 = vld [vmem:[%s7 + $0x120] sm:$0xff]
    %v1208 = vld [vmem:[%s7 + $0x128] sm:$0xff]
    %v1209 = vld [vmem:[%s7 + $0x130] sm:$0xff]
    %v1210 = vld [vmem:[%s7 + $0x138] sm:$0xff]
    %v1211 = vld [vmem:[%s7 + $0x140] sm:$0xff]
    %v1212 = vld [vmem:[%s7 + $0x148] sm:$0xff]
    %v1213 = vld [vmem:[%s7 + $0x150] sm:$0xff]
    %v1214 = vld [vmem:[%s7 + $0x158] sm:$0xff]
    %v1215 = vld [vmem:[%s7 + $0x160] sm:$0xff]
    %v1216 = vld [vmem:[%s7 + $0x168] sm:$0xff]
    %v1217 = vld [vmem:[%s7 + $0x170] sm:$0xff]
    %v1218 = vld [vmem:[%s7 + $0x178] sm:$0xff]
    %v1219 = vld [vmem:[%s7 + $0x180] sm:$0xff]
    %v1220 = vld [vmem:[%s7 + $0x188] sm:$0xff]
    %v1221 = vld [vmem:[%s7 + $0x190] sm:$0xff]
    %v1222 = vld [vmem:[%s7 + $0x198] sm:$0xff]
    %v1223 = vld [vmem:[%s7 + $0x1a0] sm:$0xff]
    %v1224 = vld [vmem:[%s7 + $0x1a8] sm:$0xff]
    %v1225 = vld [vmem:[%s7 + $0x1b0] sm:$0xff]
    %v1226 = vld [vmem:[%s7 + $0x1b8] sm:$0xff]
    %v1227 = vld [vmem:[%s7 + $0x1c0] sm:$0xff]
    %v1228 = vld [vmem:[%s7 + $0x1c8] sm:$0xff]
    %v1229 = vld [vmem:[%s7 + $0x1d0] sm:$0xff]
    %v1230 = vld [vmem:[%s7 + $0x1d8] sm:$0xff]
    %v1231 = vld [vmem:[%s7 + $0x1e0] sm:$0xff]
    %v1232 = vld [vmem:[%s7 + $0x1e8] sm:$0xff]
    %v1233 = vld [vmem:[%s7 + $0x1f0] sm:$0xff]
    %v1234 = vld [vmem:[%s7 + $0x1f8] sm:$0xff]
    %v1235 = vld [vmem:[%s7 + $0x200] sm:$0xff]
    %v1236 = vld [vmem:[%s7 + $0x208] sm:$0xff]
    %v1237 = vld [vmem:[%s7 + $0x210] sm:$0xff]
    %v1238 = vld [vmem:[%s7 + $0x218] sm:$0xff]
    %v1239 = vld [vmem:[%s7 + $0x220] sm:$0xff]
    %v1240 = vld [vmem:[%s7 + $0x228] sm:$0xff]
    %v1241 = vld [vmem:[%s7 + $0x230] sm:$0xff]
    %v1242 = vld [vmem:[%s7 + $0x238] sm:$0xff]
    %v1243 = vld [vmem:[%s7 + $0x240] sm:$0xff]
    %v1244 = vld [vmem:[%s7 + $0x248] sm:$0xff]
    %v1245 = vld [vmem:[%s7 + $0x250] sm:$0xff]
    %v1246 = vld [vmem:[%s7 + $0x258] sm:$0xff]
    %v1247 = vld [vmem:[%s7 + $0x260] sm:$0xff]
    %v1248 = vld [vmem:[%s7 + $0x268] sm:$0xff]
    %v1249 = vld [vmem:[%s7 + $0x270] sm:$0xff]
    %v1250 = vld [vmem:[%s7 + $0x278] sm:$0xff]
    %v1251 = vld [vmem:[%s7 + $0x280] sm:$0xff]
    %v1252 = vld [vmem:[%s7 + $0x288] sm:$0xff]
    %v1253 = vld [vmem:[%s7 + $0x290] sm:$0xff]
    %v1254 = vld [vmem:[%s7 + $0x298] sm:$0xff]
    %v1255 = vld [vmem:[%s7 + $0x2a0] sm:$0xff]
    %v1256 = vld [vmem:[%s7 + $0x2a8] sm:$0xff]
    %v1257 = vld [vmem:[%s7 + $0x2b0] sm:$0xff]
    %v1258 = vld [vmem:[%s7 + $0x2b8] sm:$0xff]
    %v1259 = vld [vmem:[%s7 + $0x2c0] sm:$0xff]
    %v1260 = vld [vmem:[%s7 + $0x2c8] sm:$0xff]
    %v1261 = vld [vmem:[%s7 + $0x2d0] sm:$0xff]
    %v1262 = vld [vmem:[%s7 + $0x2d8] sm:$0xff]
    %v1263 = vld [vmem:[%s7 + $0x2e0] sm:$0xff]
    %v1264 = vld [vmem:[%s7 + $0x2e8] sm:$0xff]
    %v1265 = vld [vmem:[%s7 + $0x2f0] sm:$0xff]
    %v1266 = vld [vmem:[%s7 + $0x2f8] sm:$0xff]
    %v1267 = vld [vmem:[%s7 + $0x300] sm:$0xff]
    %v1268 = vld [vmem:[%s7 + $0x308] sm:$0xff]
    %v1269 = vld [vmem:[%s7 + $0x310] sm:$0xff]
    %v1270 = vld [vmem:[%s7 + $0x318] sm:$0xff]
    %v1271 = vld [vmem:[%s7 + $0x320] sm:$0xff]
    %v1272 = vld [vmem:[%s7 + $0x328] sm:$0xff]
    %v1273 = vld [vmem:[%s7 + $0x330] sm:$0xff]
    %v1274 = vld [vmem:[%s7 + $0x338] sm:$0xff]
    %v1275 = vld [vmem:[%s7 + $0x340] sm:$0xff]
    %v1276 = vld [vmem:[%s7 + $0x348] sm:$0xff]
    %v1277 = vld [vmem:[%s7 + $0x350] sm:$0xff]
    %v1278 = vld [vmem:[%s7 + $0x358] sm:$0xff]
    %v1279 = vld [vmem:[%s7 + $0x360] sm:$0xff]
    %v1280 = vld [vmem:[%s7 + $0x368] sm:$0xff]
    %v1281 = vld [vmem:[%s7 + $0x370] sm:$0xff]
    %v1282 = vld [vmem:[%s7 + $0x378] sm:$0xff]
    %v1283 = vld [vmem:[%s7 + $0x380] sm:$0xff]
    %v1284 = vld [vmem:[%s7 + $0x388] sm:$0xff]
    %v1285 = vld [vmem:[%s7 + $0x390] sm:$0xff]
    %v1286 = vld [vmem:[%s7 + $0x398] sm:$0xff]
    %v1287 = vld [vmem:[%s7 + $0x3a0] sm:$0xff]
    %v1288 = vld [vmem:[%s7 + $0x3a8] sm:$0xff]
    %v1289 = vld [vmem:[%s7 + $0x3b0] sm:$0xff]
    %v1290 = vld [vmem:[%s7 + $0x3b8] sm:$0xff]
    %v1291 = vld [vmem:[%s7 + $0x3c0] sm:$0xff]
    %v1292 = vld [vmem:[%s7 + $0x3c8] sm:$0xff]
    %v1293 = vld [vmem:[%s7 + $0x3d0] sm:$0xff]
    %v1294 = vld [vmem:[%s7 + $0x3d8] sm:$0xff]
    %v1295 = vld [vmem:[%s7 + $0x3e0] sm:$0xff]
    %v1296 = vld [vmem:[%s7 + $0x3e8] sm:$0xff]
    %v1297 = vld [vmem:[%s7 + $0x3f0] sm:$0xff]
    %v1298 = vld [vmem:[%s7 + $0x3f8] sm:$0xff]
    %1299 = vmatprep.subr.mxu0 0.0
    %1300 = vmatpush1.msra.mxu0 %v1171
    %1301 = vmatprep.subr.mxu0 0.0
    %1302 = vmatpush1.msra.mxu0 %v1172
    %1303 = vmatprep.subr.mxu0 0.0
    %1304 = vmatpush1.msra.mxu0 %v1173
    %1305 = vmatprep.subr.mxu0 0.0
    %1306 = vmatpush1.msra.mxu0 %v1174
    %1307 = vmatprep.subr.mxu0 0.0
    %1308 = vmatpush1.msra.mxu0 %v1175
    %1309 = vmatprep.subr.mxu0 0.0
    %1310 = vmatpush1.msra.mxu0 %v1176
    %1311 = vmatprep.subr.mxu0 0.0
    %1312 = vmatpush1.msra.mxu0 %v1177
    %1313 = vmatprep.subr.mxu0 0.0
    %1314 = vmatpush1.msra.mxu0 %v1178
    %1315 = vmatprep.subr.mxu0 0.0
    %1316 = vmatpush1.msra.mxu0 %v1179
    %1317 = vmatprep.subr.mxu0 0.0
    %1318 = vmatpush1.msra.mxu0 %v1180
    %1319 = vmatprep.subr.mxu0 0.0
    %1320 = vmatpush1.msra.mxu0 %v1181
    %1321 = vmatprep.subr.mxu0 0.0
    %1322 = vmatpush1.msra.mxu0 %v1182
    %1323 = vmatprep.subr.mxu0 0.0
    %1324 = vmatpush1.msra.mxu0 %v1183
    %1325 = vmatprep.subr.mxu0 0.0
    %1326 = vmatpush1.msra.mxu0 %v1184
    %1327 = vmatprep.subr.mxu0 0.0
    %1328 = vmatpush1.msra.mxu0 %v1185
    %1329 = vmatprep.subr.mxu0 0.0
    %1330 = vmatpush1.msra.mxu0 %v1186
    %1331 = vmatprep.subr.mxu0 0.0
    %1332 = vmatpush1.msra.mxu0 %v1187
    %1333 = vmatprep.subr.mxu0 0.0
    %1334 = vmatpush1.msra.mxu0 %v1188
    %1335 = vmatprep.subr.mxu0 0.0
    %1336 = vmatpush1.msra.mxu0 %v1189
    %1337 = vmatprep.subr.mxu0 0.0
    %1338 = vmatpush1.msra.mxu0 %v1190
    %1339 = vmatprep.subr.mxu0 0.0
    %1340 = vmatpush1.msra.mxu0 %v1191
    %1341 = vmatprep.subr.mxu0 0.0
    %1342 = vmatpush1.msra.mxu0 %v1192
    %1343 = vmatprep.subr.mxu0 0.0
    %1344 = vmatpush1.msra.mxu0 %v1193
    %1345 = vmatprep.subr.mxu0 0.0
    %1346 = vmatpush1.msra.mxu0 %v1194
    %1347 = vmatprep.subr.mxu0 0.0
    %1348 = vmatpush1.msra.mxu0 %v1195
    %1349 = vmatprep.subr.mxu0 0.0
    %1350 = vmatpush1.msra.mxu0 %v1196
    %1351 = vmatprep.subr.mxu0 0.0
    %1352 = vmatpush1.msra.mxu0 %v1197
    %1353 = vmatprep.subr.mxu0 0.0
    %1354 = vmatpush1.msra.mxu0 %v1198
    %1355 = vmatprep.subr.mxu0 0.0
    %1356 = vmatpush1.msra.mxu0 %v1199
    %1357 = vmatprep.subr.mxu0 0.0
    %1358 = vmatpush1.msra.mxu0 %v1200
    %1359 = vmatprep.subr.mxu0 0.0
    %1360 = vmatpush1.msra.mxu0 %v1201
    %1361 = vmatprep.subr.mxu0 0.0
    %1362 = vmatpush1.msra.mxu0 %v1202
    %1363 = vmatprep.mubr.f32.mxu0 %v955
    %1364 = vmatmul.mubr.f32.gmra.mrb[0].mxu0 %v953
    %v1365 = vpop.f32.mrb[0].mxu0
    %v1366 = vadd.f32 0.0, %v1365
    %v1367 = vpop.f32.mrb[0].mxu0
    %1368 = vdwg.mxu0
    %1369 = vmatprep.subr.mxu0 0.0
    %1370 = vmatpush1.msra.mxu0 %v1203
    %1371 = vmatprep.subr.mxu0 0.0
    %1372 = vmatpush1.msra.mxu0 %v1204
    %1373 = vmatprep.subr.mxu0 0.0
    %1374 = vmatpush1.msra.mxu0 %v1205
    %1375 = vmatprep.subr.mxu0 0.0
    %1376 = vmatpush1.msra.mxu0 %v1206
    %1377 = vmatprep.subr.mxu0 0.0
    %1378 = vmatpush1.msra.mxu0 %v1207
    %1379 = vmatprep.subr.mxu0 0.0
    %1380 = vmatpush1.msra.mxu0 %v1208
    %1381 = vmatprep.subr.mxu0 0.0
    %1382 = vmatpush1.msra.mxu0 %v1209
    %1383 = vmatprep.subr.mxu0 0.0
    %1384 = vmatpush1.msra.mxu0 %v1210
    %1385 = vmatprep.subr.mxu0 0.0
    %1386 = vmatpush1.msra.mxu0 %v1211
    %1387 = vmatprep.subr.mxu0 0.0
    %1388 = vmatpush1.msra.mxu0 %v1212
    %1389 = vmatprep.subr.mxu0 0.0
    %1390 = vmatpush1.msra.mxu0 %v1213
    %1391 = vmatprep.subr.mxu0 0.0
    %1392 = vmatpush1.msra.mxu0 %v1214
    %1393 = vmatprep.subr.mxu0 0.0
    %1394 = vmatpush1.msra.mxu0 %v1215
    %1395 = vmatprep.subr.mxu0 0.0
    %1396 = vmatpush1.msra.mxu0 %v1216
    %1397 = vmatprep.subr.mxu0 0.0
    %1398 = vmatpush1.msra.mxu0 %v1217
    %1399 = vmatprep.subr.mxu0 0.0
    %1400 = vmatpush1.msra.mxu0 %v1218
    %1401 = vmatprep.subr.mxu0 0.0
    %1402 = vmatpush1.msra.mxu0 %v1219
    %1403 = vmatprep.subr.mxu0 0.0
    %1404 = vmatpush1.msra.mxu0 %v1220
    %1405 = vmatprep.subr.mxu0 0.0
    %1406 = vmatpush1.msra.mxu0 %v1221
    %1407 = vmatprep.subr.mxu0 0.0
    %1408 = vmatpush1.msra.mxu0 %v1222
    %1409 = vmatprep.subr.mxu0 0.0
    %1410 = vmatpush1.msra.mxu0 %v1223
    %1411 = vmatprep.subr.mxu0 0.0
    %1412 = vmatpush1.msra.mxu0 %v1224
    %1413 = vmatprep.subr.mxu0 0.0
    %1414 = vmatpush1.msra.mxu0 %v1225
    %1415 = vmatprep.subr.mxu0 0.0
    %1416 = vmatpush1.msra.mxu0 %v1226
    %1417 = vmatprep.subr.mxu0 0.0
    %1418 = vmatpush1.msra.mxu0 %v1227
    %1419 = vmatprep.subr.mxu0 0.0
    %1420 = vmatpush1.msra.mxu0 %v1228
    %1421 = vmatprep.subr.mxu0 0.0
    %1422 = vmatpush1.msra.mxu0 %v1229
    %1423 = vmatprep.subr.mxu0 0.0
    %1424 = vmatpush1.msra.mxu0 %v1230
    %1425 = vmatprep.subr.mxu0 0.0
    %1426 = vmatpush1.msra.mxu0 %v1231
    %1427 = vmatprep.subr.mxu0 0.0
    %1428 = vmatpush1.msra.mxu0 %v1232
    %1429 = vmatprep.subr.mxu0 0.0
    %1430 = vmatpush1.msra.mxu0 %v1233
    %1431 = vmatprep.subr.mxu0 0.0
    %1432 = vmatpush1.msra.mxu0 %v1234
    %1433 = vmatprep.mubr.f32.mxu0 %v1026
    %1434 = vmatmul.mubr.f32.gmra.mrb[0].mxu0 %v1024
    %v1435 = vpop.f32.mrb[0].mxu0
    %v1436 = vadd.f32 %v1366, %v1435
    %v1437 = vpop.f32.mrb[0].mxu0
    %1438 = vdwg.mxu0
    %1439 = vmatprep.subr.mxu0 0.0
    %1440 = vmatpush1.msra.mxu0 %v1235
    %1441 = vmatprep.subr.mxu0 0.0
    %1442 = vmatpush1.msra.mxu0 %v1236
    %1443 = vmatprep.subr.mxu0 0.0
    %1444 = vmatpush1.msra.mxu0 %v1237
    %1445 = vmatprep.subr.mxu0 0.0
    %1446 = vmatpush1.msra.mxu0 %v1238
    %1447 = vmatprep.subr.mxu0 0.0
    %1448 = vmatpush1.msra.mxu0 %v1239
    %1449 = vmatprep.subr.mxu0 0.0
    %1450 = vmatpush1.msra.mxu0 %v1240
    %1451 = vmatprep.subr.mxu0 0.0
    %1452 = vmatpush1.msra.mxu0 %v1241
    %1453 = vmatprep.subr.mxu0 0.0
    %1454 = vmatpush1.msra.mxu0 %v1242
    %1455 = vmatprep.subr.mxu0 0.0
    %1456 = vmatpush1.msra.mxu0 %v1243
    %1457 = vmatprep.subr.mxu0 0.0
    %1458 = vmatpush1.msra.mxu0 %v1244
    %1459 = vmatprep.subr.mxu0 0.0
    %1460 = vmatpush1.msra.mxu0 %v1245
    %1461 = vmatprep.subr.mxu0 0.0
    %1462 = vmatpush1.msra.mxu0 %v1246
    %1463 = vmatprep.subr.mxu0 0.0
    %1464 = vmatpush1.msra.mxu0 %v1247
    %1465 = vmatprep.subr.mxu0 0.0
    %1466 = vmatpush1.msra.mxu0 %v1248
    %1467 = vmatprep.subr.mxu0 0.0
    %1468 = vmatpush1.msra.mxu0 %v1249
    %1469 = vmatprep.subr.mxu0 0.0
    %1470 = vmatpush1.msra.mxu0 %v1250
    %1471 = vmatprep.subr.mxu0 0.0
    %1472 = vmatpush1.msra.mxu0 %v1251
    %1473 = vmatprep.subr.mxu0 0.0
    %1474 = vmatpush1.msra.mxu0 %v1252
    %1475 = vmatprep.subr.mxu0 0.0
    %1476 = vmatpush1.msra.mxu0 %v1253
    %1477 = vmatprep.subr.mxu0 0.0
    %1478 = vmatpush1.msra.mxu0 %v1254
    %1479 = vmatprep.subr.mxu0 0.0
    %1480 = vmatpush1.msra.mxu0 %v1255
    %1481 = vmatprep.subr.mxu0 0.0
    %1482 = vmatpush1.msra.mxu0 %v1256
    %1483 = vmatprep.subr.mxu0 0.0
    %1484 = vmatpush1.msra.mxu0 %v1257
    %1485 = vmatprep.subr.mxu0 0.0
    %1486 = vmatpush1.msra.mxu0 %v1258
    %1487 = vmatprep.subr.mxu0 0.0
    %1488 = vmatpush1.msra.mxu0 %v1259
    %1489 = vmatprep.subr.mxu0 0.0
    %1490 = vmatpush1.msra.mxu0 %v1260
    %1491 = vmatprep.subr.mxu0 0.0
    %1492 = vmatpush1.msra.mxu0 %v1261
    %1493 = vmatprep.subr.mxu0 0.0
    %1494 = vmatpush1.msra.mxu0 %v1262
    %1495 = vmatprep.subr.mxu0 0.0
    %1496 = vmatpush1.msra.mxu0 %v1263
    %1497 = vmatprep.subr.mxu0 0.0
    %1498 = vmatpush1.msra.mxu0 %v1264
    %1499 = vmatprep.subr.mxu0 0.0
    %1500 = vmatpush1.msra.mxu0 %v1265
    %1501 = vmatprep.subr.mxu0 0.0
    %1502 = vmatpush1.msra.mxu0 %v1266
    %1503 = vmatprep.mubr.f32.mxu0 %v1097
    %1504 = vmatmul.mubr.f32.gmra.mrb[0].mxu0 %v1095
    %v1505 = vpop.f32.mrb[0].mxu0
    %v1506 = vadd.f32 %v1436, %v1505
    %v1507 = vpop.f32.mrb[0].mxu0
    %1508 = vdwg.mxu0
    %1509 = vmatprep.subr.mxu0 0.0
    %1510 = vmatpush1.msra.mxu0 %v1267
    %1511 = vmatprep.subr.mxu0 0.0
    %1512 = vmatpush1.msra.mxu0 %v1268
    %1513 = vmatprep.subr.mxu0 0.0
    %1514 = vmatpush1.msra.mxu0 %v1269
    %1515 = vmatprep.subr.mxu0 0.0
    %1516 = vmatpush1.msra.mxu0 %v1270
    %1517 = vmatprep.subr.mxu0 0.0
    %1518 = vmatpush1.msra.mxu0 %v1271
    %1519 = vmatprep.subr.mxu0 0.0
    %1520 = vmatpush1.msra.mxu0 %v1272
    %1521 = vmatprep.subr.mxu0 0.0
    %1522 = vmatpush1.msra.mxu0 %v1273
    %1523 = vmatprep.subr.mxu0 0.0
    %1524 = vmatpush1.msra.mxu0 %v1274
    %1525 = vmatprep.subr.mxu0 0.0
    %1526 = vmatpush1.msra.mxu0 %v1275
    %1527 = vmatprep.subr.mxu0 0.0
    %1528 = vmatpush1.msra.mxu0 %v1276
    %1529 = vmatprep.subr.mxu0 0.0
    %1530 = vmatpush1.msra.mxu0 %v1277
    %1531 = vmatprep.subr.mxu0 0.0
    %1532 = vmatpush1.msra.mxu0 %v1278
    %1533 = vmatprep.subr.mxu0 0.0
    %1534 = vmatpush1.msra.mxu0 %v1279
    %1535 = vmatprep.subr.mxu0 0.0
    %1536 = vmatpush1.msra.mxu0 %v1280
    %1537 = vmatprep.subr.mxu0 0.0
    %1538 = vmatpush1.msra.mxu0 %v1281
    %1539 = vmatprep.subr.mxu0 0.0
    %1540 = vmatpush1.msra.mxu0 %v1282
    %1541 = vmatprep.subr.mxu0 0.0
    %1542 = vmatpush1.msra.mxu0 %v1283
    %1543 = vmatprep.subr.mxu0 0.0
    %1544 = vmatpush1.msra.mxu0 %v1284
    %1545 = vmatprep.subr.mxu0 0.0
    %1546 = vmatpush1.msra.mxu0 %v1285
    %1547 = vmatprep.subr.mxu0 0.0
    %1548 = vmatpush1.msra.mxu0 %v1286
    %1549 = vmatprep.subr.mxu0 0.0
    %1550 = vmatpush1.msra.mxu0 %v1287
    %1551 = vmatprep.subr.mxu0 0.0
    %1552 = vmatpush1.msra.mxu0 %v1288
    %1553 = vmatprep.subr.mxu0 0.0
    %1554 = vmatpush1.msra.mxu0 %v1289
    %1555 = vmatprep.subr.mxu0 0.0
    %1556 = vmatpush1.msra.mxu0 %v1290
    %1557 = vmatprep.subr.mxu0 0.0
    %1558 = vmatpush1.msra.mxu0 %v1291
    %1559 = vmatprep.subr.mxu0 0.0
    %1560 = vmatpush1.msra.mxu0 %v1292
    %1561 = vmatprep.subr.mxu0 0.0
    %1562 = vmatpush1.msra.mxu0 %v1293
    %1563 = vmatprep.subr.mxu0 0.0
    %1564 = vmatpush1.msra.mxu0 %v1294
    %1565 = vmatprep.subr.mxu0 0.0
    %1566 = vmatpush1.msra.mxu0 %v1295
    %1567 = vmatprep.subr.mxu0 0.0
    %1568 = vmatpush1.msra.mxu0 %v1296
    %1569 = vmatprep.subr.mxu0 0.0
    %1570 = vmatpush1.msra.mxu0 %v1297
    %1571 = vmatprep.subr.mxu0 0.0
    %1572 = vmatpush1.msra.mxu0 %v1298
    %1573 = vmatprep.mubr.f32.mxu0 %v1168
    %1574 = vmatmul.mubr.f32.gmra.mrb[0].mxu0 %v1166
    %v1575 = vpop.f32.mrb[0].mxu0
    %v1576 = vadd.f32 %v1506, %v1575
    %v1577 = vpop.f32.mrb[0].mxu0
    %1578 = vdwg.mxu0
    %v1579 = vmul.f32 %v1576, 0.00390625
    %v1580 = vld [vmem:[%s8] sm:$0xff]
    %v1581 = vld [vmem:[%s8 + $0x8] sm:$0xff]
    %v1582 = vld [vmem:[%s8 + $0x10] sm:$0xff]
    %v1583 = vld [vmem:[%s8 + $0x18] sm:$0xff]
    %v1588 = vcombine.high %v1580, %v1580
    %v1589 = vcombine.high %v1581, %v1581
    %v1590 = vcombine.high %v1582, %v1582
    %v1591 = vcombine.high %v1583, %v1583
    %v1593 = vsel %vm585, %v1579, 0
    %v1595 = vsel %vm589, %v1580, 0
    %v1597 = vsel %vm589, %v1588, 0
    %v1599 = vsel %vm589, %v1581, 0
    %v1601 = vsel %vm589, %v1589, 0
    %v1603 = vsel %vm589, %v1582, 0
    %v1605 = vsel %vm589, %v1590, 0
    %v1607 = vsel %vm589, %v1583, 0
    %v1609 = vsel %vm589, %v1591, 0
    %1611 = vmatprep.subr.mxu0 %v1597
    %1612 = vmatpush1.msra.mxu0 %v1595
    %1613 = vmatprep.subr.mxu0 0.0
    %1614 = vmatpush1.msra.mxu0 0.0
    %1615 = vmatprep.subr.mxu0 0.0
    %1616 = vmatpush1.msra.mxu0 0.0
    %1617 = vmatprep.subr.mxu0 0.0
    %1618 = vmatpush1.msra.mxu0 0.0
    %1619 = vmatprep.subr.mxu0 0.0
    %1620 = vmatpush1.msra.mxu0 0.0
    %1621 = vmatprep.subr.mxu0 0.0
    %1622 = vmatpush1.msra.mxu0 0.0
    %1623 = vmatprep.subr.mxu0 0.0
    %1624 = vmatpush1.msra.mxu0 0.0
    %1625 = vmatprep.subr.mxu0 0.0
    %1626 = vmatpush1.msra.mxu0 0.0
    %1627 = vmatprep.subr.mxu0 0.0
    %1628 = vmatpush1.msra.mxu0 0.0
    %1629 = vmatprep.subr.mxu0 0.0
    %1630 = vmatpush1.msra.mxu0 0.0
    %1631 = vmatprep.subr.mxu0 0.0
    %1632 = vmatpush1.msra.mxu0 0.0
    %1633 = vmatprep.subr.mxu0 0.0
    %1634 = vmatpush1.msra.mxu0 0.0
    %1635 = vmatprep.subr.mxu0 0.0
    %1636 = vmatpush1.msra.mxu0 0.0
    %1637 = vmatprep.subr.mxu0 0.0
    %1638 = vmatpush1.msra.mxu0 0.0
    %1639 = vmatprep.subr.mxu0 0.0
    %1640 = vmatpush1.msra.mxu0 0.0
    %1641 = vmatprep.subr.mxu0 0.0
    %1642 = vmatpush1.msra.mxu0 0.0
    %1643 = vmatprep.subr.mxu0 0.0
    %1644 = vmatpush1.msra.mxu0 0.0
    %1645 = vmatprep.subr.mxu0 0.0
    %1646 = vmatpush1.msra.mxu0 0.0
    %1647 = vmatprep.subr.mxu0 0.0
    %1648 = vmatpush1.msra.mxu0 0.0
    %1649 = vmatprep.subr.mxu0 0.0
    %1650 = vmatpush1.msra.mxu0 0.0
    %1651 = vmatprep.subr.mxu0 0.0
    %1652 = vmatpush1.msra.mxu0 0.0
    %1653 = vmatprep.subr.mxu0 0.0
    %1654 = vmatpush1.msra.mxu0 0.0
    %1655 = vmatprep.subr.mxu0 0.0
    %1656 = vmatpush1.msra.mxu0 0.0
    %1657 = vmatprep.subr.mxu0 0.0
    %1658 = vmatpush1.msra.mxu0 0.0
    %1659 = vmatprep.subr.mxu0 0.0
    %1660 = vmatpush1.msra.mxu0 0.0
    %1661 = vmatprep.subr.mxu0 0.0
    %1662 = vmatpush1.msra.mxu0 0.0
    %1663 = vmatprep.subr.mxu0 0.0
    %1664 = vmatpush1.msra.mxu0 0.0
    %1665 = vmatprep.subr.mxu0 0.0
    %1666 = vmatpush1.msra.mxu0 0.0
    %1667 = vmatprep.subr.mxu0 0.0
    %1668 = vmatpush1.msra.mxu0 0.0
    %1669 = vmatprep.subr.mxu0 0.0
    %1670 = vmatpush1.msra.mxu0 0.0
    %1671 = vmatprep.subr.mxu0 0.0
    %1672 = vmatpush1.msra.mxu0 0.0
    %1673 = vmatprep.subr.mxu0 0.0
    %1674 = vmatpush1.msra.mxu0 0.0
    %1675 = vmatprep.mubr.f32.mxu0 0.0
    %1676 = vmatmul.mubr.f32.gmra.mrb[0].mxu0 %v1593
    %v1677 = vpop.f32.mrb[0].mxu0
    %v1678 = vadd.f32 0.0, %v1677
    %v1679 = vpop.f32.mrb[0].mxu0
    %v1680 = vadd.f32 0.0, %v1679
    %1681 = vdwg.mxu0
    %1682 = vmatprep.subr.mxu0 %v1601
    %1683 = vmatpush1.msra.mxu0 %v1599
    %1684 = vmatprep.subr.mxu0 0.0
    %1685 = vmatpush1.msra.mxu0 0.0
    %1686 = vmatprep.subr.mxu0 0.0
    %1687 = vmatpush1.msra.mxu0 0.0
    %1688 = vmatprep.subr.mxu0 0.0
    %1689 = vmatpush1.msra.mxu0 0.0
    %1690 = vmatprep.subr.mxu0 0.0
    %1691 = vmatpush1.msra.mxu0 0.0
    %1692 = vmatprep.subr.mxu0 0.0
    %1693 = vmatpush1.msra.mxu0 0.0
    %1694 = vmatprep.subr.mxu0 0.0
    %1695 = vmatpush1.msra.mxu0 0.0
    %1696 = vmatprep.subr.mxu0 0.0
    %1697 = vmatpush1.msra.mxu0 0.0
    %1698 = vmatprep.subr.mxu0 0.0
    %1699 = vmatpush1.msra.mxu0 0.0
    %1700 = vmatprep.subr.mxu0 0.0
    %1701 = vmatpush1.msra.mxu0 0.0
    %1702 = vmatprep.subr.mxu0 0.0
    %1703 = vmatpush1.msra.mxu0 0.0
    %1704 = vmatprep.subr.mxu0 0.0
    %1705 = vmatpush1.msra.mxu0 0.0
    %1706 = vmatprep.subr.mxu0 0.0
    %1707 = vmatpush1.msra.mxu0 0.0
    %1708 = vmatprep.subr.mxu0 0.0
    %1709 = vmatpush1.msra.mxu0 0.0
    %1710 = vmatprep.subr.mxu0 0.0
    %1711 = vmatpush1.msra.mxu0 0.0
    %1712 = vmatprep.subr.mxu0 0.0
    %1713 = vmatpush1.msra.mxu0 0.0
    %1714 = vmatprep.subr.mxu0 0.0
    %1715 = vmatpush1.msra.mxu0 0.0
    %1716 = vmatprep.subr.mxu0 0.0
    %1717 = vmatpush1.msra.mxu0 0.0
    %1718 = vmatprep.subr.mxu0 0.0
    %1719 = vmatpush1.msra.mxu0 0.0
    %1720 = vmatprep.subr.mxu0 0.0
    %1721 = vmatpush1.msra.mxu0 0.0
    %1722 = vmatprep.subr.mxu0 0.0
    %1723 = vmatpush1.msra.mxu0 0.0
    %1724 = vmatprep.subr.mxu0 0.0
    %1725 = vmatpush1.msra.mxu0 0.0
    %1726 = vmatprep.subr.mxu0 0.0
    %1727 = vmatpush1.msra.mxu0 0.0
    %1728 = vmatprep.subr.mxu0 0.0
    %1729 = vmatpush1.msra.mxu0 0.0
    %1730 = vmatprep.subr.mxu0 0.0
    %1731 = vmatpush1.msra.mxu0 0.0
    %1732 = vmatprep.subr.mxu0 0.0
    %1733 = vmatpush1.msra.mxu0 0.0
    %1734 = vmatprep.subr.mxu0 0.0
    %1735 = vmatpush1.msra.mxu0 0.0
    %1736 = vmatprep.subr.mxu0 0.0
    %1737 = vmatpush1.msra.mxu0 0.0
    %1738 = vmatprep.subr.mxu0 0.0
    %1739 = vmatpush1.msra.mxu0 0.0
    %1740 = vmatprep.subr.mxu0 0.0
    %1741 = vmatpush1.msra.mxu0 0.0
    %1742 = vmatprep.subr.mxu0 0.0
    %1743 = vmatpush1.msra.mxu0 0.0
    %1744 = vmatprep.subr.mxu0 0.0
    %1745 = vmatpush1.msra.mxu0 0.0
    %1746 = vmatprep.mubr.f32.mxu0 0.0
    %1747 = vmatmul.mubr.f32.gmra.mrb[0].mxu0 %v1593
    %v1748 = vpop.f32.mrb[0].mxu0
    %v1749 = vadd.f32 0.0, %v1748
    %v1750 = vpop.f32.mrb[0].mxu0
    %v1751 = vadd.f32 0.0, %v1750
    %1752 = vdwg.mxu0
    %1753 = vmatprep.subr.mxu0 %v1605
    %1754 = vmatpush1.msra.mxu0 %v1603
    %1755 = vmatprep.subr.mxu0 0.0
    %1756 = vmatpush1.msra.mxu0 0.0
    %1757 = vmatprep.subr.mxu0 0.0
    %1758 = vmatpush1.msra.mxu0 0.0
    %1759 = vmatprep.subr.mxu0 0.0
    %1760 = vmatpush1.msra.mxu0 0.0
    %1761 = vmatprep.subr.mxu0 0.0
    %1762 = vmatpush1.msra.mxu0 0.0
    %1763 = vmatprep.subr.mxu0 0.0
    %1764 = vmatpush1.msra.mxu0 0.0
    %1765 = vmatprep.subr.mxu0 0.0
    %1766 = vmatpush1.msra.mxu0 0.0
    %1767 = vmatprep.subr.mxu0 0.0
    %1768 = vmatpush1.msra.mxu0 0.0
    %1769 = vmatprep.subr.mxu0 0.0
    %1770 = vmatpush1.msra.mxu0 0.0
    %1771 = vmatprep.subr.mxu0 0.0
    %1772 = vmatpush1.msra.mxu0 0.0
    %1773 = vmatprep.subr.mxu0 0.0
    %1774 = vmatpush1.msra.mxu0 0.0
    %1775 = vmatprep.subr.mxu0 0.0
    %1776 = vmatpush1.msra.mxu0 0.0
    %1777 = vmatprep.subr.mxu0 0.0
    %1778 = vmatpush1.msra.mxu0 0.0
    %1779 = vmatprep.subr.mxu0 0.0
    %1780 = vmatpush1.msra.mxu0 0.0
    %1781 = vmatprep.subr.mxu0 0.0
    %1782 = vmatpush1.msra.mxu0 0.0
    %1783 = vmatprep.subr.mxu0 0.0
    %1784 = vmatpush1.msra.mxu0 0.0
    %1785 = vmatprep.subr.mxu0 0.0
    %1786 = vmatpush1.msra.mxu0 0.0
    %1787 = vmatprep.subr.mxu0 0.0
    %1788 = vmatpush1.msra.mxu0 0.0
    %1789 = vmatprep.subr.mxu0 0.0
    %1790 = vmatpush1.msra.mxu0 0.0
    %1791 = vmatprep.subr.mxu0 0.0
    %1792 = vmatpush1.msra.mxu0 0.0
    %1793 = vmatprep.subr.mxu0 0.0
    %1794 = vmatpush1.msra.mxu0 0.0
    %1795 = vmatprep.subr.mxu0 0.0
    %1796 = vmatpush1.msra.mxu0 0.0
    %1797 = vmatprep.subr.mxu0 0.0
    %1798 = vmatpush1.msra.mxu0 0.0
    %1799 = vmatprep.subr.mxu0 0.0
    %1800 = vmatpush1.msra.mxu0 0.0
    %1801 = vmatprep.subr.mxu0 0.0
    %1802 = vmatpush1.msra.mxu0 0.0
    %1803 = vmatprep.subr.mxu0 0.0
    %1804 = vmatpush1.msra.mxu0 0.0
    %1805 = vmatprep.subr.mxu0 0.0
    %1806 = vmatpush1.msra.mxu0 0.0
    %1807 = vmatprep.subr.mxu0 0.0
    %1808 = vmatpush1.msra.mxu0 0.0
    %1809 = vmatprep.subr.mxu0 0.0
    %1810 = vmatpush1.msra.mxu0 0.0
    %1811 = vmatprep.subr.mxu0 0.0
    %1812 = vmatpush1.msra.mxu0 0.0
    %1813 = vmatprep.subr.mxu0 0.0
    %1814 = vmatpush1.msra.mxu0 0.0
    %1815 = vmatprep.subr.mxu0 0.0
    %1816 = vmatpush1.msra.mxu0 0.0
    %1817 = vmatprep.mubr.f32.mxu0 0.0
    %1818 = vmatmul.mubr.f32.gmra.mrb[0].mxu0 %v1593
    %v1819 = vpop.f32.mrb[0].mxu0
    %v1820 = vadd.f32 0.0, %v1819
    %v1821 = vpop.f32.mrb[0].mxu0
    %v1822 = vadd.f32 0.0, %v1821
    %1823 = vdwg.mxu0
    %1824 = vmatprep.subr.mxu0 %v1609
    %1825 = vmatpush1.msra.mxu0 %v1607
    %1826 = vmatprep.subr.mxu0 0.0
    %1827 = vmatpush1.msra.mxu0 0.0
    %1828 = vmatprep.subr.mxu0 0.0
    %1829 = vmatpush1.msra.mxu0 0.0
    %1830 = vmatprep.subr.mxu0 0.0
    %1831 = vmatpush1.msra.mxu0 0.0
    %1832 = vmatprep.subr.mxu0 0.0
    %1833 = vmatpush1.msra.mxu0 0.0
    %1834 = vmatprep.subr.mxu0 0.0
    %1835 = vmatpush1.msra.mxu0 0.0
    %1836 = vmatprep.subr.mxu0 0.0
    %1837 = vmatpush1.msra.mxu0 0.0
    %1838 = vmatprep.subr.mxu0 0.0
    %1839 = vmatpush1.msra.mxu0 0.0
    %1840 = vmatprep.subr.mxu0 0.0
    %1841 = vmatpush1.msra.mxu0 0.0
    %1842 = vmatprep.subr.mxu0 0.0
    %1843 = vmatpush1.msra.mxu0 0.0
    %1844 = vmatprep.subr.mxu0 0.0
    %1845 = vmatpush1.msra.mxu0 0.0
    %1846 = vmatprep.subr.mxu0 0.0
    %1847 = vmatpush1.msra.mxu0 0.0
    %1848 = vmatprep.subr.mxu0 0.0
    %1849 = vmatpush1.msra.mxu0 0.0
    %1850 = vmatprep.subr.mxu0 0.0
    %1851 = vmatpush1.msra.mxu0 0.0
    %1852 = vmatprep.subr.mxu0 0.0
    %1853 = vmatpush1.msra.mxu0 0.0
    %1854 = vmatprep.subr.mxu0 0.0
    %1855 = vmatpush1.msra.mxu0 0.0
    %1856 = vmatprep.subr.mxu0 0.0
    %1857 = vmatpush1.msra.mxu0 0.0
    %1858 = vmatprep.subr.mxu0 0.0
    %1859 = vmatpush1.msra.mxu0 0.0
    %1860 = vmatprep.subr.mxu0 0.0
    %1861 = vmatpush1.msra.mxu0 0.0
    %1862 = vmatprep.subr.mxu0 0.0
    %1863 = vmatpush1.msra.mxu0 0.0
    %1864 = vmatprep.subr.mxu0 0.0
    %1865 = vmatpush1.msra.mxu0 0.0
    %1866 = vmatprep.subr.mxu0 0.0
    %1867 = vmatpush1.msra.mxu0 0.0
    %1868 = vmatprep.subr.mxu0 0.0
    %1869 = vmatpush1.msra.mxu0 0.0
    %1870 = vmatprep.subr.mxu0 0.0
    %1871 = vmatpush1.msra.mxu0 0.0
    %1872 = vmatprep.subr.mxu0 0.0
    %1873 = vmatpush1.msra.mxu0 0.0
    %1874 = vmatprep.subr.mxu0 0.0
    %1875 = vmatpush1.msra.mxu0 0.0
    %1876 = vmatprep.subr.mxu0 0.0
    %1877 = vmatpush1.msra.mxu0 0.0
    %1878 = vmatprep.subr.mxu0 0.0
    %1879 = vmatpush1.msra.mxu0 0.0
    %1880 = vmatprep.subr.mxu0 0.0
    %1881 = vmatpush1.msra.mxu0 0.0
    %1882 = vmatprep.subr.mxu0 0.0
    %1883 = vmatpush1.msra.mxu0 0.0
    %1884 = vmatprep.subr.mxu0 0.0
    %1885 = vmatpush1.msra.mxu0 0.0
    %1886 = vmatprep.subr.mxu0 0.0
    %1887 = vmatpush1.msra.mxu0 0.0
    %1888 = vmatprep.mubr.f32.mxu0 0.0
    %1889 = vmatmul.mubr.f32.gmra.mrb[0].mxu0 %v1593
    %v1890 = vpop.f32.mrb[0].mxu0
    %v1891 = vadd.f32 0.0, %v1890
    %v1892 = vpop.f32.mrb[0].mxu0
    %v1893 = vadd.f32 0.0, %v1892
    %1894 = vdwg.mxu0
    %v1895 = vsub.f32 %v953, %v1678
    %v1896 = vsub.f32 %v955, %v1680
    %v1897 = vsub.f32 %v1024, %v1749
    %v1898 = vsub.f32 %v1026, %v1751
    %v1899 = vsub.f32 %v1095, %v1820
    %v1900 = vsub.f32 %v1097, %v1822
    %v1901 = vsub.f32 %v1166, %v1891
    %v1902 = vsub.f32 %v1168, %v1893
    %v1903 = vmul.f32 %v1895, %v1895
    %v1904 = vmul.f32 %v1896, %v1896
    %v1905 = vmul.f32 %v1897, %v1897
    %v1906 = vmul.f32 %v1898, %v1898
    %v1907 = vmul.f32 %v1899, %v1899
    %v1908 = vmul.f32 %v1900, %v1900
    %v1909 = vmul.f32 %v1901, %v1901
    %v1910 = vmul.f32 %v1902, %v1902
    %1911 = vmatprep.subr.mxu0 0.0
    %1912 = vmatpush1.msra.mxu0 %v1171
    %1913 = vmatprep.subr.mxu0 0.0
    %1914 = vmatpush1.msra.mxu0 %v1172
    %1915 = vmatprep.subr.mxu0 0.0
    %1916 = vmatpush1.msra.mxu0 %v1173
    %1917 = vmatprep.subr.mxu0 0.0
    %1918 = vmatpush1.msra.mxu0 %v1174
    %1919 = vmatprep.subr.mxu0 0.0
    %1920 = vmatpush1.msra.mxu0 %v1175
    %1921 = vmatprep.subr.mxu0 0.0
    %1922 = vmatpush1.msra.mxu0 %v1176
    %1923 = vmatprep.subr.mxu0 0.0
    %1924 = vmatpush1.msra.mxu0 %v1177
    %1925 = vmatprep.subr.mxu0 0.0
    %1926 = vmatpush1.msra.mxu0 %v1178
    %1927 = vmatprep.subr.mxu0 0.0
    %1928 = vmatpush1.msra.mxu0 %v1179
    %1929 = vmatprep.subr.mxu0 0.0
    %1930 = vmatpush1.msra.mxu0 %v1180
    %1931 = vmatprep.subr.mxu0 0.0
    %1932 = vmatpush1.msra.mxu0 %v1181
    %1933 = vmatprep.subr.mxu0 0.0
    %1934 = vmatpush1.msra.mxu0 %v1182
    %1935 = vmatprep.subr.mxu0 0.0
    %1936 = vmatpush1.msra.mxu0 %v1183
    %1937 = vmatprep.subr.mxu0 0.0
    %1938 = vmatpush1.msra.mxu0 %v1184
    %1939 = vmatprep.subr.mxu0 0.0
    %1940 = vmatpush1.msra.mxu0 %v1185
    %1941 = vmatprep.subr.mxu0 0.0
    %1942 = vmatpush1.msra.mxu0 %v1186
    %1943 = vmatprep.subr.mxu0 0.0
    %1944 = vmatpush1.msra.mxu0 %v1187
    %1945 = vmatprep.subr.mxu0 0.0
    %1946 = vmatpush1.msra.mxu0 %v1188
    %1947 = vmatprep.subr.mxu0 0.0
    %1948 = vmatpush1.msra.mxu0 %v1189
    %1949 = vmatprep.subr.mxu0 0.0
    %1950 = vmatpush1.msra.mxu0 %v1190
    %1951 = vmatprep.subr.mxu0 0.0
    %1952 = vmatpush1.msra.mxu0 %v1191
    %1953 = vmatprep.subr.mxu0 0.0
    %1954 = vmatpush1.msra.mxu0 %v1192
    %1955 = vmatprep.subr.mxu0 0.0
    %1956 = vmatpush1.msra.mxu0 %v1193
    %1957 = vmatprep.subr.mxu0 0.0
    %1958 = vmatpush1.msra.mxu0 %v1194
    %1959 = vmatprep.subr.mxu0 0.0
    %1960 = vmatpush1.msra.mxu0 %v1195
    %1961 = vmatprep.subr.mxu0 0.0
    %1962 = vmatpush1.msra.mxu0 %v1196
    %1963 = vmatprep.subr.mxu0 0.0
    %1964 = vmatpush1.msra.mxu0 %v1197
    %1965 = vmatprep.subr.mxu0 0.0
    %1966 = vmatpush1.msra.mxu0 %v1198
    %1967 = vmatprep.subr.mxu0 0.0
    %1968 = vmatpush1.msra.mxu0 %v1199
    %1969 = vmatprep.subr.mxu0 0.0
    %1970 = vmatpush1.msra.mxu0 %v1200
    %1971 = vmatprep.subr.mxu0 0.0
    %1972 = vmatpush1.msra.mxu0 %v1201
    %1973 = vmatprep.subr.mxu0 0.0
    %1974 = vmatpush1.msra.mxu0 %v1202
    %1975 = vmatprep.mubr.f32.mxu0 %v1904
    %1976 = vmatmul.mubr.f32.gmra.mrb[0].mxu0 %v1903
    %v1977 = vpop.f32.mrb[0].mxu0
    %v1978 = vadd.f32 0.0, %v1977
    %v1979 = vpop.f32.mrb[0].mxu0
    %1980 = vdwg.mxu0
    %1981 = vmatprep.subr.mxu0 0.0
    %1982 = vmatpush1.msra.mxu0 %v1203
    %1983 = vmatprep.subr.mxu0 0.0
    %1984 = vmatpush1.msra.mxu0 %v1204
    %1985 = vmatprep.subr.mxu0 0.0
    %1986 = vmatpush1.msra.mxu0 %v1205
    %1987 = vmatprep.subr.mxu0 0.0
    %1988 = vmatpush1.msra.mxu0 %v1206
    %1989 = vmatprep.subr.mxu0 0.0
    %1990 = vmatpush1.msra.mxu0 %v1207
    %1991 = vmatprep.subr.mxu0 0.0
    %1992 = vmatpush1.msra.mxu0 %v1208
    %1993 = vmatprep.subr.mxu0 0.0
    %1994 = vmatpush1.msra.mxu0 %v1209
    %1995 = vmatprep.subr.mxu0 0.0
    %1996 = vmatpush1.msra.mxu0 %v1210
    %1997 = vmatprep.subr.mxu0 0.0
    %1998 = vmatpush1.msra.mxu0 %v1211
    %1999 = vmatprep.subr.mxu0 0.0
    %2000 = vmatpush1.msra.mxu0 %v1212
    %2001 = vmatprep.subr.mxu0 0.0
    %2002 = vmatpush1.msra.mxu0 %v1213
    %2003 = vmatprep.subr.mxu0 0.0
    %2004 = vmatpush1.msra.mxu0 %v1214
    %2005 = vmatprep.subr.mxu0 0.0
    %2006 = vmatpush1.msra.mxu0 %v1215
    %2007 = vmatprep.subr.mxu0 0.0
    %2008 = vmatpush1.msra.mxu0 %v1216
    %2009 = vmatprep.subr.mxu0 0.0
    %2010 = vmatpush1.msra.mxu0 %v1217
    %2011 = vmatprep.subr.mxu0 0.0
    %2012 = vmatpush1.msra.mxu0 %v1218
    %2013 = vmatprep.subr.mxu0 0.0
    %2014 = vmatpush1.msra.mxu0 %v1219
    %2015 = vmatprep.subr.mxu0 0.0
    %2016 = vmatpush1.msra.mxu0 %v1220
    %2017 = vmatprep.subr.mxu0 0.0
    %2018 = vmatpush1.msra.mxu0 %v1221
    %2019 = vmatprep.subr.mxu0 0.0
    %2020 = vmatpush1.msra.mxu0 %v1222
    %2021 = vmatprep.subr.mxu0 0.0
    %2022 = vmatpush1.msra.mxu0 %v1223
    %2023 = vmatprep.subr.mxu0 0.0
    %2024 = vmatpush1.msra.mxu0 %v1224
    %2025 = vmatprep.subr.mxu0 0.0
    %2026 = vmatpush1.msra.mxu0 %v1225
    %2027 = vmatprep.subr.mxu0 0.0
    %2028 = vmatpush1.msra.mxu0 %v1226
    %2029 = vmatprep.subr.mxu0 0.0
    %2030 = vmatpush1.msra.mxu0 %v1227
    %2031 = vmatprep.subr.mxu0 0.0
    %2032 = vmatpush1.msra.mxu0 %v1228
    %2033 = vmatprep.subr.mxu0 0.0
    %2034 = vmatpush1.msra.mxu0 %v1229
    %2035 = vmatprep.subr.mxu0 0.0
    %2036 = vmatpush1.msra.mxu0 %v1230
    %2037 = vmatprep.subr.mxu0 0.0
    %2038 = vmatpush1.msra.mxu0 %v1231
    %2039 = vmatprep.subr.mxu0 0.0
    %2040 = vmatpush1.msra.mxu0 %v1232
    %2041 = vmatprep.subr.mxu0 0.0
    %2042 = vmatpush1.msra.mxu0 %v1233
    %2043 = vmatprep.subr.mxu0 0.0
    %2044 = vmatpush1.msra.mxu0 %v1234
    %2045 = vmatprep.mubr.f32.mxu0 %v1906
    %2046 = vmatmul.mubr.f32.gmra.mrb[0].mxu0 %v1905
    %v2047 = vpop.f32.mrb[0].mxu0
    %v2048 = vadd.f32 %v1978, %v2047
    %v2049 = vpop.f32.mrb[0].mxu0
    %2050 = vdwg.mxu0
    %2051 = vmatprep.subr.mxu0 0.0
    %2052 = vmatpush1.msra.mxu0 %v1235
    %2053 = vmatprep.subr.mxu0 0.0
    %2054 = vmatpush1.msra.mxu0 %v1236
    %2055 = vmatprep.subr.mxu0 0.0
    %2056 = vmatpush1.msra.mxu0 %v1237
    %2057 = vmatprep.subr.mxu0 0.0
    %2058 = vmatpush1.msra.mxu0 %v1238
    %2059 = vmatprep.subr.mxu0 0.0
    %2060 = vmatpush1.msra.mxu0 %v1239
    %2061 = vmatprep.subr.mxu0 0.0
    %2062 = vmatpush1.msra.mxu0 %v1240
    %2063 = vmatprep.subr.mxu0 0.0
    %2064 = vmatpush1.msra.mxu0 %v1241
    %2065 = vmatprep.subr.mxu0 0.0
    %2066 = vmatpush1.msra.mxu0 %v1242
    %2067 = vmatprep.subr.mxu0 0.0
    %2068 = vmatpush1.msra.mxu0 %v1243
    %2069 = vmatprep.subr.mxu0 0.0
    %2070 = vmatpush1.msra.mxu0 %v1244
    %2071 = vmatprep.subr.mxu0 0.0
    %2072 = vmatpush1.msra.mxu0 %v1245
    %2073 = vmatprep.subr.mxu0 0.0
    %2074 = vmatpush1.msra.mxu0 %v1246
    %2075 = vmatprep.subr.mxu0 0.0
    %2076 = vmatpush1.msra.mxu0 %v1247
    %2077 = vmatprep.subr.mxu0 0.0
    %2078 = vmatpush1.msra.mxu0 %v1248
    %2079 = vmatprep.subr.mxu0 0.0
    %2080 = vmatpush1.msra.mxu0 %v1249
    %2081 = vmatprep.subr.mxu0 0.0
    %2082 = vmatpush1.msra.mxu0 %v1250
    %2083 = vmatprep.subr.mxu0 0.0
    %2084 = vmatpush1.msra.mxu0 %v1251
    %2085 = vmatprep.subr.mxu0 0.0
    %2086 = vmatpush1.msra.mxu0 %v1252
    %2087 = vmatprep.subr.mxu0 0.0
    %2088 = vmatpush1.msra.mxu0 %v1253
    %2089 = vmatprep.subr.mxu0 0.0
    %2090 = vmatpush1.msra.mxu0 %v1254
    %2091 = vmatprep.subr.mxu0 0.0
    %2092 = vmatpush1.msra.mxu0 %v1255
    %2093 = vmatprep.subr.mxu0 0.0
    %2094 = vmatpush1.msra.mxu0 %v1256
    %2095 = vmatprep.subr.mxu0 0.0
    %2096 = vmatpush1.msra.mxu0 %v1257
    %2097 = vmatprep.subr.mxu0 0.0
    %2098 = vmatpush1.msra.mxu0 %v1258
    %2099 = vmatprep.subr.mxu0 0.0
    %2100 = vmatpush1.msra.mxu0 %v1259
    %2101 = vmatprep.subr.mxu0 0.0
    %2102 = vmatpush1.msra.mxu0 %v1260
    %2103 = vmatprep.subr.mxu0 0.0
    %2104 = vmatpush1.msra.mxu0 %v1261
    %2105 = vmatprep.subr.mxu0 0.0
    %2106 = vmatpush1.msra.mxu0 %v1262
    %2107 = vmatprep.subr.mxu0 0.0
    %2108 = vmatpush1.msra.mxu0 %v1263
    %2109 = vmatprep.subr.mxu0 0.0
    %2110 = vmatpush1.msra.mxu0 %v1264
    %2111 = vmatprep.subr.mxu0 0.0
    %2112 = vmatpush1.msra.mxu0 %v1265
    %2113 = vmatprep.subr.mxu0 0.0
    %2114 = vmatpush1.msra.mxu0 %v1266
    %2115 = vmatprep.mubr.f32.mxu0 %v1908
    %2116 = vmatmul.mubr.f32.gmra.mrb[0].mxu0 %v1907
    %v2117 = vpop.f32.mrb[0].mxu0
    %v2118 = vadd.f32 %v2048, %v2117
    %v2119 = vpop.f32.mrb[0].mxu0
    %2120 = vdwg.mxu0
    %2121 = vmatprep.subr.mxu0 0.0
    %2122 = vmatpush1.msra.mxu0 %v1267
    %2123 = vmatprep.subr.mxu0 0.0
    %2124 = vmatpush1.msra.mxu0 %v1268
    %2125 = vmatprep.subr.mxu0 0.0
    %2126 = vmatpush1.msra.mxu0 %v1269
    %2127 = vmatprep.subr.mxu0 0.0
    %2128 = vmatpush1.msra.mxu0 %v1270
    %2129 = vmatprep.subr.mxu0 0.0
    %2130 = vmatpush1.msra.mxu0 %v1271
    %2131 = vmatprep.subr.mxu0 0.0
    %2132 = vmatpush1.msra.mxu0 %v1272
    %2133 = vmatprep.subr.mxu0 0.0
    %2134 = vmatpush1.msra.mxu0 %v1273
    %2135 = vmatprep.subr.mxu0 0.0
    %2136 = vmatpush1.msra.mxu0 %v1274
    %2137 = vmatprep.subr.mxu0 0.0
    %2138 = vmatpush1.msra.mxu0 %v1275
    %2139 = vmatprep.subr.mxu0 0.0
    %2140 = vmatpush1.msra.mxu0 %v1276
    %2141 = vmatprep.subr.mxu0 0.0
    %2142 = vmatpush1.msra.mxu0 %v1277
    %2143 = vmatprep.subr.mxu0 0.0
    %2144 = vmatpush1.msra.mxu0 %v1278
    %2145 = vmatprep.subr.mxu0 0.0
    %2146 = vmatpush1.msra.mxu0 %v1279
    %2147 = vmatprep.subr.mxu0 0.0
    %2148 = vmatpush1.msra.mxu0 %v1280
    %2149 = vmatprep.subr.mxu0 0.0
    %2150 = vmatpush1.msra.mxu0 %v1281
    %2151 = vmatprep.subr.mxu0 0.0
    %2152 = vmatpush1.msra.mxu0 %v1282
    %2153 = vmatprep.subr.mxu0 0.0
    %2154 = vmatpush1.msra.mxu0 %v1283
    %2155 = vmatprep.subr.mxu0 0.0
    %2156 = vmatpush1.msra.mxu0 %v1284
    %2157 = vmatprep.subr.mxu0 0.0
    %2158 = vmatpush1.msra.mxu0 %v1285
    %2159 = vmatprep.subr.mxu0 0.0
    %2160 = vmatpush1.msra.mxu0 %v1286
    %2161 = vmatprep.subr.mxu0 0.0
    %2162 = vmatpush1.msra.mxu0 %v1287
    %2163 = vmatprep.subr.mxu0 0.0
    %2164 = vmatpush1.msra.mxu0 %v1288
    %2165 = vmatprep.subr.mxu0 0.0
    %2166 = vmatpush1.msra.mxu0 %v1289
    %2167 = vmatprep.subr.mxu0 0.0
    %2168 = vmatpush1.msra.mxu0 %v1290
    %2169 = vmatprep.subr.mxu0 0.0
    %2170 = vmatpush1.msra.mxu0 %v1291
    %2171 = vmatprep.subr.mxu0 0.0
    %2172 = vmatpush1.msra.mxu0 %v1292
    %2173 = vmatprep.subr.mxu0 0.0
    %2174 = vmatpush1.msra.mxu0 %v1293
    %2175 = vmatprep.subr.mxu0 0.0
    %2176 = vmatpush1.msra.mxu0 %v1294
    %2177 = vmatprep.subr.mxu0 0.0
    %2178 = vmatpush1.msra.mxu0 %v1295
    %2179 = vmatprep.subr.mxu0 0.0
    %2180 = vmatpush1.msra.mxu0 %v1296
    %2181 = vmatprep.subr.mxu0 0.0
    %2182 = vmatpush1.msra.mxu0 %v1297
    %2183 = vmatprep.subr.mxu0 0.0
    %2184 = vmatpush1.msra.mxu0 %v1298
    %2185 = vmatprep.mubr.f32.mxu0 %v1910
    %2186 = vmatmul.mubr.f32.gmra.mrb[0].mxu0 %v1909
    %v2187 = vpop.f32.mrb[0].mxu0
    %v2188 = vadd.f32 %v2118, %v2187
    %v2189 = vpop.f32.mrb[0].mxu0
    %2190 = vdwg.mxu0
    %v2191 = vmul.f32 %v2188, 0.00390625
    %v2192 = vadd.f32 %v2191, 1e-05
    %v2193 = vrsqrt.pop %v2192
    %v2195 = vsel %vm585, %v2193, 0
    %2197 = vmatprep.subr.mxu0 %v1597
    %2198 = vmatpush1.msra.mxu0 %v1595
    %2199 = vmatprep.subr.mxu0 0.0
    %2200 = vmatpush1.msra.mxu0 0.0
    %2201 = vmatprep.subr.mxu0 0.0
    %2202 = vmatpush1.msra.mxu0 0.0
    %2203 = vmatprep.subr.mxu0 0.0
    %2204 = vmatpush1.msra.mxu0 0.0
    %2205 = vmatprep.subr.mxu0 0.0
    %2206 = vmatpush1.msra.mxu0 0.0
    %2207 = vmatprep.subr.mxu0 0.0
    %2208 = vmatpush1.msra.mxu0 0.0
    %2209 = vmatprep.subr.mxu0 0.0
    %2210 = vmatpush1.msra.mxu0 0.0
    %2211 = vmatprep.subr.mxu0 0.0
    %2212 = vmatpush1.msra.mxu0 0.0
    %2213 = vmatprep.subr.mxu0 0.0
    %2214 = vmatpush1.msra.mxu0 0.0
    %2215 = vmatprep.subr.mxu0 0.0
    %2216 = vmatpush1.msra.mxu0 0.0
    %2217 = vmatprep.subr.mxu0 0.0
    %2218 = vmatpush1.msra.mxu0 0.0
    %2219 = vmatprep.subr.mxu0 0.0
    %2220 = vmatpush1.msra.mxu0 0.0
    %2221 = vmatprep.subr.mxu0 0.0
    %2222 = vmatpush1.msra.mxu0 0.0
    %2223 = vmatprep.subr.mxu0 0.0
    %2224 = vmatpush1.msra.mxu0 0.0
    %2225 = vmatprep.subr.mxu0 0.0
    %2226 = vmatpush1.msra.mxu0 0.0
    %2227 = vmatprep.subr.mxu0 0.0
    %2228 = vmatpush1.msra.mxu0 0.0
    %2229 = vmatprep.subr.mxu0 0.0
    %2230 = vmatpush1.msra.mxu0 0.0
    %2231 = vmatprep.subr.mxu0 0.0
    %2232 = vmatpush1.msra.mxu0 0.0
    %2233 = vmatprep.subr.mxu0 0.0
    %2234 = vmatpush1.msra.mxu0 0.0
    %2235 = vmatprep.subr.mxu0 0.0
    %2236 = vmatpush1.msra.mxu0 0.0
    %2237 = vmatprep.subr.mxu0 0.0
    %2238 = vmatpush1.msra.mxu0 0.0
    %2239 = vmatprep.subr.mxu0 0.0
    %2240 = vmatpush1.msra.mxu0 0.0
    %2241 = vmatprep.subr.mxu0 0.0
    %2242 = vmatpush1.msra.mxu0 0.0
    %2243 = vmatprep.subr.mxu0 0.0
    %2244 = vmatpush1.msra.mxu0 0.0
    %2245 = vmatprep.subr.mxu0 0.0
    %2246 = vmatpush1.msra.mxu0 0.0
    %2247 = vmatprep.subr.mxu0 0.0
    %2248 = vmatpush1.msra.mxu0 0.0
    %2249 = vmatprep.subr.mxu0 0.0
    %2250 = vmatpush1.msra.mxu0 0.0
    %2251 = vmatprep.subr.mxu0 0.0
    %2252 = vmatpush1.msra.mxu0 0.0
    %2253 = vmatprep.subr.mxu0 0.0
    %2254 = vmatpush1.msra.mxu0 0.0
    %2255 = vmatprep.subr.mxu0 0.0
    %2256 = vmatpush1.msra.mxu0 0.0
    %2257 = vmatprep.subr.mxu0 0.0
    %2258 = vmatpush1.msra.mxu0 0.0
    %2259 = vmatprep.subr.mxu0 0.0
    %2260 = vmatpush1.msra.mxu0 0.0
    %2261 = vmatprep.mubr.f32.mxu0 0.0
    %2262 = vmatmul.mubr.f32.gmra.mrb[0].mxu0 %v2195
    %v2263 = vpop.f32.mrb[0].mxu0
    %v2264 = vadd.f32 0.0, %v2263
    %v2265 = vpop.f32.mrb[0].mxu0
    %v2266 = vadd.f32 0.0, %v2265
    %2267 = vdwg.mxu0
    %2268 = vmatprep.subr.mxu0 %v1601
    %2269 = vmatpush1.msra.mxu0 %v1599
    %2270 = vmatprep.subr.mxu0 0.0
    %2271 = vmatpush1.msra.mxu0 0.0
    %2272 = vmatprep.subr.mxu0 0.0
    %2273 = vmatpush1.msra.mxu0 0.0
    %2274 = vmatprep.subr.mxu0 0.0
    %2275 = vmatpush1.msra.mxu0 0.0
    %2276 = vmatprep.subr.mxu0 0.0
    %2277 = vmatpush1.msra.mxu0 0.0
    %2278 = vmatprep.subr.mxu0 0.0
    %2279 = vmatpush1.msra.mxu0 0.0
    %2280 = vmatprep.subr.mxu0 0.0
    %2281 = vmatpush1.msra.mxu0 0.0
    %2282 = vmatprep.subr.mxu0 0.0
    %2283 = vmatpush1.msra.mxu0 0.0
    %2284 = vmatprep.subr.mxu0 0.0
    %2285 = vmatpush1.msra.mxu0 0.0
    %2286 = vmatprep.subr.mxu0 0.0
    %2287 = vmatpush1.msra.mxu0 0.0
    %2288 = vmatprep.subr.mxu0 0.0
    %2289 = vmatpush1.msra.mxu0 0.0
    %2290 = vmatprep.subr.mxu0 0.0
    %2291 = vmatpush1.msra.mxu0 0.0
    %2292 = vmatprep.subr.mxu0 0.0
    %2293 = vmatpush1.msra.mxu0 0.0
    %2294 = vmatprep.subr.mxu0 0.0
    %2295 = vmatpush1.msra.mxu0 0.0
    %2296 = vmatprep.subr.mxu0 0.0
    %2297 = vmatpush1.msra.mxu0 0.0
    %2298 = vmatprep.subr.mxu0 0.0
    %2299 = vmatpush1.msra.mxu0 0.0
    %2300 = vmatprep.subr.mxu0 0.0
    %2301 = vmatpush1.msra.mxu0 0.0
    %2302 = vmatprep.subr.mxu0 0.0
    %2303 = vmatpush1.msra.mxu0 0.0
    %2304 = vmatprep.subr.mxu0 0.0
    %2305 = vmatpush1.msra.mxu0 0.0
    %2306 = vmatprep.subr.mxu0 0.0
    %2307 = vmatpush1.msra.mxu0 0.0
    %2308 = vmatprep.subr.mxu0 0.0
    %2309 = vmatpush1.msra.mxu0 0.0
    %2310 = vmatprep.subr.mxu0 0.0
    %2311 = vmatpush1.msra.mxu0 0.0
    %2312 = vmatprep.subr.mxu0 0.0
    %2313 = vmatpush1.msra.mxu0 0.0
    %2314 = vmatprep.subr.mxu0 0.0
    %2315 = vmatpush1.msra.mxu0 0.0
    %2316 = vmatprep.subr.mxu0 0.0
    %2317 = vmatpush1.msra.mxu0 0.0
    %2318 = vmatprep.subr.mxu0 0.0
    %2319 = vmatpush1.msra.mxu0 0.0
    %2320 = vmatprep.subr.mxu0 0.0
    %2321 = vmatpush1.msra.mxu0 0.0
    %2322 = vmatprep.subr.mxu0 0.0
    %2323 = vmatpush1.msra.mxu0 0.0
    %2324 = vmatprep.subr.mxu0 0.0
    %2325 = vmatpush1.msra.mxu0 0.0
    %2326 = vmatprep.subr.mxu0 0.0
    %2327 = vmatpush1.msra.mxu0 0.0
    %2328 = vmatprep.subr.mxu0 0.0
    %2329 = vmatpush1.msra.mxu0 0.0
    %2330 = vmatprep.subr.mxu0 0.0
    %2331 = vmatpush1.msra.mxu0 0.0
    %2332 = vmatprep.mubr.f32.mxu0 0.0
    %2333 = vmatmul.mubr.f32.gmra.mrb[0].mxu0 %v2195
    %v2334 = vpop.f32.mrb[0].mxu0
    %v2335 = vadd.f32 0.0, %v2334
    %v2336 = vpop.f32.mrb[0].mxu0
    %v2337 = vadd.f32 0.0, %v2336
    %2338 = vdwg.mxu0
    %2339 = vmatprep.subr.mxu0 %v1605
    %2340 = vmatpush1.msra.mxu0 %v1603
    %2341 = vmatprep.subr.mxu0 0.0
    %2342 = vmatpush1.msra.mxu0 0.0
    %2343 = vmatprep.subr.mxu0 0.0
    %2344 = vmatpush1.msra.mxu0 0.0
    %2345 = vmatprep.subr.mxu0 0.0
    %2346 = vmatpush1.msra.mxu0 0.0
    %2347 = vmatprep.subr.mxu0 0.0
    %2348 = vmatpush1.msra.mxu0 0.0
    %2349 = vmatprep.subr.mxu0 0.0
    %2350 = vmatpush1.msra.mxu0 0.0
    %2351 = vmatprep.subr.mxu0 0.0
    %2352 = vmatpush1.msra.mxu0 0.0
    %2353 = vmatprep.subr.mxu0 0.0
    %2354 = vmatpush1.msra.mxu0 0.0
    %2355 = vmatprep.subr.mxu0 0.0
    %2356 = vmatpush1.msra.mxu0 0.0
    %2357 = vmatprep.subr.mxu0 0.0
    %2358 = vmatpush1.msra.mxu0 0.0
    %2359 = vmatprep.subr.mxu0 0.0
    %2360 = vmatpush1.msra.mxu0 0.0
    %2361 = vmatprep.subr.mxu0 0.0
    %2362 = vmatpush1.msra.mxu0 0.0
    %2363 = vmatprep.subr.mxu0 0.0
    %2364 = vmatpush1.msra.mxu0 0.0
    %2365 = vmatprep.subr.mxu0 0.0
    %2366 = vmatpush1.msra.mxu0 0.0
    %2367 = vmatprep.subr.mxu0 0.0
    %2368 = vmatpush1.msra.mxu0 0.0
    %2369 = vmatprep.subr.mxu0 0.0
    %2370 = vmatpush1.msra.mxu0 0.0
    %2371 = vmatprep.subr.mxu0 0.0
    %2372 = vmatpush1.msra.mxu0 0.0
    %2373 = vmatprep.subr.mxu0 0.0
    %2374 = vmatpush1.msra.mxu0 0.0
    %2375 = vmatprep.subr.mxu0 0.0
    %2376 = vmatpush1.msra.mxu0 0.0
    %2377 = vmatprep.subr.mxu0 0.0
    %2378 = vmatpush1.msra.mxu0 0.0
    %2379 = vmatprep.subr.mxu0 0.0
    %2380 = vmatpush1.msra.mxu0 0.0
    %2381 = vmatprep.subr.mxu0 0.0
    %2382 = vmatpush1.msra.mxu0 0.0
    %2383 = vmatprep.subr.mxu0 0.0
    %2384 = vmatpush1.msra.mxu0 0.0
    %2385 = vmatprep.subr.mxu0 0.0
    %2386 = vmatpush1.msra.mxu0 0.0
    %2387 = vmatprep.subr.mxu0 0.0
    %2388 = vmatpush1.msra.mxu0 0.0
    %2389 = vmatprep.subr.mxu0 0.0
    %2390 = vmatpush1.msra.mxu0 0.0
    %2391 = vmatprep.subr.mxu0 0.0
    %2392 = vmatpush1.msra.mxu0 0.0
    %2393 = vmatprep.subr.mxu0 0.0
    %2394 = vmatpush1.msra.mxu0 0.0
    %2395 = vmatprep.subr.mxu0 0.0
    %2396 = vmatpush1.msra.mxu0 0.0
    %2397 = vmatprep.subr.mxu0 0.0
    %2398 = vmatpush1.msra.mxu0 0.0
    %2399 = vmatprep.subr.mxu0 0.0
    %2400 = vmatpush1.msra.mxu0 0.0
    %2401 = vmatprep.subr.mxu0 0.0
    %2402 = vmatpush1.msra.mxu0 0.0
    %2403 = vmatprep.mubr.f32.mxu0 0.0
    %2404 = vmatmul.mubr.f32.gmra.mrb[0].mxu0 %v2195
    %v2405 = vpop.f32.mrb[0].mxu0
    %v2406 = vadd.f32 0.0, %v2405
    %v2407 = vpop.f32.mrb[0].mxu0
    %v2408 = vadd.f32 0.0, %v2407
    %2409 = vdwg.mxu0
    %2410 = vmatprep.subr.mxu0 %v1609
    %2411 = vmatpush1.msra.mxu0 %v1607
    %2412 = vmatprep.subr.mxu0 0.0
    %2413 = vmatpush1.msra.mxu0 0.0
    %2414 = vmatprep.subr.mxu0 0.0
    %2415 = vmatpush1.msra.mxu0 0.0
    %2416 = vmatprep.subr.mxu0 0.0
    %2417 = vmatpush1.msra.mxu0 0.0
    %2418 = vmatprep.subr.mxu0 0.0
    %2419 = vmatpush1.msra.mxu0 0.0
    %2420 = vmatprep.subr.mxu0 0.0
    %2421 = vmatpush1.msra.mxu0 0.0
    %2422 = vmatprep.subr.mxu0 0.0
    %2423 = vmatpush1.msra.mxu0 0.0
    %2424 = vmatprep.subr.mxu0 0.0
    %2425 = vmatpush1.msra.mxu0 0.0
    %2426 = vmatprep.subr.mxu0 0.0
    %2427 = vmatpush1.msra.mxu0 0.0
    %2428 = vmatprep.subr.mxu0 0.0
    %2429 = vmatpush1.msra.mxu0 0.0
    %2430 = vmatprep.subr.mxu0 0.0
    %2431 = vmatpush1.msra.mxu0 0.0
    %2432 = vmatprep.subr.mxu0 0.0
    %2433 = vmatpush1.msra.mxu0 0.0
    %2434 = vmatprep.subr.mxu0 0.0
    %2435 = vmatpush1.msra.mxu0 0.0
    %2436 = vmatprep.subr.mxu0 0.0
    %2437 = vmatpush1.msra.mxu0 0.0
    %2438 = vmatprep.subr.mxu0 0.0
    %2439 = vmatpush1.msra.mxu0 0.0
    %2440 = vmatprep.subr.mxu0 0.0
    %2441 = vmatpush1.msra.mxu0 0.0
    %2442 = vmatprep.subr.mxu0 0.0
    %2443 = vmatpush1.msra.mxu0 0.0
    %2444 = vmatprep.subr.mxu0 0.0
    %2445 = vmatpush1.msra.mxu0 0.0
    %2446 = vmatprep.subr.mxu0 0.0
    %2447 = vmatpush1.msra.mxu0 0.0
    %2448 = vmatprep.subr.mxu0 0.0
    %2449 = vmatpush1.msra.mxu0 0.0
    %2450 = vmatprep.subr.mxu0 0.0
    %2451 = vmatpush1.msra.mxu0 0.0
    %2452 = vmatprep.subr.mxu0 0.0
    %2453 = vmatpush1.msra.mxu0 0.0
    %2454 = vmatprep.subr.mxu0 0.0
    %2455 = vmatpush1.msra.mxu0 0.0
    %2456 = vmatprep.subr.mxu0 0.0
    %2457 = vmatpush1.msra.mxu0 0.0
    %2458 = vmatprep.subr.mxu0 0.0
    %2459 = vmatpush1.msra.mxu0 0.0
    %2460 = vmatprep.subr.mxu0 0.0
    %2461 = vmatpush1.msra.mxu0 0.0
    %2462 = vmatprep.subr.mxu0 0.0
    %2463 = vmatpush1.msra.mxu0 0.0
    %2464 = vmatprep.subr.mxu0 0.0
    %2465 = vmatpush1.msra.mxu0 0.0
    %2466 = vmatprep.subr.mxu0 0.0
    %2467 = vmatpush1.msra.mxu0 0.0
    %2468 = vmatprep.subr.mxu0 0.0
    %2469 = vmatpush1.msra.mxu0 0.0
    %2470 = vmatprep.subr.mxu0 0.0
    %2471 = vmatpush1.msra.mxu0 0.0
    %2472 = vmatprep.subr.mxu0 0.0
    %2473 = vmatpush1.msra.mxu0 0.0
    %2474 = vmatprep.mubr.f32.mxu0 0.0
    %2475 = vmatmul.mubr.f32.gmra.mrb[0].mxu0 %v2195
    %v2476 = vpop.f32.mrb[0].mxu0
    %v2477 = vadd.f32 0.0, %v2476
    %v2478 = vpop.f32.mrb[0].mxu0
    %v2479 = vadd.f32 0.0, %v2478
    %2480 = vdwg.mxu0
    %v2481 = vmul.f32 %v1895, %v2264
    %v2482 = vmul.f32 %v1896, %v2266
    %v2483 = vmul.f32 %v1897, %v2335
    %v2484 = vmul.f32 %v1898, %v2337
    %v2485 = vmul.f32 %v1899, %v2406
    %v2486 = vmul.f32 %v1900, %v2408
    %v2487 = vmul.f32 %v1901, %v2477
    %v2488 = vmul.f32 %v1902, %v2479
    %vm2489 = vcmp.ge.f32.partialorder %v2481, 0.0
    %vm2490 = vcmp.ge.f32.partialorder %v2482, 0.0
    %vm2491 = vcmp.ge.f32.partialorder %v2483, 0.0
    %vm2492 = vcmp.ge.f32.partialorder %v2484, 0.0
    %vm2493 = vcmp.ge.f32.partialorder %v2485, 0.0
    %vm2494 = vcmp.ge.f32.partialorder %v2486, 0.0
    %vm2495 = vcmp.ge.f32.partialorder %v2487, 0.0
    %vm2496 = vcmp.ge.f32.partialorder %v2488, 0.0
    %v2497 = vstv %s1170
    %v2498 = vmul.f32 %v2497, %v2481
    %v2499 = vmul.f32 %v2497, %v2482
    %v2500 = vmul.f32 %v2497, %v2483
    %v2501 = vmul.f32 %v2497, %v2484
    %v2502 = vmul.f32 %v2497, %v2485
    %v2503 = vmul.f32 %v2497, %v2486
    %v2504 = vmul.f32 %v2497, %v2487
    %v2505 = vmul.f32 %v2497, %v2488
    %v2506 = vsel %vm2489, %v2481, %v2498
    %v2507 = vsel %vm2490, %v2482, %v2499
    %v2508 = vsel %vm2491, %v2483, %v2500
    %v2509 = vsel %vm2492, %v2484, %v2501
    %v2510 = vsel %vm2493, %v2485, %v2502
    %v2511 = vsel %vm2494, %v2486, %v2503
    %v2512 = vsel %vm2495, %v2487, %v2504
    %v2513 = vsel %vm2496, %v2488, %v2505
    %v2514 = vsub.f32 %v2506, %v185
    %v2515 = vsub.f32 %v2507, %v193
    %v2516 = vsub.f32 %v2508, %v192
    %v2517 = vsub.f32 %v2509, %v194
    %v2518 = vsub.f32 %v2510, %v202
    %v2519 = vsub.f32 %v2511, %v210
    %v2520 = vsub.f32 %v2512, %v209
    %v2521 = vsub.f32 %v2513, %v211
    %v2522 = vld [vmem:[%s4] sm:$0xff]
    %v2523 = vld [vmem:[%s4 + $0x8] sm:$0xff]
    %v2524 = vld [vmem:[%s4 + $0x10] sm:$0xff]
    %v2525 = vld [vmem:[%s4 + $0x18] sm:$0xff]
    %v2526 = vld [vmem:[%s4 + $0x20] sm:$0xff]
    %v2527 = vld [vmem:[%s4 + $0x28] sm:$0xff]
    %v2528 = vld [vmem:[%s4 + $0x30] sm:$0xff]
    %v2529 = vld [vmem:[%s4 + $0x38] sm:$0xff]
    %v2530 = vld [vmem:[%s4 + $0x40] sm:$0xff]
    %v2531 = vld [vmem:[%s4 + $0x48] sm:$0xff]
    %v2532 = vld [vmem:[%s4 + $0x50] sm:$0xff]
    %v2533 = vld [vmem:[%s4 + $0x58] sm:$0xff]
    %v2534 = vld [vmem:[%s4 + $0x60] sm:$0xff]
    %v2535 = vld [vmem:[%s4 + $0x68] sm:$0xff]
    %v2536 = vld [vmem:[%s4 + $0x70] sm:$0xff]
    %v2537 = vld [vmem:[%s4 + $0x78] sm:$0xff]
    %v2538 = vld [vmem:[%s4 + $0x80] sm:$0xff]
    %v2539 = vld [vmem:[%s4 + $0x88] sm:$0xff]
    %v2540 = vld [vmem:[%s4 + $0x90] sm:$0xff]
    %v2541 = vld [vmem:[%s4 + $0x98] sm:$0xff]
    %v2542 = vld [vmem:[%s4 + $0xa0] sm:$0xff]
    %v2543 = vld [vmem:[%s4 + $0xa8] sm:$0xff]
    %v2544 = vld [vmem:[%s4 + $0xb0] sm:$0xff]
    %v2545 = vld [vmem:[%s4 + $0xb8] sm:$0xff]
    %v2546 = vld [vmem:[%s4 + $0xc0] sm:$0xff]
    %v2547 = vld [vmem:[%s4 + $0xc8] sm:$0xff]
    %v2548 = vld [vmem:[%s4 + $0xd0] sm:$0xff]
    %v2549 = vld [vmem:[%s4 + $0xd8] sm:$0xff]
    %v2550 = vld [vmem:[%s4 + $0xe0] sm:$0xff]
    %v2551 = vld [vmem:[%s4 + $0xe8] sm:$0xff]
    %v2552 = vld [vmem:[%s4 + $0xf0] sm:$0xff]
    %v2553 = vld [vmem:[%s4 + $0xf8] sm:$0xff]
    %v2554 = vld [vmem:[%s4 + $0x100] sm:$0xff]
    %v2555 = vld [vmem:[%s4 + $0x108] sm:$0xff]
    %v2556 = vld [vmem:[%s4 + $0x110] sm:$0xff]
    %v2557 = vld [vmem:[%s4 + $0x118] sm:$0xff]
    %v2558 = vld [vmem:[%s4 + $0x120] sm:$0xff]
    %v2559 = vld [vmem:[%s4 + $0x128] sm:$0xff]
    %v2560 = vld [vmem:[%s4 + $0x130] sm:$0xff]
    %v2561 = vld [vmem:[%s4 + $0x138] sm:$0xff]
    %v2562 = vld [vmem:[%s4 + $0x140] sm:$0xff]
    %v2563 = vld [vmem:[%s4 + $0x148] sm:$0xff]
    %v2564 = vld [vmem:[%s4 + $0x150] sm:$0xff]
    %v2565 = vld [vmem:[%s4 + $0x158] sm:$0xff]
    %v2566 = vld [vmem:[%s4 + $0x160] sm:$0xff]
    %v2567 = vld [vmem:[%s4 + $0x168] sm:$0xff]
    %v2568 = vld [vmem:[%s4 + $0x170] sm:$0xff]
    %v2569 = vld [vmem:[%s4 + $0x178] sm:$0xff]
    %v2570 = vld [vmem:[%s4 + $0x180] sm:$0xff]
    %v2571 = vld [vmem:[%s4 + $0x188] sm:$0xff]
    %v2572 = vld [vmem:[%s4 + $0x190] sm:$0xff]
    %v2573 = vld [vmem:[%s4 + $0x198] sm:$0xff]
    %v2574 = vld [vmem:[%s4 + $0x1a0] sm:$0xff]
    %v2575 = vld [vmem:[%s4 + $0x1a8] sm:$0xff]
    %v2576 = vld [vmem:[%s4 + $0x1b0] sm:$0xff]
    %v2577 = vld [vmem:[%s4 + $0x1b8] sm:$0xff]
    %v2578 = vld [vmem:[%s4 + $0x1c0] sm:$0xff]
    %v2579 = vld [vmem:[%s4 + $0x1c8] sm:$0xff]
    %v2580 = vld [vmem:[%s4 + $0x1d0] sm:$0xff]
    %v2581 = vld [vmem:[%s4 + $0x1d8] sm:$0xff]
    %v2582 = vld [vmem:[%s4 + $0x1e0] sm:$0xff]
    %v2583 = vld [vmem:[%s4 + $0x1e8] sm:$0xff]
    %v2584 = vld [vmem:[%s4 + $0x1f0] sm:$0xff]
    %v2585 = vld [vmem:[%s4 + $0x1f8] sm:$0xff]
    %v2586 = vld [vmem:[%s4 + $0x200] sm:$0xff]
    %v2587 = vld [vmem:[%s4 + $0x208] sm:$0xff]
    %v2588 = vld [vmem:[%s4 + $0x210] sm:$0xff]
    %v2589 = vld [vmem:[%s4 + $0x218] sm:$0xff]
    %v2590 = vld [vmem:[%s4 + $0x220] sm:$0xff]
    %v2591 = vld [vmem:[%s4 + $0x228] sm:$0xff]
    %v2592 = vld [vmem:[%s4 + $0x230] sm:$0xff]
    %v2593 = vld [vmem:[%s4 + $0x238] sm:$0xff]
    %v2594 = vld [vmem:[%s4 + $0x240] sm:$0xff]
    %v2595 = vld [vmem:[%s4 + $0x248] sm:$0xff]
    %v2596 = vld [vmem:[%s4 + $0x250] sm:$0xff]
    %v2597 = vld [vmem:[%s4 + $0x258] sm:$0xff]
    %v2598 = vld [vmem:[%s4 + $0x260] sm:$0xff]
    %v2599 = vld [vmem:[%s4 + $0x268] sm:$0xff]
    %v2600 = vld [vmem:[%s4 + $0x270] sm:$0xff]
    %v2601 = vld [vmem:[%s4 + $0x278] sm:$0xff]
    %v2602 = vld [vmem:[%s4 + $0x280] sm:$0xff]
    %v2603 = vld [vmem:[%s4 + $0x288] sm:$0xff]
    %v2604 = vld [vmem:[%s4 + $0x290] sm:$0xff]
    %v2605 = vld [vmem:[%s4 + $0x298] sm:$0xff]
    %v2606 = vld [vmem:[%s4 + $0x2a0] sm:$0xff]
    %v2607 = vld [vmem:[%s4 + $0x2a8] sm:$0xff]
    %v2608 = vld [vmem:[%s4 + $0x2b0] sm:$0xff]
    %v2609 = vld [vmem:[%s4 + $0x2b8] sm:$0xff]
    %v2610 = vld [vmem:[%s4 + $0x2c0] sm:$0xff]
    %v2611 = vld [vmem:[%s4 + $0x2c8] sm:$0xff]
    %v2612 = vld [vmem:[%s4 + $0x2d0] sm:$0xff]
    %v2613 = vld [vmem:[%s4 + $0x2d8] sm:$0xff]
    %v2614 = vld [vmem:[%s4 + $0x2e0] sm:$0xff]
    %v2615 = vld [vmem:[%s4 + $0x2e8] sm:$0xff]
    %v2616 = vld [vmem:[%s4 + $0x2f0] sm:$0xff]
    %v2617 = vld [vmem:[%s4 + $0x2f8] sm:$0xff]
    %v2618 = vld [vmem:[%s4 + $0x300] sm:$0xff]
    %v2619 = vld [vmem:[%s4 + $0x308] sm:$0xff]
    %v2620 = vld [vmem:[%s4 + $0x310] sm:$0xff]
    %v2621 = vld [vmem:[%s4 + $0x318] sm:$0xff]
    %v2622 = vld [vmem:[%s4 + $0x320] sm:$0xff]
    %v2623 = vld [vmem:[%s4 + $0x328] sm:$0xff]
    %v2624 = vld [vmem:[%s4 + $0x330] sm:$0xff]
    %v2625 = vld [vmem:[%s4 + $0x338] sm:$0xff]
    %v2626 = vld [vmem:[%s4 + $0x340] sm:$0xff]
    %v2627 = vld [vmem:[%s4 + $0x348] sm:$0xff]
    %v2628 = vld [vmem:[%s4 + $0x350] sm:$0xff]
    %v2629 = vld [vmem:[%s4 + $0x358] sm:$0xff]
    %v2630 = vld [vmem:[%s4 + $0x360] sm:$0xff]
    %v2631 = vld [vmem:[%s4 + $0x368] sm:$0xff]
    %v2632 = vld [vmem:[%s4 + $0x370] sm:$0xff]
    %v2633 = vld [vmem:[%s4 + $0x378] sm:$0xff]
    %v2634 = vld [vmem:[%s4 + $0x380] sm:$0xff]
    %v2635 = vld [vmem:[%s4 + $0x388] sm:$0xff]
    %v2636 = vld [vmem:[%s4 + $0x390] sm:$0xff]
    %v2637 = vld [vmem:[%s4 + $0x398] sm:$0xff]
    %v2638 = vld [vmem:[%s4 + $0x3a0] sm:$0xff]
    %v2639 = vld [vmem:[%s4 + $0x3a8] sm:$0xff]
    %v2640 = vld [vmem:[%s4 + $0x3b0] sm:$0xff]
    %v2641 = vld [vmem:[%s4 + $0x3b8] sm:$0xff]
    %v2642 = vld [vmem:[%s4 + $0x3c0] sm:$0xff]
    %v2643 = vld [vmem:[%s4 + $0x3c8] sm:$0xff]
    %v2644 = vld [vmem:[%s4 + $0x3d0] sm:$0xff]
    %v2645 = vld [vmem:[%s4 + $0x3d8] sm:$0xff]
    %v2646 = vld [vmem:[%s4 + $0x3e0] sm:$0xff]
    %v2647 = vld [vmem:[%s4 + $0x3e8] sm:$0xff]
    %v2648 = vld [vmem:[%s4 + $0x3f0] sm:$0xff]
    %v2649 = vld [vmem:[%s4 + $0x3f8] sm:$0xff]
    %2650 = vmatprep.subr.mxu0 0.0
    %2651 = vmatpush1.msra.mxu0 %v2522
    %2652 = vmatprep.subr.mxu0 0.0
    %2653 = vmatpush1.msra.mxu0 %v2523
    %2654 = vmatprep.subr.mxu0 0.0
    %2655 = vmatpush1.msra.mxu0 %v2524
    %2656 = vmatprep.subr.mxu0 0.0
    %2657 = vmatpush1.msra.mxu0 %v2525
    %2658 = vmatprep.subr.mxu0 0.0
    %2659 = vmatpush1.msra.mxu0 %v2526
    %2660 = vmatprep.subr.mxu0 0.0
    %2661 = vmatpush1.msra.mxu0 %v2527
    %2662 = vmatprep.subr.mxu0 0.0
    %2663 = vmatpush1.msra.mxu0 %v2528
    %2664 = vmatprep.subr.mxu0 0.0
    %2665 = vmatpush1.msra.mxu0 %v2529
    %2666 = vmatprep.subr.mxu0 0.0
    %2667 = vmatpush1.msra.mxu0 %v2530
    %2668 = vmatprep.subr.mxu0 0.0
    %2669 = vmatpush1.msra.mxu0 %v2531
    %2670 = vmatprep.subr.mxu0 0.0
    %2671 = vmatpush1.msra.mxu0 %v2532
    %2672 = vmatprep.subr.mxu0 0.0
    %2673 = vmatpush1.msra.mxu0 %v2533
    %2674 = vmatprep.subr.mxu0 0.0
    %2675 = vmatpush1.msra.mxu0 %v2534
    %2676 = vmatprep.subr.mxu0 0.0
    %2677 = vmatpush1.msra.mxu0 %v2535
    %2678 = vmatprep.subr.mxu0 0.0
    %2679 = vmatpush1.msra.mxu0 %v2536
    %2680 = vmatprep.subr.mxu0 0.0
    %2681 = vmatpush1.msra.mxu0 %v2537
    %2682 = vmatprep.subr.mxu0 0.0
    %2683 = vmatpush1.msra.mxu0 %v2538
    %2684 = vmatprep.subr.mxu0 0.0
    %2685 = vmatpush1.msra.mxu0 %v2539
    %2686 = vmatprep.subr.mxu0 0.0
    %2687 = vmatpush1.msra.mxu0 %v2540
    %2688 = vmatprep.subr.mxu0 0.0
    %2689 = vmatpush1.msra.mxu0 %v2541
    %2690 = vmatprep.subr.mxu0 0.0
    %2691 = vmatpush1.msra.mxu0 %v2542
    %2692 = vmatprep.subr.mxu0 0.0
    %2693 = vmatpush1.msra.mxu0 %v2543
    %2694 = vmatprep.subr.mxu0 0.0
    %2695 = vmatpush1.msra.mxu0 %v2544
    %2696 = vmatprep.subr.mxu0 0.0
    %2697 = vmatpush1.msra.mxu0 %v2545
    %2698 = vmatprep.subr.mxu0 0.0
    %2699 = vmatpush1.msra.mxu0 %v2546
    %2700 = vmatprep.subr.mxu0 0.0
    %2701 = vmatpush1.msra.mxu0 %v2547
    %2702 = vmatprep.subr.mxu0 0.0
    %2703 = vmatpush1.msra.mxu0 %v2548
    %2704 = vmatprep.subr.mxu0 0.0
    %2705 = vmatpush1.msra.mxu0 %v2549
    %2706 = vmatprep.subr.mxu0 0.0
    %2707 = vmatpush1.msra.mxu0 %v2550
    %2708 = vmatprep.subr.mxu0 0.0
    %2709 = vmatpush1.msra.mxu0 %v2551
    %2710 = vmatprep.subr.mxu0 0.0
    %2711 = vmatpush1.msra.mxu0 %v2552
    %2712 = vmatprep.subr.mxu0 0.0
    %2713 = vmatpush1.msra.mxu0 %v2553
    %2714 = vmatprep.mubr.f32.mxu0 %v2515
    %2715 = vmatmul.mubr.f32.gmra.mrb[0].mxu0 %v2514
    %v2716 = vpop.f32.mrb[0].mxu0
    %v2717 = vadd.f32 0.0, %v2716
    %v2718 = vpop.f32.mrb[0].mxu0
    %2719 = vdwg.mxu0
    %2720 = vmatprep.subr.mxu0 0.0
    %2721 = vmatpush1.msra.mxu0 %v2554
    %2722 = vmatprep.subr.mxu0 0.0
    %2723 = vmatpush1.msra.mxu0 %v2555
    %2724 = vmatprep.subr.mxu0 0.0
    %2725 = vmatpush1.msra.mxu0 %v2556
    %2726 = vmatprep.subr.mxu0 0.0
    %2727 = vmatpush1.msra.mxu0 %v2557
    %2728 = vmatprep.subr.mxu0 0.0
    %2729 = vmatpush1.msra.mxu0 %v2558
    %2730 = vmatprep.subr.mxu0 0.0
    %2731 = vmatpush1.msra.mxu0 %v2559
    %2732 = vmatprep.subr.mxu0 0.0
    %2733 = vmatpush1.msra.mxu0 %v2560
    %2734 = vmatprep.subr.mxu0 0.0
    %2735 = vmatpush1.msra.mxu0 %v2561
    %2736 = vmatprep.subr.mxu0 0.0
    %2737 = vmatpush1.msra.mxu0 %v2562
    %2738 = vmatprep.subr.mxu0 0.0
    %2739 = vmatpush1.msra.mxu0 %v2563
    %2740 = vmatprep.subr.mxu0 0.0
    %2741 = vmatpush1.msra.mxu0 %v2564
    %2742 = vmatprep.subr.mxu0 0.0
    %2743 = vmatpush1.msra.mxu0 %v2565
    %2744 = vmatprep.subr.mxu0 0.0
    %2745 = vmatpush1.msra.mxu0 %v2566
    %2746 = vmatprep.subr.mxu0 0.0
    %2747 = vmatpush1.msra.mxu0 %v2567
    %2748 = vmatprep.subr.mxu0 0.0
    %2749 = vmatpush1.msra.mxu0 %v2568
    %2750 = vmatprep.subr.mxu0 0.0
    %2751 = vmatpush1.msra.mxu0 %v2569
    %2752 = vmatprep.subr.mxu0 0.0
    %2753 = vmatpush1.msra.mxu0 %v2570
    %2754 = vmatprep.subr.mxu0 0.0
    %2755 = vmatpush1.msra.mxu0 %v2571
    %2756 = vmatprep.subr.mxu0 0.0
    %2757 = vmatpush1.msra.mxu0 %v2572
    %2758 = vmatprep.subr.mxu0 0.0
    %2759 = vmatpush1.msra.mxu0 %v2573
    %2760 = vmatprep.subr.mxu0 0.0
    %2761 = vmatpush1.msra.mxu0 %v2574
    %2762 = vmatprep.subr.mxu0 0.0
    %2763 = vmatpush1.msra.mxu0 %v2575
    %2764 = vmatprep.subr.mxu0 0.0
    %2765 = vmatpush1.msra.mxu0 %v2576
    %2766 = vmatprep.subr.mxu0 0.0
    %2767 = vmatpush1.msra.mxu0 %v2577
    %2768 = vmatprep.subr.mxu0 0.0
    %2769 = vmatpush1.msra.mxu0 %v2578
    %2770 = vmatprep.subr.mxu0 0.0
    %2771 = vmatpush1.msra.mxu0 %v2579
    %2772 = vmatprep.subr.mxu0 0.0
    %2773 = vmatpush1.msra.mxu0 %v2580
    %2774 = vmatprep.subr.mxu0 0.0
    %2775 = vmatpush1.msra.mxu0 %v2581
    %2776 = vmatprep.subr.mxu0 0.0
    %2777 = vmatpush1.msra.mxu0 %v2582
    %2778 = vmatprep.subr.mxu0 0.0
    %2779 = vmatpush1.msra.mxu0 %v2583
    %2780 = vmatprep.subr.mxu0 0.0
    %2781 = vmatpush1.msra.mxu0 %v2584
    %2782 = vmatprep.subr.mxu0 0.0
    %2783 = vmatpush1.msra.mxu0 %v2585
    %2784 = vmatprep.mubr.f32.mxu0 %v2517
    %2785 = vmatmul.mubr.f32.gmra.mrb[0].mxu0 %v2516
    %v2786 = vpop.f32.mrb[0].mxu0
    %v2787 = vadd.f32 %v2717, %v2786
    %v2788 = vpop.f32.mrb[0].mxu0
    %2789 = vdwg.mxu0
    %2790 = vmatprep.subr.mxu0 0.0
    %2791 = vmatpush1.msra.mxu0 %v2586
    %2792 = vmatprep.subr.mxu0 0.0
    %2793 = vmatpush1.msra.mxu0 %v2587
    %2794 = vmatprep.subr.mxu0 0.0
    %2795 = vmatpush1.msra.mxu0 %v2588
    %2796 = vmatprep.subr.mxu0 0.0
    %2797 = vmatpush1.msra.mxu0 %v2589
    %2798 = vmatprep.subr.mxu0 0.0
    %2799 = vmatpush1.msra.mxu0 %v2590
    %2800 = vmatprep.subr.mxu0 0.0
    %2801 = vmatpush1.msra.mxu0 %v2591
    %2802 = vmatprep.subr.mxu0 0.0
    %2803 = vmatpush1.msra.mxu0 %v2592
    %2804 = vmatprep.subr.mxu0 0.0
    %2805 = vmatpush1.msra.mxu0 %v2593
    %2806 = vmatprep.subr.mxu0 0.0
    %2807 = vmatpush1.msra.mxu0 %v2594
    %2808 = vmatprep.subr.mxu0 0.0
    %2809 = vmatpush1.msra.mxu0 %v2595
    %2810 = vmatprep.subr.mxu0 0.0
    %2811 = vmatpush1.msra.mxu0 %v2596
    %2812 = vmatprep.subr.mxu0 0.0
    %2813 = vmatpush1.msra.mxu0 %v2597
    %2814 = vmatprep.subr.mxu0 0.0
    %2815 = vmatpush1.msra.mxu0 %v2598
    %2816 = vmatprep.subr.mxu0 0.0
    %2817 = vmatpush1.msra.mxu0 %v2599
    %2818 = vmatprep.subr.mxu0 0.0
    %2819 = vmatpush1.msra.mxu0 %v2600
    %2820 = vmatprep.subr.mxu0 0.0
    %2821 = vmatpush1.msra.mxu0 %v2601
    %2822 = vmatprep.subr.mxu0 0.0
    %2823 = vmatpush1.msra.mxu0 %v2602
    %2824 = vmatprep.subr.mxu0 0.0
    %2825 = vmatpush1.msra.mxu0 %v2603
    %2826 = vmatprep.subr.mxu0 0.0
    %2827 = vmatpush1.msra.mxu0 %v2604
    %2828 = vmatprep.subr.mxu0 0.0
    %2829 = vmatpush1.msra.mxu0 %v2605
    %2830 = vmatprep.subr.mxu0 0.0
    %2831 = vmatpush1.msra.mxu0 %v2606
    %2832 = vmatprep.subr.mxu0 0.0
    %2833 = vmatpush1.msra.mxu0 %v2607
    %2834 = vmatprep.subr.mxu0 0.0
    %2835 = vmatpush1.msra.mxu0 %v2608
    %2836 = vmatprep.subr.mxu0 0.0
    %2837 = vmatpush1.msra.mxu0 %v2609
    %2838 = vmatprep.subr.mxu0 0.0
    %2839 = vmatpush1.msra.mxu0 %v2610
    %2840 = vmatprep.subr.mxu0 0.0
    %2841 = vmatpush1.msra.mxu0 %v2611
    %2842 = vmatprep.subr.mxu0 0.0
    %2843 = vmatpush1.msra.mxu0 %v2612
    %2844 = vmatprep.subr.mxu0 0.0
    %2845 = vmatpush1.msra.mxu0 %v2613
    %2846 = vmatprep.subr.mxu0 0.0
    %2847 = vmatpush1.msra.mxu0 %v2614
    %2848 = vmatprep.subr.mxu0 0.0
    %2849 = vmatpush1.msra.mxu0 %v2615
    %2850 = vmatprep.subr.mxu0 0.0
    %2851 = vmatpush1.msra.mxu0 %v2616
    %2852 = vmatprep.subr.mxu0 0.0
    %2853 = vmatpush1.msra.mxu0 %v2617
    %2854 = vmatprep.mubr.f32.mxu0 %v2519
    %2855 = vmatmul.mubr.f32.gmra.mrb[0].mxu0 %v2518
    %v2856 = vpop.f32.mrb[0].mxu0
    %v2857 = vadd.f32 %v2787, %v2856
    %v2858 = vpop.f32.mrb[0].mxu0
    %2859 = vdwg.mxu0
    %2860 = vmatprep.subr.mxu0 0.0
    %2861 = vmatpush1.msra.mxu0 %v2618
    %2862 = vmatprep.subr.mxu0 0.0
    %2863 = vmatpush1.msra.mxu0 %v2619
    %2864 = vmatprep.subr.mxu0 0.0
    %2865 = vmatpush1.msra.mxu0 %v2620
    %2866 = vmatprep.subr.mxu0 0.0
    %2867 = vmatpush1.msra.mxu0 %v2621
    %2868 = vmatprep.subr.mxu0 0.0
    %2869 = vmatpush1.msra.mxu0 %v2622
    %2870 = vmatprep.subr.mxu0 0.0
    %2871 = vmatpush1.msra.mxu0 %v2623
    %2872 = vmatprep.subr.mxu0 0.0
    %2873 = vmatpush1.msra.mxu0 %v2624
    %2874 = vmatprep.subr.mxu0 0.0
    %2875 = vmatpush1.msra.mxu0 %v2625
    %2876 = vmatprep.subr.mxu0 0.0
    %2877 = vmatpush1.msra.mxu0 %v2626
    %2878 = vmatprep.subr.mxu0 0.0
    %2879 = vmatpush1.msra.mxu0 %v2627
    %2880 = vmatprep.subr.mxu0 0.0
    %2881 = vmatpush1.msra.mxu0 %v2628
    %2882 = vmatprep.subr.mxu0 0.0
    %2883 = vmatpush1.msra.mxu0 %v2629
    %2884 = vmatprep.subr.mxu0 0.0
    %2885 = vmatpush1.msra.mxu0 %v2630
    %2886 = vmatprep.subr.mxu0 0.0
    %2887 = vmatpush1.msra.mxu0 %v2631
    %2888 = vmatprep.subr.mxu0 0.0
    %2889 = vmatpush1.msra.mxu0 %v2632
    %2890 = vmatprep.subr.mxu0 0.0
    %2891 = vmatpush1.msra.mxu0 %v2633
    %2892 = vmatprep.subr.mxu0 0.0
    %2893 = vmatpush1.msra.mxu0 %v2634
    %2894 = vmatprep.subr.mxu0 0.0
    %2895 = vmatpush1.msra.mxu0 %v2635
    %2896 = vmatprep.subr.mxu0 0.0
    %2897 = vmatpush1.msra.mxu0 %v2636
    %2898 = vmatprep.subr.mxu0 0.0
    %2899 = vmatpush1.msra.mxu0 %v2637
    %2900 = vmatprep.subr.mxu0 0.0
    %2901 = vmatpush1.msra.mxu0 %v2638
    %2902 = vmatprep.subr.mxu0 0.0
    %2903 = vmatpush1.msra.mxu0 %v2639
    %2904 = vmatprep.subr.mxu0 0.0
    %2905 = vmatpush1.msra.mxu0 %v2640
    %2906 = vmatprep.subr.mxu0 0.0
    %2907 = vmatpush1.msra.mxu0 %v2641
    %2908 = vmatprep.subr.mxu0 0.0
    %2909 = vmatpush1.msra.mxu0 %v2642
    %2910 = vmatprep.subr.mxu0 0.0
    %2911 = vmatpush1.msra.mxu0 %v2643
    %2912 = vmatprep.subr.mxu0 0.0
    %2913 = vmatpush1.msra.mxu0 %v2644
    %2914 = vmatprep.subr.mxu0 0.0
    %2915 = vmatpush1.msra.mxu0 %v2645
    %2916 = vmatprep.subr.mxu0 0.0
    %2917 = vmatpush1.msra.mxu0 %v2646
    %2918 = vmatprep.subr.mxu0 0.0
    %2919 = vmatpush1.msra.mxu0 %v2647
    %2920 = vmatprep.subr.mxu0 0.0
    %2921 = vmatpush1.msra.mxu0 %v2648
    %2922 = vmatprep.subr.mxu0 0.0
    %2923 = vmatpush1.msra.mxu0 %v2649
    %2924 = vmatprep.mubr.f32.mxu0 %v2521
    %2925 = vmatmul.mubr.f32.gmra.mrb[0].mxu0 %v2520
    %v2926 = vpop.f32.mrb[0].mxu0
    %v2927 = vadd.f32 %v2857, %v2926
    %v2928 = vpop.f32.mrb[0].mxu0
    %2929 = vdwg.mxu0
    %s2930 = sld [smem:[#allocation2 + $0x2]]
    %v2932 = vsel %vm509, %v2927, 0
    %2934 = vmatprep.subr.mxu0 0.0
    %2935 = vmatpush1.msra.mxu0 %v501
    %2936 = vmatprep.subr.mxu0 0.0
    %2937 = vmatpush1.msra.mxu0 %v502
    %2938 = vmatprep.subr.mxu0 0.0
    %2939 = vmatpush1.msra.mxu0 %v503
    %2940 = vmatprep.subr.mxu0 0.0
    %2941 = vmatpush1.msra.mxu0 %v504
    %2942 = vmatprep.subr.mxu0 0.0
    %2943 = vmatpush1.msra.mxu0 %v505
    %2944 = vmatprep.subr.mxu0 0.0
    %2945 = vmatpush1.msra.mxu0 %v506
    %2946 = vmatprep.subr.mxu0 0.0
    %2947 = vmatpush1.msra.mxu0 %v507
    %2948 = vmatprep.subr.mxu0 0.0
    %2949 = vmatpush1.msra.mxu0 %v508
    %2950 = vmatprep.subr.mxu0 0.0
    %2951 = vmatpush1.msra.mxu0 0.0
    %2952 = vmatprep.subr.mxu0 0.0
    %2953 = vmatpush1.msra.mxu0 0.0
    %2954 = vmatprep.subr.mxu0 0.0
    %2955 = vmatpush1.msra.mxu0 0.0
    %2956 = vmatprep.subr.mxu0 0.0
    %2957 = vmatpush1.msra.mxu0 0.0
    %2958 = vmatprep.subr.mxu0 0.0
    %2959 = vmatpush1.msra.mxu0 0.0
    %2960 = vmatprep.subr.mxu0 0.0
    %2961 = vmatpush1.msra.mxu0 0.0
    %2962 = vmatprep.subr.mxu0 0.0
    %2963 = vmatpush1.msra.mxu0 0.0
    %2964 = vmatprep.subr.mxu0 0.0
    %2965 = vmatpush1.msra.mxu0 0.0
    %2966 = vmatprep.subr.mxu0 0.0
    %2967 = vmatpush1.msra.mxu0 0.0
    %2968 = vmatprep.subr.mxu0 0.0
    %2969 = vmatpush1.msra.mxu0 0.0
    %2970 = vmatprep.subr.mxu0 0.0
    %2971 = vmatpush1.msra.mxu0 0.0
    %2972 = vmatprep.subr.mxu0 0.0
    %2973 = vmatpush1.msra.mxu0 0.0
    %2974 = vmatprep.subr.mxu0 0.0
    %2975 = vmatpush1.msra.mxu0 0.0
    %2976 = vmatprep.subr.mxu0 0.0
    %2977 = vmatpush1.msra.mxu0 0.0
    %2978 = vmatprep.subr.mxu0 0.0
    %2979 = vmatpush1.msra.mxu0 0.0
    %2980 = vmatprep.subr.mxu0 0.0
    %2981 = vmatpush1.msra.mxu0 0.0
    %2982 = vmatprep.subr.mxu0 0.0
    %2983 = vmatpush1.msra.mxu0 0.0
    %2984 = vmatprep.subr.mxu0 0.0
    %2985 = vmatpush1.msra.mxu0 0.0
    %2986 = vmatprep.subr.mxu0 0.0
    %2987 = vmatpush1.msra.mxu0 0.0
    %2988 = vmatprep.subr.mxu0 0.0
    %2989 = vmatpush1.msra.mxu0 0.0
    %2990 = vmatprep.subr.mxu0 0.0
    %2991 = vmatpush1.msra.mxu0 0.0
    %2992 = vmatprep.subr.mxu0 0.0
    %2993 = vmatpush1.msra.mxu0 0.0
    %2994 = vmatprep.subr.mxu0 0.0
    %2995 = vmatpush1.msra.mxu0 0.0
    %2996 = vmatprep.subr.mxu0 0.0
    %2997 = vmatpush1.msra.mxu0 0.0
    %2998 = vmatprep.mubr.f32.mxu0 0.0
    %2999 = vmatmul.mubr.f32.gmra.mrb[0].mxu0 %v2932
    %v3000 = vpop.f32.mrb[0].mxu0
    %v3001 = vadd.f32 0.0, %v3000
    %v3002 = vpop.f32.mrb[0].mxu0
    %3003 = vdwg.mxu0
    %v3004 = vmul.f32 %v3001, 0.0625
    %v3006 = vsel %vm585, %v3004, 0
    %3008 = vmatprep.subr.mxu0 0.0
    %3009 = vmatpush1.msra.mxu0 %v591
    %3010 = vmatprep.subr.mxu0 0.0
    %3011 = vmatpush1.msra.mxu0 0.0
    %3012 = vmatprep.subr.mxu0 0.0
    %3013 = vmatpush1.msra.mxu0 0.0
    %3014 = vmatprep.subr.mxu0 0.0
    %3015 = vmatpush1.msra.mxu0 0.0
    %3016 = vmatprep.subr.mxu0 0.0
    %3017 = vmatpush1.msra.mxu0 0.0
    %3018 = vmatprep.subr.mxu0 0.0
    %3019 = vmatpush1.msra.mxu0 0.0
    %3020 = vmatprep.subr.mxu0 0.0
    %3021 = vmatpush1.msra.mxu0 0.0
    %3022 = vmatprep.subr.mxu0 0.0
    %3023 = vmatpush1.msra.mxu0 0.0
    %3024 = vmatprep.subr.mxu0 0.0
    %3025 = vmatpush1.msra.mxu0 0.0
    %3026 = vmatprep.subr.mxu0 0.0
    %3027 = vmatpush1.msra.mxu0 0.0
    %3028 = vmatprep.subr.mxu0 0.0
    %3029 = vmatpush1.msra.mxu0 0.0
    %3030 = vmatprep.subr.mxu0 0.0
    %3031 = vmatpush1.msra.mxu0 0.0
    %3032 = vmatprep.subr.mxu0 0.0
    %3033 = vmatpush1.msra.mxu0 0.0
    %3034 = vmatprep.subr.mxu0 0.0
    %3035 = vmatpush1.msra.mxu0 0.0
    %3036 = vmatprep.subr.mxu0 0.0
    %3037 = vmatpush1.msra.mxu0 0.0
    %3038 = vmatprep.subr.mxu0 0.0
    %3039 = vmatpush1.msra.mxu0 0.0
    %3040 = vmatprep.subr.mxu0 0.0
    %3041 = vmatpush1.msra.mxu0 0.0
    %3042 = vmatprep.subr.mxu0 0.0
    %3043 = vmatpush1.msra.mxu0 0.0
    %3044 = vmatprep.subr.mxu0 0.0
    %3045 = vmatpush1.msra.mxu0 0.0
    %3046 = vmatprep.subr.mxu0 0.0
    %3047 = vmatpush1.msra.mxu0 0.0
    %3048 = vmatprep.subr.mxu0 0.0
    %3049 = vmatpush1.msra.mxu0 0.0
    %3050 = vmatprep.subr.mxu0 0.0
    %3051 = vmatpush1.msra.mxu0 0.0
    %3052 = vmatprep.subr.mxu0 0.0
    %3053 = vmatpush1.msra.mxu0 0.0
    %3054 = vmatprep.subr.mxu0 0.0
    %3055 = vmatpush1.msra.mxu0 0.0
    %3056 = vmatprep.subr.mxu0 0.0
    %3057 = vmatpush1.msra.mxu0 0.0
    %3058 = vmatprep.subr.mxu0 0.0
    %3059 = vmatpush1.msra.mxu0 0.0
    %3060 = vmatprep.subr.mxu0 0.0
    %3061 = vmatpush1.msra.mxu0 0.0
    %3062 = vmatprep.subr.mxu0 0.0
    %3063 = vmatpush1.msra.mxu0 0.0
    %3064 = vmatprep.subr.mxu0 0.0
    %3065 = vmatpush1.msra.mxu0 0.0
    %3066 = vmatprep.subr.mxu0 0.0
    %3067 = vmatpush1.msra.mxu0 0.0
    %3068 = vmatprep.subr.mxu0 0.0
    %3069 = vmatpush1.msra.mxu0 0.0
    %3070 = vmatprep.subr.mxu0 0.0
    %3071 = vmatpush1.msra.mxu0 0.0
    %3072 = vmatprep.mubr.f32.mxu0 0.0
    %3073 = vmatmul.mubr.f32.gmra.mrb[0].mxu0 %v3006
    %v3074 = vpop.f32.mrb[0].mxu0
    %v3075 = vadd.f32 0.0, %v3074
    %v3076 = vpop.f32.mrb[0].mxu0
    %3077 = vdwg.mxu0
    %v3078 = vsub.f32 %v2927, %v3075
    %v3079 = vmul.f32 %v3078, %v3078
    %v3081 = vsel %vm509, %v3079, 0
    %3083 = vmatprep.subr.mxu0 0.0
    %3084 = vmatpush1.msra.mxu0 %v501
    %3085 = vmatprep.subr.mxu0 0.0
    %3086 = vmatpush1.msra.mxu0 %v502
    %3087 = vmatprep.subr.mxu0 0.0
    %3088 = vmatpush1.msra.mxu0 %v503
    %3089 = vmatprep.subr.mxu0 0.0
    %3090 = vmatpush1.msra.mxu0 %v504
    %3091 = vmatprep.subr.mxu0 0.0
    %3092 = vmatpush1.msra.mxu0 %v505
    %3093 = vmatprep.subr.mxu0 0.0
    %3094 = vmatpush1.msra.mxu0 %v506
    %3095 = vmatprep.subr.mxu0 0.0
    %3096 = vmatpush1.msra.mxu0 %v507
    %3097 = vmatprep.subr.mxu0 0.0
    %3098 = vmatpush1.msra.mxu0 %v508
    %3099 = vmatprep.subr.mxu0 0.0
    %3100 = vmatpush1.msra.mxu0 0.0
    %3101 = vmatprep.subr.mxu0 0.0
    %3102 = vmatpush1.msra.mxu0 0.0
    %3103 = vmatprep.subr.mxu0 0.0
    %3104 = vmatpush1.msra.mxu0 0.0
    %3105 = vmatprep.subr.mxu0 0.0
    %3106 = vmatpush1.msra.mxu0 0.0
    %3107 = vmatprep.subr.mxu0 0.0
    %3108 = vmatpush1.msra.mxu0 0.0
    %3109 = vmatprep.subr.mxu0 0.0
    %3110 = vmatpush1.msra.mxu0 0.0
    %3111 = vmatprep.subr.mxu0 0.0
    %3112 = vmatpush1.msra.mxu0 0.0
    %3113 = vmatprep.subr.mxu0 0.0
    %3114 = vmatpush1.msra.mxu0 0.0
    %3115 = vmatprep.subr.mxu0 0.0
    %3116 = vmatpush1.msra.mxu0 0.0
    %3117 = vmatprep.subr.mxu0 0.0
    %3118 = vmatpush1.msra.mxu0 0.0
    %3119 = vmatprep.subr.mxu0 0.0
    %3120 = vmatpush1.msra.mxu0 0.0
    %3121 = vmatprep.subr.mxu0 0.0
    %3122 = vmatpush1.msra.mxu0 0.0
    %3123 = vmatprep.subr.mxu0 0.0
    %3124 = vmatpush1.msra.mxu0 0.0
    %3125 = vmatprep.subr.mxu0 0.0
    %3126 = vmatpush1.msra.mxu0 0.0
    %3127 = vmatprep.subr.mxu0 0.0
    %3128 = vmatpush1.msra.mxu0 0.0
    %3129 = vmatprep.subr.mxu0 0.0
    %3130 = vmatpush1.msra.mxu0 0.0
    %3131 = vmatprep.subr.mxu0 0.0
    %3132 = vmatpush1.msra.mxu0 0.0
    %3133 = vmatprep.subr.mxu0 0.0
    %3134 = vmatpush1.msra.mxu0 0.0
    %3135 = vmatprep.subr.mxu0 0.0
    %3136 = vmatpush1.msra.mxu0 0.0
    %3137 = vmatprep.subr.mxu0 0.0
    %3138 = vmatpush1.msra.mxu0 0.0
    %3139 = vmatprep.subr.mxu0 0.0
    %3140 = vmatpush1.msra.mxu0 0.0
    %3141 = vmatprep.subr.mxu0 0.0
    %3142 = vmatpush1.msra.mxu0 0.0
    %3143 = vmatprep.subr.mxu0 0.0
    %3144 = vmatpush1.msra.mxu0 0.0
    %3145 = vmatprep.subr.mxu0 0.0
    %3146 = vmatpush1.msra.mxu0 0.0
    %3147 = vmatprep.mubr.f32.mxu0 0.0
    %3148 = vmatmul.mubr.f32.gmra.mrb[0].mxu0 %v3081
    %v3149 = vpop.f32.mrb[0].mxu0
    %v3150 = vadd.f32 0.0, %v3149
    %v3151 = vpop.f32.mrb[0].mxu0
    %3152 = vdwg.mxu0
    %v3153 = vmul.f32 %v3150, 0.0625
    %v3154 = vadd.f32 %v3153, 1e-05
    %v3155 = vrsqrt.pop %v3154
    %v3157 = vsel %vm585, %v3155, 0
    %3159 = vmatprep.subr.mxu0 0.0
    %3160 = vmatpush1.msra.mxu0 %v591
    %3161 = vmatprep.subr.mxu0 0.0
    %3162 = vmatpush1.msra.mxu0 0.0
    %3163 = vmatprep.subr.mxu0 0.0
    %3164 = vmatpush1.msra.mxu0 0.0
    %3165 = vmatprep.subr.mxu0 0.0
    %3166 = vmatpush1.msra.mxu0 0.0
    %3167 = vmatprep.subr.mxu0 0.0
    %3168 = vmatpush1.msra.mxu0 0.0
    %3169 = vmatprep.subr.mxu0 0.0
    %3170 = vmatpush1.msra.mxu0 0.0
    %3171 = vmatprep.subr.mxu0 0.0
    %3172 = vmatpush1.msra.mxu0 0.0
    %3173 = vmatprep.subr.mxu0 0.0
    %3174 = vmatpush1.msra.mxu0 0.0
    %3175 = vmatprep.subr.mxu0 0.0
    %3176 = vmatpush1.msra.mxu0 0.0
    %3177 = vmatprep.subr.mxu0 0.0
    %3178 = vmatpush1.msra.mxu0 0.0
    %3179 = vmatprep.subr.mxu0 0.0
    %3180 = vmatpush1.msra.mxu0 0.0
    %3181 = vmatprep.subr.mxu0 0.0
    %3182 = vmatpush1.msra.mxu0 0.0
    %3183 = vmatprep.subr.mxu0 0.0
    %3184 = vmatpush1.msra.mxu0 0.0
    %3185 = vmatprep.subr.mxu0 0.0
    %3186 = vmatpush1.msra.mxu0 0.0
    %3187 = vmatprep.subr.mxu0 0.0
    %3188 = vmatpush1.msra.mxu0 0.0
    %3189 = vmatprep.subr.mxu0 0.0
    %3190 = vmatpush1.msra.mxu0 0.0
    %3191 = vmatprep.subr.mxu0 0.0
    %3192 = vmatpush1.msra.mxu0 0.0
    %3193 = vmatprep.subr.mxu0 0.0
    %3194 = vmatpush1.msra.mxu0 0.0
    %3195 = vmatprep.subr.mxu0 0.0
    %3196 = vmatpush1.msra.mxu0 0.0
    %3197 = vmatprep.subr.mxu0 0.0
    %3198 = vmatpush1.msra.mxu0 0.0
    %3199 = vmatprep.subr.mxu0 0.0
    %3200 = vmatpush1.msra.mxu0 0.0
    %3201 = vmatprep.subr.mxu0 0.0
    %3202 = vmatpush1.msra.mxu0 0.0
    %3203 = vmatprep.subr.mxu0 0.0
    %3204 = vmatpush1.msra.mxu0 0.0
    %3205 = vmatprep.subr.mxu0 0.0
    %3206 = vmatpush1.msra.mxu0 0.0
    %3207 = vmatprep.subr.mxu0 0.0
    %3208 = vmatpush1.msra.mxu0 0.0
    %3209 = vmatprep.subr.mxu0 0.0
    %3210 = vmatpush1.msra.mxu0 0.0
    %3211 = vmatprep.subr.mxu0 0.0
    %3212 = vmatpush1.msra.mxu0 0.0
    %3213 = vmatprep.subr.mxu0 0.0
    %3214 = vmatpush1.msra.mxu0 0.0
    %3215 = vmatprep.subr.mxu0 0.0
    %3216 = vmatpush1.msra.mxu0 0.0
    %3217 = vmatprep.subr.mxu0 0.0
    %3218 = vmatpush1.msra.mxu0 0.0
    %3219 = vmatprep.subr.mxu0 0.0
    %3220 = vmatpush1.msra.mxu0 0.0
    %3221 = vmatprep.subr.mxu0 0.0
    %3222 = vmatpush1.msra.mxu0 0.0
    %3223 = vmatprep.mubr.f32.mxu0 0.0
    %3224 = vmatmul.mubr.f32.gmra.mrb[0].mxu0 %v3157
    %v3225 = vpop.f32.mrb[0].mxu0
    %v3226 = vadd.f32 0.0, %v3225
    %v3227 = vpop.f32.mrb[0].mxu0
    %3228 = vdwg.mxu0
    %v3229 = vmul.f32 %v3078, %v3226
    %vm3230 = vcmp.ge.f32.partialorder %v3229, 0.0
    %v3231 = vstv %s2930
    %v3232 = vmul.f32 %v3231, %v3229
    %v3233 = vsel %vm3230, %v3229, %v3232
    %v3234 = vadd.f32 %v3233, %v818
    %vm3235 = vcmask 517120
    %3236 = vst.msk [vmem:[#allocation5] sm:$0x3] %vm3235, %v3234
    // Predicated region
    $region42: #{tpu_custom_call.1} parent=1 // pred_check
      _
    $region43: #{tpu_custom_call.1} parent=1 // pred_check_branch
      %3238 = sbr.rel (0) target = $region45
    $region44: #{tpu_custom_call.1} parent=1 // pred_region
      %s3240 = ssub.s32 32, 32
      %3241 = vsyncadd [#allocation3], %s3240
      %s3243 = sshll.u32 [#allocation5], 4
      %s3244 = int_to_ptr.vmem [resolvable:$true] %s3243
      %3246 = dma.vmem_to_hbm [thread:$0]  %s3244, 32, %s9, [#allocation3]
    $region45: #{tpu_custom_call.1} parent=1 // pred_fallthru
      _
    // Predicated region
    $region46: #{tpu_custom_call.1} parent=1 // pred_check
      _
    $region47: #{tpu_custom_call.1} parent=1 // pred_check_branch
      %3248 = sbr.rel (0) target = $region49
    $region48: #{tpu_custom_call.1} parent=1 // pred_region
      %3249 = dma.done [#allocation3], 32
    $region49: #{tpu_custom_call.1} parent=1 // pred_fallthru
      _
    %3250 = vsyncpa [#allocation3], 1
    %3251 = vsyncpa [#allocation4], 1

</llo_original>
